<compile_context>
chip_gen: v7x
topology: tpu7x:2x2x1
jax: 0.10.0
libtpu: 0.0.40
codegen_flags: <defaults>
</compile_context>

<pallas_src>
import functools

import jax
import jax.numpy as jnp
from jax.experimental import pallas as pl
from jax.experimental.pallas import tpu as pltpu

LEAKY_SLOPE = 0.2
LANES = 128          # lane-dense working width for all wide tiles
E_TILE = 512         # edges per grid step (multiple of 8 sublanes, MXU-aligned)


def _leaky(x):
    return jnp.where(x > 0, x, LEAKY_SLOPE * x)


def _gat_kernel(x_ref, w_ref, a_src_ref, a_dst_ref, bias_ref, src_ref, trg_ref,
                out_ref, h_aug_ref, s_src_row_ref, s2max_ref, acc_ref, *, f_out):
    t = pl.program_id(0)                # edge-tile index (single grid axis)
    n_tiles = pl.num_programs(0)

    n_nodes = x_ref.shape[0]
    lanes = h_aug_ref.shape[1]

    # ---- one-time init: fused projection + per-node attention scores ----
    @pl.when(t == 0)
    def _init():
        # h cols >= f_out are 0 because W was zero-padded to 128 lanes.
        h = jnp.dot(x_ref[...], w_ref[...],
                    preferred_element_type=jnp.float32)              # [N, 128]
        # target-side score per node (reused by every edge via the T gather)
        s_dst = jnp.sum(h * a_dst_ref[...], axis=1, keepdims=True)   # [N, 1]
        col = jax.lax.broadcasted_iota(jnp.int32, (n_nodes, lanes), 1)
        # Augmented node slab: cols[:F]=h, col F = 1 (denominator carrier),
        # col F+1 = s_dst (per-edge target score), rest 0.
        h_aug_ref[...] = jnp.where(col == f_out, 1.0,
                                   jnp.where(col == f_out + 1, s_dst, h))
        # source-side score as a lane-dense [1, N] row: a_src (1,128) against
        # h (N,128) contracting the last dims (q @ k^T pattern) -> no
        # in-kernel transpose needed.
        s_src_row_ref[...] = jax.lax.dot_general(
            a_src_ref[...], h, (((1,), (1,)), ((), ())),
            preferred_element_type=jnp.float32)                       # [1, N]
        # global max of the target scores -> per-group-constant softmax shift
        s2max_ref[...] = jnp.max(s_dst, keepdims=True)                # [1, 1]
        acc_ref[...] = jnp.zeros_like(acc_ref)       # numerator | denominator

    # ---- per-edge-tile work (single pass) ----
    src = src_ref[...]                                   # [Et, 1] int32
    trg = trg_ref[...]                                   # [Et, 1] int32
    e_tile = src.shape[0]
    node_ids = jax.lax.broadcasted_iota(jnp.int32, (e_tile, n_nodes), 1)
    # One-hot selectors (padded edges carry index == n_nodes -> all-zero row).
    # TODO(synk): for node counts where an [E_tile, N] one-hot no longer fits,
    # replace with a real SMEM/DMA-driven gather and a node-tiled scatter.
    S = (src == node_ids).astype(jnp.float32)            # [Et, N] one-hot of src
    T = (trg == node_ids).astype(jnp.float32)            # [Et, N] one-hot of trg

    # Gather neighbor features + ones column + s_dst[trg] in one MXU matmul.
    g_trg = jnp.dot(T, h_aug_ref[...],
                    preferred_element_type=jnp.float32)               # [Et,128]
    s2 = g_trg[:, f_out + 1:f_out + 2]                   # h[trg] @ a_dst^T

    # Gather source score on VPU/XLU (overlaps with MXU work above).
    s1 = jnp.sum(S * s_src_row_ref[...], axis=1, keepdims=True)       # [Et, 1]

    alpha = _leaky(s1 + s2)                              # per-edge logit
    shift = _leaky(s1 + s2max_ref[...])                  # per-group-constant shift
    # exponent <= 0 for every real edge (monotone LeakyReLU, s2 <= s2max);
    # the clamp is free insurance for padded edges.
    p = jnp.exp(jnp.minimum(alpha - shift, 0.0))          # [Et, 1]

    # payload: cols [:F] = p * neighbor features, col F = p (denominator),
    # col F+1.. = p * s_dst (never read).  Scatter-add grouped by src.
    payload = p * g_trg                                   # [Et, 128]
    acc_ref[...] += jnp.dot(S.T, payload,
                            preferred_element_type=jnp.float32)       # [N, 128]

    # ---- finalize: softmax normalization + output bias ----
    @pl.when(t == n_tiles - 1)
    def _finalize():
        acc = acc_ref[...]
        denom = acc[:, f_out:f_out + 1]
        denom = jnp.where(denom > 0, denom, 1.0)          # isolated nodes -> 0 row
        out_ref[...] = acc / denom + bias_ref[...]


@jax.jit
def gat_layer_pallas(x, w, a_vec, out_bias, src_idx, trg_idx):
    n_nodes, f_in = x.shape
    f_out = w.shape[1]
    assert f_out + 2 <= LANES, "F_out + 2 score columns must fit in 128 lanes"

    # Lane-dense parameter packing (layout plumbing only, no extra compute).
    w_pad = jnp.zeros((f_in, LANES), jnp.float32).at[:, :f_out].set(w)
    a_src_pad = jnp.zeros((1, LANES), jnp.float32).at[:, :f_out].set(a_vec[:, :f_out])
    a_dst_pad = jnp.zeros((1, LANES), jnp.float32).at[:, :f_out].set(a_vec[:, f_out:])
    bias_pad = jnp.zeros((1, LANES), jnp.float32).at[:, :f_out].set(
        out_bias.reshape(1, f_out))

    # Pad the edge list to a multiple of E_TILE with an out-of-range sentinel
    # index (== n_nodes): its one-hot rows are all-zero, so padded edges
    # contribute nothing to the scatter.
    n_edges = src_idx.shape[0]
    n_tiles = pl.cdiv(n_edges, E_TILE)
    e_pad = n_tiles * E_TILE
    src2d = jnp.full((e_pad, 1), n_nodes, jnp.int32).at[:n_edges, 0].set(
        src_idx.astype(jnp.int32))
    trg2d = jnp.full((e_pad, 1), n_nodes, jnp.int32).at[:n_edges, 0].set(
        trg_idx.astype(jnp.int32))

    kernel = functools.partial(_gat_kernel, f_out=f_out)
    out_pad = pl.pallas_call(
        kernel,
        out_shape=jax.ShapeDtypeStruct((n_nodes, LANES), jnp.float32),
        grid_spec=pltpu.PrefetchScalarGridSpec(
            num_scalar_prefetch=0,
            grid=(n_tiles,),                  # single pass over edge tiles
            in_specs=[
                pl.BlockSpec((n_nodes, f_in), lambda t: (0, 0)),   # x
                pl.BlockSpec((f_in, LANES), lambda t: (0, 0)),     # W (padded)
                pl.BlockSpec((1, LANES), lambda t: (0, 0)),        # a_src
                pl.BlockSpec((1, LANES), lambda t: (0, 0)),        # a_dst
                pl.BlockSpec((1, LANES), lambda t: (0, 0)),        # out bias
                pl.BlockSpec((E_TILE, 1), lambda t: (t, 0)),       # src idx tile
                pl.BlockSpec((E_TILE, 1), lambda t: (t, 0)),       # trg idx tile
            ],
            out_specs=pl.BlockSpec((n_nodes, LANES), lambda t: (0, 0)),
            scratch_shapes=[
                pltpu.VMEM((n_nodes, LANES), jnp.float32),   # h_aug (resident)
                pltpu.VMEM((1, n_nodes), jnp.float32),       # s_src row
                pltpu.VMEM((1, 1), jnp.float32),             # global s_dst max
                pltpu.VMEM((n_nodes, LANES), jnp.float32),   # num|denom accumulator
            ],
        ),
        compiler_params=pltpu.CompilerParams(
            # The edge axis reduces into resident scratch/output -> "arbitrary".
            # (For large N, add a node-tile "parallel" axis to use v7x's 2 TCs.)
            dimension_semantics=("arbitrary",),
            vmem_limit_bytes=32 * 1024 * 1024,
        ),
    )(x, w_pad, a_src_pad, a_dst_pad, bias_pad, src2d, trg2d)
    # Slice the lane-dense slab back to the module's [N, F_out] output.
    return out_pad[:, :f_out]


# ---------------- pure-JAX reference (for correctness check) ----------------
def gat_layer_ref(x, w, a_vec, out_bias, src_idx, trg_idx):
    n_nodes = x.shape[0]
    h = x @ w
    nodes = h[src_idx]
    neighbors = h[trg_idx]
    alpha = jnp.concatenate([nodes, neighbors], axis=1) @ a_vec.T      # [E, 1]
    alpha = jnp.where(alpha > 0, alpha, LEAKY_SLOPE * alpha)[:, 0]
    seg_max = jax.ops.segment_max(alpha, src_idx, num_segments=n_nodes)
    e = jnp.exp(alpha - seg_max[src_idx])
    seg_sum = jax.ops.segment_sum(e, src_idx, num_segments=n_nodes)
    sm = e / seg_sum[src_idx]
    out = jax.ops.segment_sum(sm[:, None] * neighbors, src_idx,
                              num_segments=n_nodes)
    return out + out_bias


def xavier_uniform(key, shape):
    fan_out, fan_in = shape[0], shape[1]
    bound = (6.0 / (fan_in + fan_out)) ** 0.5
    return jax.random.uniform(key, shape, jnp.float32, -bound, bound)


if __name__ == "__main__":
    N_NODES, F_IN, F_OUT, N_EDGES = 16, 8, 16, 500

    key = jax.random.PRNGKey(0)
    k_w, k_a, k_x, k_src, k_trg = jax.random.split(key, 5)

    # Parameters (xavier init, zero output bias -- matches the PyTorch module).
    W = xavier_uniform(k_w, (F_IN, F_OUT))              # weights_matrix
    a_vec = xavier_uniform(k_a, (1, 2 * F_OUT))         # attention bias vector
    out_bias = jnp.zeros((F_OUT,), jnp.float32)

    # Inputs: node features + COO adjacency (src/trg index lists).
    # TODO(synk): dropout branch of the module not implemented (default
    # dropout_prob=0.0 makes it a no-op in forward).
    x = jax.random.normal(k_x, (N_NODES, F_IN), jnp.float32)
    src_idx = jax.random.randint(k_src, (N_EDGES,), 0, N_NODES, jnp.int32)
    trg_idx = jax.random.randint(k_trg, (N_EDGES,), 0, N_NODES, jnp.int32)

    out = gat_layer_pallas(x, W, a_vec, out_bias, src_idx, trg_idx)
    out = jax.block_until_ready(out)

    ref = gat_layer_ref(x, W, a_vec, out_bias, src_idx, trg_idx)
    assert out.shape == (N_NODES, F_OUT)
    assert jnp.allclose(out, ref, atol=1e-4, rtol=1e-4), "mismatch vs reference"

    print("KERNEL_OK")
</pallas_src>

<mosaic_0001>
module attributes {stable_mosaic.version = 11 : i64} {
  func.func @_gat_kernel(%arg0: i32, %arg1: memref<16x8xf32, #tpu.memory_space<vmem>>, %arg2: memref<8x128xf32, #tpu.memory_space<vmem>>, %arg3: memref<1x128xf32, #tpu.memory_space<vmem>>, %arg4: memref<1x128xf32, #tpu.memory_space<vmem>>, %arg5: memref<1x128xf32, #tpu.memory_space<vmem>>, %arg6: memref<512x1xi32, #tpu.memory_space<vmem>>, %arg7: memref<512x1xi32, #tpu.memory_space<vmem>>, %arg8: memref<16x128xf32, #tpu.memory_space<vmem>>, %arg9: memref<16x128xf32, #tpu.memory_space<vmem>>, %arg10: memref<1x16xf32, #tpu.memory_space<vmem>>, %arg11: memref<1x1xf32, #tpu.memory_space<vmem>>, %arg12: memref<16x128xf32, #tpu.memory_space<vmem>>) attributes {dimension_semantics = [#tpu.dimension_semantics<arbitrary>], iteration_bounds = array<i64: 1>, scalar_prefetch = 0 : i64, scratch_operands = 4 : i64, tpu.core_type = #tpu.core_type<tc>, window_params = [{pipeline_mode = #tpu.pipeline_mode<synchronous>, transform_indices = @transform_0, window_bounds = array<i64: 16, 8>}, {pipeline_mode = #tpu.pipeline_mode<synchronous>, transform_indices = @transform_1, window_bounds = array<i64: 8, 128>}, {pipeline_mode = #tpu.pipeline_mode<synchronous>, transform_indices = @transform_2, window_bounds = array<i64: 1, 128>}, {pipeline_mode = #tpu.pipeline_mode<synchronous>, transform_indices = @transform_3, window_bounds = array<i64: 1, 128>}, {pipeline_mode = #tpu.pipeline_mode<synchronous>, transform_indices = @transform_4, window_bounds = array<i64: 1, 128>}, {transform_indices = @transform_5, window_bounds = array<i64: 512, 1>}, {transform_indices = @transform_6, window_bounds = array<i64: 512, 1>}, {pipeline_mode = #tpu.pipeline_mode<synchronous>, transform_indices = @transform_7, window_bounds = array<i64: 16, 128>}]} {
    %c0_i32 = arith.constant 0 : i32
    %0 = arith.cmpi eq, %arg0, %c0_i32 : i32
    %1 = arith.extui %0 : i1 to i32
    %c0_i32_0 = arith.constant 0 : i32
    %2 = arith.cmpi ne, %1, %c0_i32_0 : i32
    scf.if %2 {
      %c0_23 = arith.constant 0 : index
      %c0_24 = arith.constant 0 : index
      %50 = vector.load %arg1[%c0_23, %c0_24] : memref<16x8xf32, #tpu.memory_space<vmem>>, vector<16x8xf32>
      %c0_25 = arith.constant 0 : index
      %c0_26 = arith.constant 0 : index
      %51 = vector.load %arg2[%c0_25, %c0_26] : memref<8x128xf32, #tpu.memory_space<vmem>>, vector<8x128xf32>
      %cst_27 = arith.constant dense<0.000000e+00> : vector<16x128xf32>
      %52 = tpu.matmul %50, %51, %cst_27 {dimension_numbers = #tpu.dot_dimension_numbers<[1], [0], [0], [1], [0, 0, 1, 1], [], []>} : vector<16x8xf32>, vector<8x128xf32>, vector<16x128xf32> -> vector<16x128xf32>
      %c0_28 = arith.constant 0 : index
      %c0_29 = arith.constant 0 : index
      %53 = vector.load %arg4[%c0_28, %c0_29] : memref<1x128xf32, #tpu.memory_space<vmem>>, vector<1x128xf32>
      %54 = vector.broadcast %53 : vector<1x128xf32> to vector<16x128xf32>
      %55 = arith.mulf %52, %54 : vector<16x128xf32>
      %cst_30 = arith.constant dense<0.000000e+00> : vector<16xf32>
      %56 = vector.multi_reduction <add>, %55, %cst_30 [1] : vector<16x128xf32> to vector<16xf32>
      %57 = vector.shape_cast %56 : vector<16xf32> to vector<16x1xf32>
      %58 = tpu.iota {dimensions = array<i32: 1>} : vector<16x128xi32>
      %c16_i32 = arith.constant 16 : i32
      %59 = vector.broadcast %c16_i32 : i32 to vector<16x128xi32>
      %60 = arith.cmpi eq, %58, %59 : vector<16x128xi32>
      %c17_i32 = arith.constant 17 : i32
      %61 = vector.broadcast %c17_i32 : i32 to vector<16x128xi32>
      %62 = arith.cmpi eq, %58, %61 : vector<16x128xi32>
      %63 = vector.shape_cast %57 : vector<16x1xf32> to vector<16x1xf32>
      %64 = vector.broadcast %63 : vector<16x1xf32> to vector<16x128xf32>
      %65 = arith.select %62, %64, %52 : vector<16x128xi1>, vector<16x128xf32>
      %cst_31 = arith.constant 1.000000e+00 : f32
      %66 = vector.broadcast %cst_31 : f32 to vector<16x128xf32>
      %67 = arith.select %60, %66, %65 : vector<16x128xi1>, vector<16x128xf32>
      %c0_32 = arith.constant 0 : index
      %c0_33 = arith.constant 0 : index
      %68 = vector.load %arg9[%c0_32, %c0_33] : memref<16x128xf32, #tpu.memory_space<vmem>>, vector<16x128xf32>
      tpu.vector_store %arg9[%c0_32, %c0_33], %67 {strides = array<i32>} : memref<16x128xf32, #tpu.memory_space<vmem>>, vector<16x128xf32>,
      %c0_34 = arith.constant 0 : index
      %c0_35 = arith.constant 0 : index
      %69 = vector.load %arg3[%c0_34, %c0_35] : memref<1x128xf32, #tpu.memory_space<vmem>>, vector<1x128xf32>
      %cst_36 = arith.constant dense<0.000000e+00> : vector<1x16xf32>
      %70 = tpu.matmul %69, %52, %cst_36 {dimension_numbers = #tpu.dot_dimension_numbers<[1], [1], [0], [0], [0, 0, 1, 0], [], []>} : vector<1x128xf32>, vector<16x128xf32>, vector<1x16xf32> -> vector<1x16xf32>
      %c0_37 = arith.constant 0 : index
      %c0_38 = arith.constant 0 : index
      %71 = vector.load %arg10[%c0_37, %c0_38] : memref<1x16xf32, #tpu.memory_space<vmem>>, vector<1x16xf32>
      tpu.vector_store %arg10[%c0_37, %c0_38], %70 {strides = array<i32>} : memref<1x16xf32, #tpu.memory_space<vmem>>, vector<1x16xf32>,
      %72 = vector.shape_cast %57 : vector<16x1xf32> to vector<1x16x1xf32>
      %cst_39 = arith.constant dense<0xFF800000> : vector<1xf32>
      %73 = vector.multi_reduction <maximumf>, %72, %cst_39 [1, 2] : vector<1x16x1xf32> to vector<1xf32>
      %74 = vector.shape_cast %73 : vector<1xf32> to vector<1x1x1xf32>
      %75 = vector.extract %74[0, 0, 0] : f32 from vector<1x1x1xf32>
      %76 = vector.broadcast %75 : f32 to vector<1x1xf32>
      %c0_40 = arith.constant 0 : index
      %c0_41 = arith.constant 0 : index
      %77 = vector.load %arg11[%c0_40, %c0_41] : memref<1x1xf32, #tpu.memory_space<vmem>>, vector<1x1xf32>
      tpu.vector_store %arg11[%c0_40, %c0_41], %76 {strides = array<i32>} : memref<1x1xf32, #tpu.memory_space<vmem>>, vector<1x1xf32>,
      %cst_42 = arith.constant 0.000000e+00 : f32
      %78 = vector.broadcast %cst_42 : f32 to vector<16x128xf32>
      %c0_43 = arith.constant 0 : index
      %c0_44 = arith.constant 0 : index
      %79 = vector.load %arg12[%c0_43, %c0_44] : memref<16x128xf32, #tpu.memory_space<vmem>>, vector<16x128xf32>
      tpu.vector_store %arg12[%c0_43, %c0_44], %78 {strides = array<i32>} : memref<16x128xf32, #tpu.memory_space<vmem>>, vector<16x128xf32>,
    } else {
    }
    %c0 = arith.constant 0 : index
    %c0_1 = arith.constant 0 : index
    %3 = vector.load %arg6[%c0, %c0_1] : memref<512x1xi32, #tpu.memory_space<vmem>>, vector<512x1xi32>
    %c0_2 = arith.constant 0 : index
    %c0_3 = arith.constant 0 : index
    %4 = vector.load %arg7[%c0_2, %c0_3] : memref<512x1xi32, #tpu.memory_space<vmem>>, vector<512x1xi32>
    %5 = tpu.iota {dimensions = array<i32: 1>} : vector<512x16xi32>
    %6 = vector.broadcast %3 : vector<512x1xi32> to vector<512x16xi32>
    %7 = arith.cmpi eq, %6, %5 : vector<512x16xi32>
    %8 = arith.extui %7 : vector<512x16xi1> to vector<512x16xi32>
    %9 = arith.sitofp %8 : vector<512x16xi32> to vector<512x16xf32>
    %10 = vector.broadcast %4 : vector<512x1xi32> to vector<512x16xi32>
    %11 = arith.cmpi eq, %10, %5 : vector<512x16xi32>
    %12 = arith.extui %11 : vector<512x16xi1> to vector<512x16xi32>
    %13 = arith.sitofp %12 : vector<512x16xi32> to vector<512x16xf32>
    %c0_4 = arith.constant 0 : index
    %c0_5 = arith.constant 0 : index
    %14 = vector.load %arg9[%c0_4, %c0_5] : memref<16x128xf32, #tpu.memory_space<vmem>>, vector<16x128xf32>
    %cst = arith.constant dense<0.000000e+00> : vector<512x128xf32>
    %15 = tpu.matmul %13, %14, %cst {dimension_numbers = #tpu.dot_dimension_numbers<[1], [0], [0], [1], [0, 0, 1, 1], [], []>} : vector<512x16xf32>, vector<16x128xf32>, vector<512x128xf32> -> vector<512x128xf32>
    %16 = vector.extract_strided_slice %15 {offsets = [0, 17], sizes = [512, 1], strides = [1, 1]} : vector<512x128xf32> to vector<512x1xf32>
    %c0_6 = arith.constant 0 : index
    %c0_7 = arith.constant 0 : index
    %17 = vector.load %arg10[%c0_6, %c0_7] : memref<1x16xf32, #tpu.memory_space<vmem>>, vector<1x16xf32>
    %18 = vector.broadcast %17 : vector<1x16xf32> to vector<512x16xf32>
    %19 = arith.mulf %9, %18 : vector<512x16xf32>
    %cst_8 = arith.constant dense<0.000000e+00> : vector<512xf32>
    %20 = vector.multi_reduction <add>, %19, %cst_8 [1] : vector<512x16xf32> to vector<512xf32>
    %21 = vector.shape_cast %20 : vector<512xf32> to vector<512x1xf32>
    %22 = arith.addf %21, %16 : vector<512x1xf32>
    %cst_9 = arith.constant 0.000000e+00 : f32
    %23 = vector.broadcast %cst_9 : f32 to vector<512x1xf32>
    %24 = arith.cmpf ogt, %22, %23 : vector<512x1xf32>
    %cst_10 = arith.constant 2.000000e-01 : f32
    %25 = vector.broadcast %cst_10 : f32 to vector<512x1xf32>
    %26 = arith.mulf %25, %22 : vector<512x1xf32>
    %27 = arith.select %24, %22, %26 : vector<512x1xi1>, vector<512x1xf32>
    %c0_11 = arith.constant 0 : index
    %c0_12 = arith.constant 0 : index
    %28 = vector.load %arg11[%c0_11, %c0_12] : memref<1x1xf32, #tpu.memory_space<vmem>>, vector<1x1xf32>
    %29 = vector.broadcast %28 : vector<1x1xf32> to vector<512x1xf32>
    %30 = arith.addf %21, %29 : vector<512x1xf32>
    %cst_13 = arith.constant 0.000000e+00 : f32
    %31 = vector.broadcast %cst_13 : f32 to vector<512x1xf32>
    %32 = arith.cmpf ogt, %30, %31 : vector<512x1xf32>
    %cst_14 = arith.constant 2.000000e-01 : f32
    %33 = vector.broadcast %cst_14 : f32 to vector<512x1xf32>
    %34 = arith.mulf %33, %30 : vector<512x1xf32>
    %35 = arith.select %32, %30, %34 : vector<512x1xi1>, vector<512x1xf32>
    %36 = arith.subf %27, %35 : vector<512x1xf32>
    %cst_15 = arith.constant 0.000000e+00 : f32
    %37 = vector.broadcast %cst_15 : f32 to vector<512x1xf32>
    %38 = arith.minimumf %36, %37 : vector<512x1xf32>
    %39 = math.exp %38 : vector<512x1xf32>
    %40 = vector.broadcast %39 : vector<512x1xf32> to vector<512x128xf32>
    %41 = arith.mulf %40, %15 : vector<512x128xf32>
    %c0_16 = arith.constant 0 : index
    %c0_17 = arith.constant 0 : index
    %42 = vector.load %arg12[%c0_16, %c0_17] : memref<16x128xf32, #tpu.memory_space<vmem>>, vector<16x128xf32>
    %43 = tpu.transpose %9, [1, 0] : vector<512x16xf32> -> vector<16x512xf32>
    %cst_18 = arith.constant dense<0.000000e+00> : vector<16x128xf32>
    %44 = tpu.matmul %43, %41, %cst_18 {dimension_numbers = #tpu.dot_dimension_numbers<[1], [0], [0], [1], [0, 0, 1, 1], [], []>} : vector<16x512xf32>, vector<512x128xf32>, vector<16x128xf32> -> vector<16x128xf32>
    %45 = arith.addf %42, %44 : vector<16x128xf32>
    %c0_19 = arith.constant 0 : index
    %c0_20 = arith.constant 0 : index
    %46 = vector.load %arg12[%c0_19, %c0_20] : memref<16x128xf32, #tpu.memory_space<vmem>>, vector<16x128xf32>
    tpu.vector_store %arg12[%c0_19, %c0_20], %45 {strides = array<i32>} : memref<16x128xf32, #tpu.memory_space<vmem>>, vector<16x128xf32>,
    %c0_i32_21 = arith.constant 0 : i32
    %47 = arith.cmpi eq, %arg0, %c0_i32_21 : i32
    %48 = arith.extui %47 : i1 to i32
    %c0_i32_22 = arith.constant 0 : i32
    %49 = arith.cmpi ne, %48, %c0_i32_22 : i32
    scf.if %49 {
      %c0_23 = arith.constant 0 : index
      %c0_24 = arith.constant 0 : index
      %50 = vector.load %arg12[%c0_23, %c0_24] : memref<16x128xf32, #tpu.memory_space<vmem>>, vector<16x128xf32>
      %51 = vector.extract_strided_slice %50 {offsets = [0, 16], sizes = [16, 1], strides = [1, 1]} : vector<16x128xf32> to vector<16x1xf32>
      %cst_25 = arith.constant 0.000000e+00 : f32
      %52 = vector.broadcast %cst_25 : f32 to vector<16x1xf32>
      %53 = arith.cmpf ogt, %51, %52 : vector<16x1xf32>
      %cst_26 = arith.constant 1.000000e+00 : f32
      %54 = vector.broadcast %cst_26 : f32 to vector<16x1xf32>
      %55 = arith.select %53, %51, %54 : vector<16x1xi1>, vector<16x1xf32>
      %56 = vector.broadcast %55 : vector<16x1xf32> to vector<16x128xf32>
      %57 = arith.divf %50, %56 : vector<16x128xf32>
      %c0_27 = arith.constant 0 : index
      %c0_28 = arith.constant 0 : index
      %58 = vector.load %arg5[%c0_27, %c0_28] : memref<1x128xf32, #tpu.memory_space<vmem>>, vector<1x128xf32>
      %59 = vector.broadcast %58 : vector<1x128xf32> to vector<16x128xf32>
      %60 = arith.addf %57, %59 : vector<16x128xf32>
      %c0_29 = arith.constant 0 : index
      %c0_30 = arith.constant 0 : index
      %61 = vector.load %arg8[%c0_29, %c0_30] : memref<16x128xf32, #tpu.memory_space<vmem>>, vector<16x128xf32>
      tpu.vector_store %arg8[%c0_29, %c0_30], %60 {strides = array<i32>} : memref<16x128xf32, #tpu.memory_space<vmem>>, vector<16x128xf32>,
    } else {
    }
    return
  }
  func.func @transform_0(%arg0: i32) -> (i32, i32) {
    %c0_i32 = arith.constant 0 : i32
    %c0_i32_0 = arith.constant 0 : i32
    %c0_i32_1 = arith.constant 0 : i32
    return %c0_i32, %c0_i32_0 : i32, i32
  }
  func.func @transform_1(%arg0: i32) -> (i32, i32) {
    %c0_i32 = arith.constant 0 : i32
    %c0_i32_0 = arith.constant 0 : i32
    %c0_i32_1 = arith.constant 0 : i32
    return %c0_i32, %c0_i32_0 : i32, i32
  }
  func.func @transform_2(%arg0: i32) -> (i32, i32) {
    %c0_i32 = arith.constant 0 : i32
    %c0_i32_0 = arith.constant 0 : i32
    %c0_i32_1 = arith.constant 0 : i32
    return %c0_i32, %c0_i32_0 : i32, i32
  }
  func.func @transform_3(%arg0: i32) -> (i32, i32) {
    %c0_i32 = arith.constant 0 : i32
    %c0_i32_0 = arith.constant 0 : i32
    %c0_i32_1 = arith.constant 0 : i32
    return %c0_i32, %c0_i32_0 : i32, i32
  }
  func.func @transform_4(%arg0: i32) -> (i32, i32) {
    %c0_i32 = arith.constant 0 : i32
    %c0_i32_0 = arith.constant 0 : i32
    %c0_i32_1 = arith.constant 0 : i32
    return %c0_i32, %c0_i32_0 : i32, i32
  }
  func.func @transform_5(%arg0: i32) -> (i32, i32) {
    %c0_i32 = arith.constant 0 : i32
    %c0_i32_0 = arith.constant 0 : i32
    return %arg0, %c0_i32 : i32, i32
  }
  func.func @transform_6(%arg0: i32) -> (i32, i32) {
    %c0_i32 = arith.constant 0 : i32
    %c0_i32_0 = arith.constant 0 : i32
    return %arg0, %c0_i32 : i32, i32
  }
  func.func @transform_7(%arg0: i32) -> (i32, i32) {
    %c0_i32 = arith.constant 0 : i32
    %c0_i32_0 = arith.constant 0 : i32
    %c0_i32_1 = arith.constant 0 : i32
    return %c0_i32, %c0_i32_0 : i32, i32
  }
}

</mosaic_0001>

<llo_original>
// kernel: gat_layer_pallas.1
$region0: #{gat_layer_pallas.1}
  #allocation0 [shape = 'u32[]', space=smem, size = 0x4, offset = 0x4, fixed_abs, tag = 'smem constant byte address 0x4 - core index']
  #allocation1 [shape = 'u32[144,128]{1,0:T(1,128)}', space=vmem, size = 0x12000, scoped, tag = 'internal scratch']
  #allocation2 [shape = 'f32[16,128]{1,0:T(8,128)}', space=vmem, size = 0x2000, scoped, tag = 'scratch operand']
  #allocation3 [shape = 'f32[1,16]{1,0:T(1,128)}', space=vmem, size = 0x200, scoped, tag = 'scratch operand']
  #allocation4 [shape = 'f32[1,1]{1,0:T(1,128)}', space=vmem, size = 0x200, scoped, tag = 'scratch operand']
  #allocation5 [shape = 'f32[16,128]{1,0:T(8,128)}', space=vmem, size = 0x2000, scoped, tag = 'scratch operand']
  %s0 = inlined_call_operand.vmem [shape: f32[16,8], index: 0, kind: input, shape index: {}]
  %s1 = inlined_call_operand.vmem [shape: f32[8,128], index: 1, kind: input, shape index: {}]
  %s2 = inlined_call_operand.vmem [shape: f32[1,128], index: 2, kind: input, shape index: {}]
  %s3 = inlined_call_operand.vmem [shape: f32[1,128], index: 3, kind: input, shape index: {}]
  %s4 = inlined_call_operand.vmem [shape: f32[1,128], index: 4, kind: input, shape index: {}]
  %s5 = inlined_call_operand.vmem [shape: s32[512,1], index: 5, kind: input, shape index: {}]
  %s6 = inlined_call_operand.vmem [shape: s32[512,1], index: 6, kind: input, shape index: {}]
  %s7 = inlined_call_operand.hbm [shape: f32[16,128], index: 7, kind: output, shape index: {}]
  %s8 = sld [smem:[#allocation0]]
  $region46: #{gat_layer_pallas.1} parent=0
    _
  %s10 = ssub.s32 1, %s8
  %s11 = scalar_select 0, %s10, %s8
  $region1: #{gat_layer_pallas.1} parent=0
    #allocation6 [shape = 'u8[8192]{0}', space=vmem, size = 0x2000, scoped, tag = 'output window, operand 0, single buffered']
    #allocation7 [shape = 's32[1]{0}', space=sflag, size = 0x4, scoped, tag = 'scoped memory for gat_layer_pallas.1']
    %12 = vsyncpa [#allocation7], 0
    // Predicated region
    $region2: #{gat_layer_pallas.1} parent=1 // pred_check
      _
    $region3: #{gat_layer_pallas.1} parent=1 // pred_check_branch
      %14 = sbr.rel (0) target = $region5
    $region4: #{gat_layer_pallas.1} parent=1 // pred_region
      _
    $region5: #{gat_layer_pallas.1} parent=1 // pred_fallthru
      _
    // Predicated region
    $region6: #{gat_layer_pallas.1} parent=1 // pred_check
      _
    $region7: #{gat_layer_pallas.1} parent=1 // pred_check_branch
      %16 = sbr.rel (0) target = $region9
    $region8: #{gat_layer_pallas.1} parent=1 // pred_region
      _
    $region9: #{gat_layer_pallas.1} parent=1 // pred_fallthru
      _
    // Predicated region
    $region10: #{gat_layer_pallas.1} parent=1 // pred_check
      _
    $region11: #{gat_layer_pallas.1} parent=1 // pred_check_branch
      %18 = sbr.rel (0) target = $region13
    $region12: #{gat_layer_pallas.1} parent=1 // pred_region
      _
    $region13: #{gat_layer_pallas.1} parent=1 // pred_fallthru
      _
    // Predicated region
    $region14: #{gat_layer_pallas.1} parent=1 // pred_check
      _
    $region15: #{gat_layer_pallas.1} parent=1 // pred_check_branch
      %20 = sbr.rel (0) target = $region17
    $region16: #{gat_layer_pallas.1} parent=1 // pred_region
      _
    $region17: #{gat_layer_pallas.1} parent=1 // pred_fallthru
      _
    // Predicated region
    $region18: #{gat_layer_pallas.1} parent=1 // pred_check
      _
    $region19: #{gat_layer_pallas.1} parent=1 // pred_check_branch
      %22 = sbr.rel (0) target = $region21
    $region20: #{gat_layer_pallas.1} parent=1 // pred_region
      _
    $region21: #{gat_layer_pallas.1} parent=1 // pred_fallthru
      _
    // Predicated region
    $region22: #{gat_layer_pallas.1} parent=1 // pred_check
      _
    $region23: #{gat_layer_pallas.1} parent=1 // pred_check_branch
      %24 = sbr.rel (0) target = $region25
    $region24: #{gat_layer_pallas.1} parent=1 // pred_region
      _
    $region25: #{gat_layer_pallas.1} parent=1 // pred_fallthru
      _
    // Predicated region
    $region26: #{gat_layer_pallas.1} parent=1 // pred_check
      _
    $region27: #{gat_layer_pallas.1} parent=1 // pred_check_branch
      %26 = sbr.rel (0) target = $region29
    $region28: #{gat_layer_pallas.1} parent=1 // pred_region
      _
    $region29: #{gat_layer_pallas.1} parent=1 // pred_fallthru
      _
    %p27 = scmp.eq.s32.totalorder 0, 0
    // Predicated region
    $region30: #{gat_layer_pallas.1} parent=1 // pred_check
      %p28 = pneg %p27
    $region31: #{gat_layer_pallas.1} parent=1 // pred_check_branch
      %30 = sbr.rel (%p28) target = $region33
    $region32: #{gat_layer_pallas.1} parent=1 // pred_region
      %v31 = vld [vmem:[%s0] sm:$0xff]
      %v32 = vld [vmem:[%s0 + $0x8] sm:$0xff]
      %v33 = vld [vmem:[%s1] sm:$0xff]
      %vm34 = vcmask 64512
      %v36 = vsel %vm34, %v31, 0
      %v39 = vsel %vm34, %v32, 0
      %41 = vmatprep.subr.mxu0 0.0
      %42 = vmatpush1.msra.mxu0 %v33
      %43 = vmatprep.subr.mxu0 0.0
      %44 = vmatpush1.msra.mxu0 0.0
      %45 = vmatprep.subr.mxu0 0.0
      %46 = vmatpush1.msra.mxu0 0.0
      %47 = vmatprep.subr.mxu0 0.0
      %48 = vmatpush1.msra.mxu0 0.0
      %49 = vmatprep.subr.mxu0 0.0
      %50 = vmatpush1.msra.mxu0 0.0
      %51 = vmatprep.subr.mxu0 0.0
      %52 = vmatpush1.msra.mxu0 0.0
      %53 = vmatprep.subr.mxu0 0.0
      %54 = vmatpush1.msra.mxu0 0.0
      %55 = vmatprep.subr.mxu0 0.0
      %56 = vmatpush1.msra.mxu0 0.0
      %57 = vmatprep.subr.mxu0 0.0
      %58 = vmatpush1.msra.mxu0 0.0
      %59 = vmatprep.subr.mxu0 0.0
      %60 = vmatpush1.msra.mxu0 0.0
      %61 = vmatprep.subr.mxu0 0.0
      %62 = vmatpush1.msra.mxu0 0.0
      %63 = vmatprep.subr.mxu0 0.0
      %64 = vmatpush1.msra.mxu0 0.0
      %65 = vmatprep.subr.mxu0 0.0
      %66 = vmatpush1.msra.mxu0 0.0
      %67 = vmatprep.subr.mxu0 0.0
      %68 = vmatpush1.msra.mxu0 0.0
      %69 = vmatprep.subr.mxu0 0.0
      %70 = vmatpush1.msra.mxu0 0.0
      %71 = vmatprep.subr.mxu0 0.0
      %72 = vmatpush1.msra.mxu0 0.0
      %73 = vmatprep.subr.mxu0 0.0
      %74 = vmatpush1.msra.mxu0 0.0
      %75 = vmatprep.subr.mxu0 0.0
      %76 = vmatpush1.msra.mxu0 0.0
      %77 = vmatprep.subr.mxu0 0.0
      %78 = vmatpush1.msra.mxu0 0.0
      %79 = vmatprep.subr.mxu0 0.0
      %80 = vmatpush1.msra.mxu0 0.0
      %81 = vmatprep.subr.mxu0 0.0
      %82 = vmatpush1.msra.mxu0 0.0
      %83 = vmatprep.subr.mxu0 0.0
      %84 = vmatpush1.msra.mxu0 0.0
      %85 = vmatprep.subr.mxu0 0.0
      %86 = vmatpush1.msra.mxu0 0.0
      %87 = vmatprep.subr.mxu0 0.0
      %88 = vmatpush1.msra.mxu0 0.0
      %89 = vmatprep.subr.mxu0 0.0
      %90 = vmatpush1.msra.mxu0 0.0
      %91 = vmatprep.subr.mxu0 0.0
      %92 = vmatpush1.msra.mxu0 0.0
      %93 = vmatprep.subr.mxu0 0.0
      %94 = vmatpush1.msra.mxu0 0.0
      %95 = vmatprep.subr.mxu0 0.0
      %96 = vmatpush1.msra.mxu0 0.0
      %97 = vmatprep.subr.mxu0 0.0
      %98 = vmatpush1.msra.mxu0 0.0
      %99 = vmatprep.subr.mxu0 0.0
      %100 = vmatpush1.msra.mxu0 0.0
      %101 = vmatprep.subr.mxu0 0.0
      %102 = vmatpush1.msra.mxu0 0.0
      %103 = vmatprep.subr.mxu0 0.0
      %104 = vmatpush1.msra.mxu0 0.0
      %105 = vmatprep.mubr.f32.mxu0 0.0
      %106 = vmatmul.mubr.f32.gmra.mrb[0].mxu0 %v36
      %v107 = vpop.f32.mrb[0].mxu0
      %v108 = vadd.f32 0.0, %v107
      %v109 = vpop.f32.mrb[0].mxu0
      %110 = vmatprep.mubr.f32.mxu0 0.0
      %111 = vmatmul.mubr.f32.gmra.mrb[0].mxu0 %v39
      %v112 = vpop.f32.mrb[0].mxu0
      %v113 = vadd.f32 0.0, %v112
      %v114 = vpop.f32.mrb[0].mxu0
      %115 = vdwg.mxu0
      %v116 = vld [vmem:[%s3] sm:$0x1]
      %v118 = vlaneseq
      %v119 = vshrl.u32 %v118, 7
      %v120 = vsub.s32 0, %v119
      %v121 = vrot.slane %v116, %v120
      %v123 = vmul.f32 %v108, %v121
      %v124 = vmul.f32 %v113, %v121
      %125 = vadd.xlane.f32.xlu0 %v123
      %v126 = vpop.xlane.xlu0 %125
      %127 = vadd.xlane.f32.xlu0 %v124
      %v128 = vpop.xlane.xlu0 %127
      %v129 = vlaneseq
      %v130 = vand.u32 %v129, 127
      %vm131 = vcmp.eq.s32.totalorder %v130, 16
      %vm132 = vcmp.eq.s32.totalorder %v130, 17
      %v133 = vsel %vm132, %v126, %v108
      %v134 = vsel %vm132, %v128, %v113
      %v135 = vsel %vm131, 1.0, %v133
      %v136 = vsel %vm131, 1.0, %v134
      %137 = vst [vmem:[#allocation2] sm:$0xff] %v135
      %138 = vst [vmem:[#allocation2 + $0x8] sm:$0xff] %v136
      %v139 = vld [vmem:[%s2] sm:$0x1]
      %140 = vmatprep.subr.mxu0 0.0
      %141 = vmatpush1.xpose.msra.mxu0 %v108
      %142 = vmatprep.subr.mxu0 0.0
      %143 = vmatpush1.xpose.msra.mxu0 %v113
      %144 = vmatprep.subr.mxu0 0.0
      %145 = vmatpush1.xpose.msra.mxu0 0.0
      %146 = vmatprep.subr.mxu0 0.0
      %147 = vmatpush1.xpose.msra.mxu0 0.0
      %148 = vmatprep.subr.mxu0 0.0
      %149 = vmatpush1.xpose.msra.mxu0 0.0
      %150 = vmatprep.subr.mxu0 0.0
      %151 = vmatpush1.xpose.msra.mxu0 0.0
      %152 = vmatprep.subr.mxu0 0.0
      %153 = vmatpush1.xpose.msra.mxu0 0.0
      %154 = vmatprep.subr.mxu0 0.0
      %155 = vmatpush1.xpose.msra.mxu0 0.0
      %156 = vmatprep.subr.mxu0 0.0
      %157 = vmatpush1.xpose.msra.mxu0 0.0
      %158 = vmatprep.subr.mxu0 0.0
      %159 = vmatpush1.xpose.msra.mxu0 0.0
      %160 = vmatprep.subr.mxu0 0.0
      %161 = vmatpush1.xpose.msra.mxu0 0.0
      %162 = vmatprep.subr.mxu0 0.0
      %163 = vmatpush1.xpose.msra.mxu0 0.0
      %164 = vmatprep.subr.mxu0 0.0
      %165 = vmatpush1.xpose.msra.mxu0 0.0
      %166 = vmatprep.subr.mxu0 0.0
      %167 = vmatpush1.xpose.msra.mxu0 0.0
      %168 = vmatprep.subr.mxu0 0.0
      %169 = vmatpush1.xpose.msra.mxu0 0.0
      %170 = vmatprep.subr.mxu0 0.0
      %171 = vmatpush1.xpose.msra.mxu0 0.0
      %172 = vmatprep.subr.mxu0 0.0
      %173 = vmatpush1.xpose.msra.mxu0 0.0
      %174 = vmatprep.subr.mxu0 0.0
      %175 = vmatpush1.xpose.msra.mxu0 0.0
      %176 = vmatprep.subr.mxu0 0.0
      %177 = vmatpush1.xpose.msra.mxu0 0.0
      %178 = vmatprep.subr.mxu0 0.0
      %179 = vmatpush1.xpose.msra.mxu0 0.0
      %180 = vmatprep.subr.mxu0 0.0
      %181 = vmatpush1.xpose.msra.mxu0 0.0
      %182 = vmatprep.subr.mxu0 0.0
      %183 = vmatpush1.xpose.msra.mxu0 0.0
      %184 = vmatprep.subr.mxu0 0.0
      %185 = vmatpush1.xpose.msra.mxu0 0.0
      %186 = vmatprep.subr.mxu0 0.0
      %187 = vmatpush1.xpose.msra.mxu0 0.0
      %188 = vmatprep.subr.mxu0 0.0
      %189 = vmatpush1.xpose.msra.mxu0 0.0
      %190 = vmatprep.subr.mxu0 0.0
      %191 = vmatpush1.xpose.msra.mxu0 0.0
      %192 = vmatprep.subr.mxu0 0.0
      %193 = vmatpush1.xpose.msra.mxu0 0.0
      %194 = vmatprep.subr.mxu0 0.0
      %195 = vmatpush1.xpose.msra.mxu0 0.0
      %196 = vmatprep.subr.mxu0 0.0
      %197 = vmatpush1.xpose.msra.mxu0 0.0
      %198 = vmatprep.subr.mxu0 0.0
      %199 = vmatpush1.xpose.msra.mxu0 0.0
      %200 = vmatprep.subr.mxu0 0.0
      %201 = vmatpush1.xpose.msra.mxu0 0.0
      %202 = vmatprep.subr.mxu0 0.0
      %203 = vmatpush1.xpose.msra.mxu0 0.0
      %204 = vmatprep.mubr.f32.mxu0 0.0
      %205 = vmatmul.mubr.f32.gmra.mrb[0].mxu0 %v139
      %v206 = vpop.f32.mrb[0].mxu0
      %v207 = vadd.f32 0.0, %v206
      %v208 = vpop.f32.mrb[0].mxu0
      %209 = vdwg.mxu0
      %vm210 = vcmask 122880
      %211 = vst.msk [vmem:[#allocation3] sm:$0x1] %vm210, %v207
      %v212 = vmax.f32 %v126, %v128
      %v213 = vrot.slane %v212, 4
      %v214 = vmax.f32 %v212, %v213
      %v215 = vrot.slane %v214, 2
      %v216 = vmax.f32 %v214, %v215
      %v217 = vrot.slane %v216, 1
      %v218 = vmax.f32 %v216, %v217
      %s219 = vtos %v218
      %v220 = vstv %s219
      %vm221 = vcmask 0
      %222 = vst.msk [vmem:[#allocation4] sm:$0x1] %vm221, %v220
      %223 = vst [vmem:[#allocation5] sm:$0xff] 0.0
      %224 = vst [vmem:[#allocation5 + $0x8] sm:$0xff] 0.0
    $region33: #{gat_layer_pallas.1} parent=1 // pred_fallthru
      _
    %v225 = vld [vmem:[%s5] sm:$0xff]
    %v226 = vld [vmem:[%s5 + $0x8] sm:$0xff]
    %v227 = vld [vmem:[%s5 + $0x10] sm:$0xff]
    %v228 = vld [vmem:[%s5 + $0x18] sm:$0xff]
    %v229 = vld [vmem:[%s5 + $0x20] sm:$0xff]
    %v230 = vld [vmem:[%s5 + $0x28] sm:$0xff]
    %v231 = vld [vmem:[%s5 + $0x30] sm:$0xff]
    %v232 = vld [vmem:[%s5 + $0x38] sm:$0xff]
    %v233 = vld [vmem:[%s5 + $0x40] sm:$0xff]
    %v234 = vld [vmem:[%s5 + $0x48] sm:$0xff]
    %v235 = vld [vmem:[%s5 + $0x50] sm:$0xff]
    %v236 = vld [vmem:[%s5 + $0x58] sm:$0xff]
    %v237 = vld [vmem:[%s5 + $0x60] sm:$0xff]
    %v238 = vld [vmem:[%s5 + $0x68] sm:$0xff]
    %v239 = vld [vmem:[%s5 + $0x70] sm:$0xff]
    %v240 = vld [vmem:[%s5 + $0x78] sm:$0xff]
    %v241 = vld [vmem:[%s5 + $0x80] sm:$0xff]
    %v242 = vld [vmem:[%s5 + $0x88] sm:$0xff]
    %v243 = vld [vmem:[%s5 + $0x90] sm:$0xff]
    %v244 = vld [vmem:[%s5 + $0x98] sm:$0xff]
    %v245 = vld [vmem:[%s5 + $0xa0] sm:$0xff]
    %v246 = vld [vmem:[%s5 + $0xa8] sm:$0xff]
    %v247 = vld [vmem:[%s5 + $0xb0] sm:$0xff]
    %v248 = vld [vmem:[%s5 + $0xb8] sm:$0xff]
    %v249 = vld [vmem:[%s5 + $0xc0] sm:$0xff]
    %v250 = vld [vmem:[%s5 + $0xc8] sm:$0xff]
    %v251 = vld [vmem:[%s5 + $0xd0] sm:$0xff]
    %v252 = vld [vmem:[%s5 + $0xd8] sm:$0xff]
    %v253 = vld [vmem:[%s5 + $0xe0] sm:$0xff]
    %v254 = vld [vmem:[%s5 + $0xe8] sm:$0xff]
    %v255 = vld [vmem:[%s5 + $0xf0] sm:$0xff]
    %v256 = vld [vmem:[%s5 + $0xf8] sm:$0xff]
    %v257 = vld [vmem:[%s5 + $0x100] sm:$0xff]
    %v258 = vld [vmem:[%s5 + $0x108] sm:$0xff]
    %v259 = vld [vmem:[%s5 + $0x110] sm:$0xff]
    %v260 = vld [vmem:[%s5 + $0x118] sm:$0xff]
    %v261 = vld [vmem:[%s5 + $0x120] sm:$0xff]
    %v262 = vld [vmem:[%s5 + $0x128] sm:$0xff]
    %v263 = vld [vmem:[%s5 + $0x130] sm:$0xff]
    %v264 = vld [vmem:[%s5 + $0x138] sm:$0xff]
    %v265 = vld [vmem:[%s5 + $0x140] sm:$0xff]
    %v266 = vld [vmem:[%s5 + $0x148] sm:$0xff]
    %v267 = vld [vmem:[%s5 + $0x150] sm:$0xff]
    %v268 = vld [vmem:[%s5 + $0x158] sm:$0xff]
    %v269 = vld [vmem:[%s5 + $0x160] sm:$0xff]
    %v270 = vld [vmem:[%s5 + $0x168] sm:$0xff]
    %v271 = vld [vmem:[%s5 + $0x170] sm:$0xff]
    %v272 = vld [vmem:[%s5 + $0x178] sm:$0xff]
    %v273 = vld [vmem:[%s5 + $0x180] sm:$0xff]
    %v274 = vld [vmem:[%s5 + $0x188] sm:$0xff]
    %v275 = vld [vmem:[%s5 + $0x190] sm:$0xff]
    %v276 = vld [vmem:[%s5 + $0x198] sm:$0xff]
    %v277 = vld [vmem:[%s5 + $0x1a0] sm:$0xff]
    %v278 = vld [vmem:[%s5 + $0x1a8] sm:$0xff]
    %v279 = vld [vmem:[%s5 + $0x1b0] sm:$0xff]
    %v280 = vld [vmem:[%s5 + $0x1b8] sm:$0xff]
    %v281 = vld [vmem:[%s5 + $0x1c0] sm:$0xff]
    %v282 = vld [vmem:[%s5 + $0x1c8] sm:$0xff]
    %v283 = vld [vmem:[%s5 + $0x1d0] sm:$0xff]
    %v284 = vld [vmem:[%s5 + $0x1d8] sm:$0xff]
    %v285 = vld [vmem:[%s5 + $0x1e0] sm:$0xff]
    %v286 = vld [vmem:[%s5 + $0x1e8] sm:$0xff]
    %v287 = vld [vmem:[%s5 + $0x1f0] sm:$0xff]
    %v288 = vld [vmem:[%s5 + $0x1f8] sm:$0xff]
    %v289 = vld [vmem:[%s6] sm:$0xff]
    %v290 = vld [vmem:[%s6 + $0x8] sm:$0xff]
    %v291 = vld [vmem:[%s6 + $0x10] sm:$0xff]
    %v292 = vld [vmem:[%s6 + $0x18] sm:$0xff]
    %v293 = vld [vmem:[%s6 + $0x20] sm:$0xff]
    %v294 = vld [vmem:[%s6 + $0x28] sm:$0xff]
    %v295 = vld [vmem:[%s6 + $0x30] sm:$0xff]
    %v296 = vld [vmem:[%s6 + $0x38] sm:$0xff]
    %v297 = vld [vmem:[%s6 + $0x40] sm:$0xff]
    %v298 = vld [vmem:[%s6 + $0x48] sm:$0xff]
    %v299 = vld [vmem:[%s6 + $0x50] sm:$0xff]
    %v300 = vld [vmem:[%s6 + $0x58] sm:$0xff]
    %v301 = vld [vmem:[%s6 + $0x60] sm:$0xff]
    %v302 = vld [vmem:[%s6 + $0x68] sm:$0xff]
    %v303 = vld [vmem:[%s6 + $0x70] sm:$0xff]
    %v304 = vld [vmem:[%s6 + $0x78] sm:$0xff]
    %v305 = vld [vmem:[%s6 + $0x80] sm:$0xff]
    %v306 = vld [vmem:[%s6 + $0x88] sm:$0xff]
    %v307 = vld [vmem:[%s6 + $0x90] sm:$0xff]
    %v308 = vld [vmem:[%s6 + $0x98] sm:$0xff]
    %v309 = vld [vmem:[%s6 + $0xa0] sm:$0xff]
    %v310 = vld [vmem:[%s6 + $0xa8] sm:$0xff]
    %v311 = vld [vmem:[%s6 + $0xb0] sm:$0xff]
    %v312 = vld [vmem:[%s6 + $0xb8] sm:$0xff]
    %v313 = vld [vmem:[%s6 + $0xc0] sm:$0xff]
    %v314 = vld [vmem:[%s6 + $0xc8] sm:$0xff]
    %v315 = vld [vmem:[%s6 + $0xd0] sm:$0xff]
    %v316 = vld [vmem:[%s6 + $0xd8] sm:$0xff]
    %v317 = vld [vmem:[%s6 + $0xe0] sm:$0xff]
    %v318 = vld [vmem:[%s6 + $0xe8] sm:$0xff]
    %v319 = vld [vmem:[%s6 + $0xf0] sm:$0xff]
    %v320 = vld [vmem:[%s6 + $0xf8] sm:$0xff]
    %v321 = vld [vmem:[%s6 + $0x100] sm:$0xff]
    %v322 = vld [vmem:[%s6 + $0x108] sm:$0xff]
    %v323 = vld [vmem:[%s6 + $0x110] sm:$0xff]
    %v324 = vld [vmem:[%s6 + $0x118] sm:$0xff]
    %v325 = vld [vmem:[%s6 + $0x120] sm:$0xff]
    %v326 = vld [vmem:[%s6 + $0x128] sm:$0xff]
    %v327 = vld [vmem:[%s6 + $0x130] sm:$0xff]
    %v328 = vld [vmem:[%s6 + $0x138] sm:$0xff]
    %v329 = vld [vmem:[%s6 + $0x140] sm:$0xff]
    %v330 = vld [vmem:[%s6 + $0x148] sm:$0xff]
    %v331 = vld [vmem:[%s6 + $0x150] sm:$0xff]
    %v332 = vld [vmem:[%s6 + $0x158] sm:$0xff]
    %v333 = vld [vmem:[%s6 + $0x160] sm:$0xff]
    %v334 = vld [vmem:[%s6 + $0x168] sm:$0xff]
    %v335 = vld [vmem:[%s6 + $0x170] sm:$0xff]
    %v336 = vld [vmem:[%s6 + $0x178] sm:$0xff]
    %v337 = vld [vmem:[%s6 + $0x180] sm:$0xff]
    %v338 = vld [vmem:[%s6 + $0x188] sm:$0xff]
    %v339 = vld [vmem:[%s6 + $0x190] sm:$0xff]
    %v340 = vld [vmem:[%s6 + $0x198] sm:$0xff]
    %v341 = vld [vmem:[%s6 + $0x1a0] sm:$0xff]
    %v342 = vld [vmem:[%s6 + $0x1a8] sm:$0xff]
    %v343 = vld [vmem:[%s6 + $0x1b0] sm:$0xff]
    %v344 = vld [vmem:[%s6 + $0x1b8] sm:$0xff]
    %v345 = vld [vmem:[%s6 + $0x1c0] sm:$0xff]
    %v346 = vld [vmem:[%s6 + $0x1c8] sm:$0xff]
    %v347 = vld [vmem:[%s6 + $0x1d0] sm:$0xff]
    %v348 = vld [vmem:[%s6 + $0x1d8] sm:$0xff]
    %v349 = vld [vmem:[%s6 + $0x1e0] sm:$0xff]
    %v350 = vld [vmem:[%s6 + $0x1e8] sm:$0xff]
    %v351 = vld [vmem:[%s6 + $0x1f0] sm:$0xff]
    %v352 = vld [vmem:[%s6 + $0x1f8] sm:$0xff]
    %v353 = vlaneseq
    %v354 = vand.u32 %v353, 127
    %355 = vset.pattern.permute.xlu0 0
    %356 = vperm.xlu0 %355, %v225
    %v357 = vpop.permute.xlu0 %356
    %358 = vset.pattern.permute.xlu0 0
    %359 = vperm.xlu0 %358, %v226
    %v360 = vpop.permute.xlu0 %359
    %361 = vset.pattern.permute.xlu0 0
    %362 = vperm.xlu0 %361, %v227
    %v363 = vpop.permute.xlu0 %362
    %364 = vset.pattern.permute.xlu0 0
    %365 = vperm.xlu0 %364, %v228
    %v366 = vpop.permute.xlu0 %365
    %367 = vset.pattern.permute.xlu0 0
    %368 = vperm.xlu0 %367, %v229
    %v369 = vpop.permute.xlu0 %368
    %370 = vset.pattern.permute.xlu0 0
    %371 = vperm.xlu0 %370, %v230
    %v372 = vpop.permute.xlu0 %371
    %373 = vset.pattern.permute.xlu0 0
    %374 = vperm.xlu0 %373, %v231
    %v375 = vpop.permute.xlu0 %374
    %376 = vset.pattern.permute.xlu0 0
    %377 = vperm.xlu0 %376, %v232
    %v378 = vpop.permute.xlu0 %377
    %379 = vset.pattern.permute.xlu0 0
    %380 = vperm.xlu0 %379, %v233
    %v381 = vpop.permute.xlu0 %380
    %382 = vset.pattern.permute.xlu0 0
    %383 = vperm.xlu0 %382, %v234
    %v384 = vpop.permute.xlu0 %383
    %385 = vset.pattern.permute.xlu0 0
    %386 = vperm.xlu0 %385, %v235
    %v387 = vpop.permute.xlu0 %386
    %388 = vset.pattern.permute.xlu0 0
    %389 = vperm.xlu0 %388, %v236
    %v390 = vpop.permute.xlu0 %389
    %391 = vset.pattern.permute.xlu0 0
    %392 = vperm.xlu0 %391, %v237
    %v393 = vpop.permute.xlu0 %392
    %394 = vset.pattern.permute.xlu0 0
    %395 = vperm.xlu0 %394, %v238
    %v396 = vpop.permute.xlu0 %395
    %397 = vset.pattern.permute.xlu0 0
    %398 = vperm.xlu0 %397, %v239
    %v399 = vpop.permute.xlu0 %398
    %400 = vset.pattern.permute.xlu0 0
    %401 = vperm.xlu0 %400, %v240
    %v402 = vpop.permute.xlu0 %401
    %403 = vset.pattern.permute.xlu0 0
    %404 = vperm.xlu0 %403, %v241
    %v405 = vpop.permute.xlu0 %404
    %406 = vset.pattern.permute.xlu0 0
    %407 = vperm.xlu0 %406, %v242
    %v408 = vpop.permute.xlu0 %407
    %409 = vset.pattern.permute.xlu0 0
    %410 = vperm.xlu0 %409, %v243
    %v411 = vpop.permute.xlu0 %410
    %412 = vset.pattern.permute.xlu0 0
    %413 = vperm.xlu0 %412, %v244
    %v414 = vpop.permute.xlu0 %413
    %415 = vset.pattern.permute.xlu0 0
    %416 = vperm.xlu0 %415, %v245
    %v417 = vpop.permute.xlu0 %416
    %418 = vset.pattern.permute.xlu0 0
    %419 = vperm.xlu0 %418, %v246
    %v420 = vpop.permute.xlu0 %419
    %421 = vset.pattern.permute.xlu0 0
    %422 = vperm.xlu0 %421, %v247
    %v423 = vpop.permute.xlu0 %422
    %424 = vset.pattern.permute.xlu0 0
    %425 = vperm.xlu0 %424, %v248
    %v426 = vpop.permute.xlu0 %425
    %427 = vset.pattern.permute.xlu0 0
    %428 = vperm.xlu0 %427, %v249
    %v429 = vpop.permute.xlu0 %428
    %430 = vset.pattern.permute.xlu0 0
    %431 = vperm.xlu0 %430, %v250
    %v432 = vpop.permute.xlu0 %431
    %433 = vset.pattern.permute.xlu0 0
    %434 = vperm.xlu0 %433, %v251
    %v435 = vpop.permute.xlu0 %434
    %436 = vset.pattern.permute.xlu0 0
    %437 = vperm.xlu0 %436, %v252
    %v438 = vpop.permute.xlu0 %437
    %439 = vset.pattern.permute.xlu0 0
    %440 = vperm.xlu0 %439, %v253
    %v441 = vpop.permute.xlu0 %440
    %442 = vset.pattern.permute.xlu0 0
    %443 = vperm.xlu0 %442, %v254
    %v444 = vpop.permute.xlu0 %443
    %445 = vset.pattern.permute.xlu0 0
    %446 = vperm.xlu0 %445, %v255
    %v447 = vpop.permute.xlu0 %446
    %448 = vset.pattern.permute.xlu0 0
    %449 = vperm.xlu0 %448, %v256
    %v450 = vpop.permute.xlu0 %449
    %451 = vset.pattern.permute.xlu0 0
    %452 = vperm.xlu0 %451, %v257
    %v453 = vpop.permute.xlu0 %452
    %454 = vset.pattern.permute.xlu0 0
    %455 = vperm.xlu0 %454, %v258
    %v456 = vpop.permute.xlu0 %455
    %457 = vset.pattern.permute.xlu0 0
    %458 = vperm.xlu0 %457, %v259
    %v459 = vpop.permute.xlu0 %458
    %460 = vset.pattern.permute.xlu0 0
    %461 = vperm.xlu0 %460, %v260
    %v462 = vpop.permute.xlu0 %461
    %463 = vset.pattern.permute.xlu0 0
    %464 = vperm.xlu0 %463, %v261
    %v465 = vpop.permute.xlu0 %464
    %466 = vset.pattern.permute.xlu0 0
    %467 = vperm.xlu0 %466, %v262
    %v468 = vpop.permute.xlu0 %467
    %469 = vset.pattern.permute.xlu0 0
    %470 = vperm.xlu0 %469, %v263
    %v471 = vpop.permute.xlu0 %470
    %472 = vset.pattern.permute.xlu0 0
    %473 = vperm.xlu0 %472, %v264
    %v474 = vpop.permute.xlu0 %473
    %475 = vset.pattern.permute.xlu0 0
    %476 = vperm.xlu0 %475, %v265
    %v477 = vpop.permute.xlu0 %476
    %478 = vset.pattern.permute.xlu0 0
    %479 = vperm.xlu0 %478, %v266
    %v480 = vpop.permute.xlu0 %479
    %481 = vset.pattern.permute.xlu0 0
    %482 = vperm.xlu0 %481, %v267
    %v483 = vpop.permute.xlu0 %482
    %484 = vset.pattern.permute.xlu0 0
    %485 = vperm.xlu0 %484, %v268
    %v486 = vpop.permute.xlu0 %485
    %487 = vset.pattern.permute.xlu0 0
    %488 = vperm.xlu0 %487, %v269
    %v489 = vpop.permute.xlu0 %488
    %490 = vset.pattern.permute.xlu0 0
    %491 = vperm.xlu0 %490, %v270
    %v492 = vpop.permute.xlu0 %491
    %493 = vset.pattern.permute.xlu0 0
    %494 = vperm.xlu0 %493, %v271
    %v495 = vpop.permute.xlu0 %494
    %496 = vset.pattern.permute.xlu0 0
    %497 = vperm.xlu0 %496, %v272
    %v498 = vpop.permute.xlu0 %497
    %499 = vset.pattern.permute.xlu0 0
    %500 = vperm.xlu0 %499, %v273
    %v501 = vpop.permute.xlu0 %500
    %502 = vset.pattern.permute.xlu0 0
    %503 = vperm.xlu0 %502, %v274
    %v504 = vpop.permute.xlu0 %503
    %505 = vset.pattern.permute.xlu0 0
    %506 = vperm.xlu0 %505, %v275
    %v507 = vpop.permute.xlu0 %506
    %508 = vset.pattern.permute.xlu0 0
    %509 = vperm.xlu0 %508, %v276
    %v510 = vpop.permute.xlu0 %509
    %511 = vset.pattern.permute.xlu0 0
    %512 = vperm.xlu0 %511, %v277
    %v513 = vpop.permute.xlu0 %512
    %514 = vset.pattern.permute.xlu0 0
    %515 = vperm.xlu0 %514, %v278
    %v516 = vpop.permute.xlu0 %515
    %517 = vset.pattern.permute.xlu0 0
    %518 = vperm.xlu0 %517, %v279
    %v519 = vpop.permute.xlu0 %518
    %520 = vset.pattern.permute.xlu0 0
    %521 = vperm.xlu0 %520, %v280
    %v522 = vpop.permute.xlu0 %521
    %523 = vset.pattern.permute.xlu0 0
    %524 = vperm.xlu0 %523, %v281
    %v525 = vpop.permute.xlu0 %524
    %526 = vset.pattern.permute.xlu0 0
    %527 = vperm.xlu0 %526, %v282
    %v528 = vpop.permute.xlu0 %527
    %529 = vset.pattern.permute.xlu0 0
    %530 = vperm.xlu0 %529, %v283
    %v531 = vpop.permute.xlu0 %530
    %532 = vset.pattern.permute.xlu0 0
    %533 = vperm.xlu0 %532, %v284
    %v534 = vpop.permute.xlu0 %533
    %535 = vset.pattern.permute.xlu0 0
    %536 = vperm.xlu0 %535, %v285
    %v537 = vpop.permute.xlu0 %536
    %538 = vset.pattern.permute.xlu0 0
    %539 = vperm.xlu0 %538, %v286
    %v540 = vpop.permute.xlu0 %539
    %541 = vset.pattern.permute.xlu0 0
    %542 = vperm.xlu0 %541, %v287
    %v543 = vpop.permute.xlu0 %542
    %544 = vset.pattern.permute.xlu0 0
    %545 = vperm.xlu0 %544, %v288
    %v546 = vpop.permute.xlu0 %545
    %vm547 = vcmp.eq.s32.totalorder %v357, %v354
    %vm548 = vcmp.eq.s32.totalorder %v360, %v354
    %vm549 = vcmp.eq.s32.totalorder %v363, %v354
    %vm550 = vcmp.eq.s32.totalorder %v366, %v354
    %vm551 = vcmp.eq.s32.totalorder %v369, %v354
    %vm552 = vcmp.eq.s32.totalorder %v372, %v354
    %vm553 = vcmp.eq.s32.totalorder %v375, %v354
    %vm554 = vcmp.eq.s32.totalorder %v378, %v354
    %vm555 = vcmp.eq.s32.totalorder %v381, %v354
    %vm556 = vcmp.eq.s32.totalorder %v384, %v354
    %vm557 = vcmp.eq.s32.totalorder %v387, %v354
    %vm558 = vcmp.eq.s32.totalorder %v390, %v354
    %vm559 = vcmp.eq.s32.totalorder %v393, %v354
    %vm560 = vcmp.eq.s32.totalorder %v396, %v354
    %vm561 = vcmp.eq.s32.totalorder %v399, %v354
    %vm562 = vcmp.eq.s32.totalorder %v402, %v354
    %vm563 = vcmp.eq.s32.totalorder %v405, %v354
    %vm564 = vcmp.eq.s32.totalorder %v408, %v354
    %vm565 = vcmp.eq.s32.totalorder %v411, %v354
    %vm566 = vcmp.eq.s32.totalorder %v414, %v354
    %vm567 = vcmp.eq.s32.totalorder %v417, %v354
    %vm568 = vcmp.eq.s32.totalorder %v420, %v354
    %vm569 = vcmp.eq.s32.totalorder %v423, %v354
    %vm570 = vcmp.eq.s32.totalorder %v426, %v354
    %vm571 = vcmp.eq.s32.totalorder %v429, %v354
    %vm572 = vcmp.eq.s32.totalorder %v432, %v354
    %vm573 = vcmp.eq.s32.totalorder %v435, %v354
    %vm574 = vcmp.eq.s32.totalorder %v438, %v354
    %vm575 = vcmp.eq.s32.totalorder %v441, %v354
    %vm576 = vcmp.eq.s32.totalorder %v444, %v354
    %vm577 = vcmp.eq.s32.totalorder %v447, %v354
    %vm578 = vcmp.eq.s32.totalorder %v450, %v354
    %vm579 = vcmp.eq.s32.totalorder %v453, %v354
    %vm580 = vcmp.eq.s32.totalorder %v456, %v354
    %vm581 = vcmp.eq.s32.totalorder %v459, %v354
    %vm582 = vcmp.eq.s32.totalorder %v462, %v354
    %vm583 = vcmp.eq.s32.totalorder %v465, %v354
    %vm584 = vcmp.eq.s32.totalorder %v468, %v354
    %vm585 = vcmp.eq.s32.totalorder %v471, %v354
    %vm586 = vcmp.eq.s32.totalorder %v474, %v354
    %vm587 = vcmp.eq.s32.totalorder %v477, %v354
    %vm588 = vcmp.eq.s32.totalorder %v480, %v354
    %vm589 = vcmp.eq.s32.totalorder %v483, %v354
    %vm590 = vcmp.eq.s32.totalorder %v486, %v354
    %vm591 = vcmp.eq.s32.totalorder %v489, %v354
    %vm592 = vcmp.eq.s32.totalorder %v492, %v354
    %vm593 = vcmp.eq.s32.totalorder %v495, %v354
    %vm594 = vcmp.eq.s32.totalorder %v498, %v354
    %vm595 = vcmp.eq.s32.totalorder %v501, %v354
    %vm596 = vcmp.eq.s32.totalorder %v504, %v354
    %vm597 = vcmp.eq.s32.totalorder %v507, %v354
    %vm598 = vcmp.eq.s32.totalorder %v510, %v354
    %vm599 = vcmp.eq.s32.totalorder %v513, %v354
    %vm600 = vcmp.eq.s32.totalorder %v516, %v354
    %vm601 = vcmp.eq.s32.totalorder %v519, %v354
    %vm602 = vcmp.eq.s32.totalorder %v522, %v354
    %vm603 = vcmp.eq.s32.totalorder %v525, %v354
    %vm604 = vcmp.eq.s32.totalorder %v528, %v354
    %vm605 = vcmp.eq.s32.totalorder %v531, %v354
    %vm606 = vcmp.eq.s32.totalorder %v534, %v354
    %vm607 = vcmp.eq.s32.totalorder %v537, %v354
    %vm608 = vcmp.eq.s32.totalorder %v540, %v354
    %vm609 = vcmp.eq.s32.totalorder %v543, %v354
    %vm610 = vcmp.eq.s32.totalorder %v546, %v354
    %v611 = vsel %vm547, 1, 0
    %v612 = vsel %vm548, 1, 0
    %v613 = vsel %vm549, 1, 0
    %v614 = vsel %vm550, 1, 0
    %v615 = vsel %vm551, 1, 0
    %v616 = vsel %vm552, 1, 0
    %v617 = vsel %vm553, 1, 0
    %v618 = vsel %vm554, 1, 0
    %v619 = vsel %vm555, 1, 0
    %v620 = vsel %vm556, 1, 0
    %v621 = vsel %vm557, 1, 0
    %v622 = vsel %vm558, 1, 0
    %v623 = vsel %vm559, 1, 0
    %v624 = vsel %vm560, 1, 0
    %v625 = vsel %vm561, 1, 0
    %v626 = vsel %vm562, 1, 0
    %v627 = vsel %vm563, 1, 0
    %v628 = vsel %vm564, 1, 0
    %v629 = vsel %vm565, 1, 0
    %v630 = vsel %vm566, 1, 0
    %v631 = vsel %vm567, 1, 0
    %v632 = vsel %vm568, 1, 0
    %v633 = vsel %vm569, 1, 0
    %v634 = vsel %vm570, 1, 0
    %v635 = vsel %vm571, 1, 0
    %v636 = vsel %vm572, 1, 0
    %v637 = vsel %vm573, 1, 0
    %v638 = vsel %vm574, 1, 0
    %v639 = vsel %vm575, 1, 0
    %v640 = vsel %vm576, 1, 0
    %v641 = vsel %vm577, 1, 0
    %v642 = vsel %vm578, 1, 0
    %v643 = vsel %vm579, 1, 0
    %v644 = vsel %vm580, 1, 0
    %v645 = vsel %vm581, 1, 0
    %v646 = vsel %vm582, 1, 0
    %v647 = vsel %vm583, 1, 0
    %v648 = vsel %vm584, 1, 0
    %v649 = vsel %vm585, 1, 0
    %v650 = vsel %vm586, 1, 0
    %v651 = vsel %vm587, 1, 0
    %v652 = vsel %vm588, 1, 0
    %v653 = vsel %vm589, 1, 0
    %v654 = vsel %vm590, 1, 0
    %v655 = vsel %vm591, 1, 0
    %v656 = vsel %vm592, 1, 0
    %v657 = vsel %vm593, 1, 0
    %v658 = vsel %vm594, 1, 0
    %v659 = vsel %vm595, 1, 0
    %v660 = vsel %vm596, 1, 0
    %v661 = vsel %vm597, 1, 0
    %v662 = vsel %vm598, 1, 0
    %v663 = vsel %vm599, 1, 0
    %v664 = vsel %vm600, 1, 0
    %v665 = vsel %vm601, 1, 0
    %v666 = vsel %vm602, 1, 0
    %v667 = vsel %vm603, 1, 0
    %v668 = vsel %vm604, 1, 0
    %v669 = vsel %vm605, 1, 0
    %v670 = vsel %vm606, 1, 0
    %v671 = vsel %vm607, 1, 0
    %v672 = vsel %vm608, 1, 0
    %v673 = vsel %vm609, 1, 0
    %v674 = vsel %vm610, 1, 0
    %v675 = vcvt.s32.f32 %v611
    %v676 = vcvt.s32.f32 %v612
    %v677 = vcvt.s32.f32 %v613
    %v678 = vcvt.s32.f32 %v614
    %v679 = vcvt.s32.f32 %v615
    %v680 = vcvt.s32.f32 %v616
    %v681 = vcvt.s32.f32 %v617
    %v682 = vcvt.s32.f32 %v618
    %v683 = vcvt.s32.f32 %v619
    %v684 = vcvt.s32.f32 %v620
    %v685 = vcvt.s32.f32 %v621
    %v686 = vcvt.s32.f32 %v622
    %v687 = vcvt.s32.f32 %v623
    %v688 = vcvt.s32.f32 %v624
    %v689 = vcvt.s32.f32 %v625
    %v690 = vcvt.s32.f32 %v626
    %v691 = vcvt.s32.f32 %v627
    %v692 = vcvt.s32.f32 %v628
    %v693 = vcvt.s32.f32 %v629
    %v694 = vcvt.s32.f32 %v630
    %v695 = vcvt.s32.f32 %v631
    %v696 = vcvt.s32.f32 %v632
    %v697 = vcvt.s32.f32 %v633
    %v698 = vcvt.s32.f32 %v634
    %v699 = vcvt.s32.f32 %v635
    %v700 = vcvt.s32.f32 %v636
    %v701 = vcvt.s32.f32 %v637
    %v702 = vcvt.s32.f32 %v638
    %v703 = vcvt.s32.f32 %v639
    %v704 = vcvt.s32.f32 %v640
    %v705 = vcvt.s32.f32 %v641
    %v706 = vcvt.s32.f32 %v642
    %v707 = vcvt.s32.f32 %v643
    %v708 = vcvt.s32.f32 %v644
    %v709 = vcvt.s32.f32 %v645
    %v710 = vcvt.s32.f32 %v646
    %v711 = vcvt.s32.f32 %v647
    %v712 = vcvt.s32.f32 %v648
    %v713 = vcvt.s32.f32 %v649
    %v714 = vcvt.s32.f32 %v650
    %v715 = vcvt.s32.f32 %v651
    %v716 = vcvt.s32.f32 %v652
    %v717 = vcvt.s32.f32 %v653
    %v718 = vcvt.s32.f32 %v654
    %v719 = vcvt.s32.f32 %v655
    %v720 = vcvt.s32.f32 %v656
    %v721 = vcvt.s32.f32 %v657
    %v722 = vcvt.s32.f32 %v658
    %v723 = vcvt.s32.f32 %v659
    %v724 = vcvt.s32.f32 %v660
    %v725 = vcvt.s32.f32 %v661
    %v726 = vcvt.s32.f32 %v662
    %v727 = vcvt.s32.f32 %v663
    %v728 = vcvt.s32.f32 %v664
    %v729 = vcvt.s32.f32 %v665
    %v730 = vcvt.s32.f32 %v666
    %v731 = vcvt.s32.f32 %v667
    %v732 = vcvt.s32.f32 %v668
    %v733 = vcvt.s32.f32 %v669
    %v734 = vcvt.s32.f32 %v670
    %v735 = vcvt.s32.f32 %v671
    %v736 = vcvt.s32.f32 %v672
    %v737 = vcvt.s32.f32 %v673
    %v738 = vcvt.s32.f32 %v674
    %739 = vset.pattern.permute.xlu0 0
    %740 = vperm.xlu0 %739, %v289
    %v741 = vpop.permute.xlu0 %740
    %742 = vset.pattern.permute.xlu0 0
    %743 = vperm.xlu0 %742, %v290
    %v744 = vpop.permute.xlu0 %743
    %745 = vset.pattern.permute.xlu0 0
    %746 = vperm.xlu0 %745, %v291
    %v747 = vpop.permute.xlu0 %746
    %748 = vset.pattern.permute.xlu0 0
    %749 = vperm.xlu0 %748, %v292
    %v750 = vpop.permute.xlu0 %749
    %751 = vset.pattern.permute.xlu0 0
    %752 = vperm.xlu0 %751, %v293
    %v753 = vpop.permute.xlu0 %752
    %754 = vset.pattern.permute.xlu0 0
    %755 = vperm.xlu0 %754, %v294
    %v756 = vpop.permute.xlu0 %755
    %757 = vset.pattern.permute.xlu0 0
    %758 = vperm.xlu0 %757, %v295
    %v759 = vpop.permute.xlu0 %758
    %760 = vset.pattern.permute.xlu0 0
    %761 = vperm.xlu0 %760, %v296
    %v762 = vpop.permute.xlu0 %761
    %763 = vset.pattern.permute.xlu0 0
    %764 = vperm.xlu0 %763, %v297
    %v765 = vpop.permute.xlu0 %764
    %766 = vset.pattern.permute.xlu0 0
    %767 = vperm.xlu0 %766, %v298
    %v768 = vpop.permute.xlu0 %767
    %769 = vset.pattern.permute.xlu0 0
    %770 = vperm.xlu0 %769, %v299
    %v771 = vpop.permute.xlu0 %770
    %772 = vset.pattern.permute.xlu0 0
    %773 = vperm.xlu0 %772, %v300
    %v774 = vpop.permute.xlu0 %773
    %775 = vset.pattern.permute.xlu0 0
    %776 = vperm.xlu0 %775, %v301
    %v777 = vpop.permute.xlu0 %776
    %778 = vset.pattern.permute.xlu0 0
    %779 = vperm.xlu0 %778, %v302
    %v780 = vpop.permute.xlu0 %779
    %781 = vset.pattern.permute.xlu0 0
    %782 = vperm.xlu0 %781, %v303
    %v783 = vpop.permute.xlu0 %782
    %784 = vset.pattern.permute.xlu0 0
    %785 = vperm.xlu0 %784, %v304
    %v786 = vpop.permute.xlu0 %785
    %787 = vset.pattern.permute.xlu0 0
    %788 = vperm.xlu0 %787, %v305
    %v789 = vpop.permute.xlu0 %788
    %790 = vset.pattern.permute.xlu0 0
    %791 = vperm.xlu0 %790, %v306
    %v792 = vpop.permute.xlu0 %791
    %793 = vset.pattern.permute.xlu0 0
    %794 = vperm.xlu0 %793, %v307
    %v795 = vpop.permute.xlu0 %794
    %796 = vset.pattern.permute.xlu0 0
    %797 = vperm.xlu0 %796, %v308
    %v798 = vpop.permute.xlu0 %797
    %799 = vset.pattern.permute.xlu0 0
    %800 = vperm.xlu0 %799, %v309
    %v801 = vpop.permute.xlu0 %800
    %802 = vset.pattern.permute.xlu0 0
    %803 = vperm.xlu0 %802, %v310
    %v804 = vpop.permute.xlu0 %803
    %805 = vset.pattern.permute.xlu0 0
    %806 = vperm.xlu0 %805, %v311
    %v807 = vpop.permute.xlu0 %806
    %808 = vset.pattern.permute.xlu0 0
    %809 = vperm.xlu0 %808, %v312
    %v810 = vpop.permute.xlu0 %809
    %811 = vset.pattern.permute.xlu0 0
    %812 = vperm.xlu0 %811, %v313
    %v813 = vpop.permute.xlu0 %812
    %814 = vset.pattern.permute.xlu0 0
    %815 = vperm.xlu0 %814, %v314
    %v816 = vpop.permute.xlu0 %815
    %817 = vset.pattern.permute.xlu0 0
    %818 = vperm.xlu0 %817, %v315
    %v819 = vpop.permute.xlu0 %818
    %820 = vset.pattern.permute.xlu0 0
    %821 = vperm.xlu0 %820, %v316
    %v822 = vpop.permute.xlu0 %821
    %823 = vset.pattern.permute.xlu0 0
    %824 = vperm.xlu0 %823, %v317
    %v825 = vpop.permute.xlu0 %824
    %826 = vset.pattern.permute.xlu0 0
    %827 = vperm.xlu0 %826, %v318
    %v828 = vpop.permute.xlu0 %827
    %829 = vset.pattern.permute.xlu0 0
    %830 = vperm.xlu0 %829, %v319
    %v831 = vpop.permute.xlu0 %830
    %832 = vset.pattern.permute.xlu0 0
    %833 = vperm.xlu0 %832, %v320
    %v834 = vpop.permute.xlu0 %833
    %835 = vset.pattern.permute.xlu0 0
    %836 = vperm.xlu0 %835, %v321
    %v837 = vpop.permute.xlu0 %836
    %838 = vset.pattern.permute.xlu0 0
    %839 = vperm.xlu0 %838, %v322
    %v840 = vpop.permute.xlu0 %839
    %841 = vset.pattern.permute.xlu0 0
    %842 = vperm.xlu0 %841, %v323
    %v843 = vpop.permute.xlu0 %842
    %844 = vset.pattern.permute.xlu0 0
    %845 = vperm.xlu0 %844, %v324
    %v846 = vpop.permute.xlu0 %845
    %847 = vset.pattern.permute.xlu0 0
    %848 = vperm.xlu0 %847, %v325
    %v849 = vpop.permute.xlu0 %848
    %850 = vset.pattern.permute.xlu0 0
    %851 = vperm.xlu0 %850, %v326
    %v852 = vpop.permute.xlu0 %851
    %853 = vset.pattern.permute.xlu0 0
    %854 = vperm.xlu0 %853, %v327
    %v855 = vpop.permute.xlu0 %854
    %856 = vset.pattern.permute.xlu0 0
    %857 = vperm.xlu0 %856, %v328
    %v858 = vpop.permute.xlu0 %857
    %859 = vset.pattern.permute.xlu0 0
    %860 = vperm.xlu0 %859, %v329
    %v861 = vpop.permute.xlu0 %860
    %862 = vset.pattern.permute.xlu0 0
    %863 = vperm.xlu0 %862, %v330
    %v864 = vpop.permute.xlu0 %863
    %865 = vset.pattern.permute.xlu0 0
    %866 = vperm.xlu0 %865, %v331
    %v867 = vpop.permute.xlu0 %866
    %868 = vset.pattern.permute.xlu0 0
    %869 = vperm.xlu0 %868, %v332
    %v870 = vpop.permute.xlu0 %869
    %871 = vset.pattern.permute.xlu0 0
    %872 = vperm.xlu0 %871, %v333
    %v873 = vpop.permute.xlu0 %872
    %874 = vset.pattern.permute.xlu0 0
    %875 = vperm.xlu0 %874, %v334
    %v876 = vpop.permute.xlu0 %875
    %877 = vset.pattern.permute.xlu0 0
    %878 = vperm.xlu0 %877, %v335
    %v879 = vpop.permute.xlu0 %878
    %880 = vset.pattern.permute.xlu0 0
    %881 = vperm.xlu0 %880, %v336
    %v882 = vpop.permute.xlu0 %881
    %883 = vset.pattern.permute.xlu0 0
    %884 = vperm.xlu0 %883, %v337
    %v885 = vpop.permute.xlu0 %884
    %886 = vset.pattern.permute.xlu0 0
    %887 = vperm.xlu0 %886, %v338
    %v888 = vpop.permute.xlu0 %887
    %889 = vset.pattern.permute.xlu0 0
    %890 = vperm.xlu0 %889, %v339
    %v891 = vpop.permute.xlu0 %890
    %892 = vset.pattern.permute.xlu0 0
    %893 = vperm.xlu0 %892, %v340
    %v894 = vpop.permute.xlu0 %893
    %895 = vset.pattern.permute.xlu0 0
    %896 = vperm.xlu0 %895, %v341
    %v897 = vpop.permute.xlu0 %896
    %898 = vset.pattern.permute.xlu0 0
    %899 = vperm.xlu0 %898, %v342
    %v900 = vpop.permute.xlu0 %899
    %901 = vset.pattern.permute.xlu0 0
    %902 = vperm.xlu0 %901, %v343
    %v903 = vpop.permute.xlu0 %902
    %904 = vset.pattern.permute.xlu0 0
    %905 = vperm.xlu0 %904, %v344
    %v906 = vpop.permute.xlu0 %905
    %907 = vset.pattern.permute.xlu0 0
    %908 = vperm.xlu0 %907, %v345
    %v909 = vpop.permute.xlu0 %908
    %910 = vset.pattern.permute.xlu0 0
    %911 = vperm.xlu0 %910, %v346
    %v912 = vpop.permute.xlu0 %911
    %913 = vset.pattern.permute.xlu0 0
    %914 = vperm.xlu0 %913, %v347
    %v915 = vpop.permute.xlu0 %914
    %916 = vset.pattern.permute.xlu0 0
    %917 = vperm.xlu0 %916, %v348
    %v918 = vpop.permute.xlu0 %917
    %919 = vset.pattern.permute.xlu0 0
    %920 = vperm.xlu0 %919, %v349
    %v921 = vpop.permute.xlu0 %920
    %922 = vset.pattern.permute.xlu0 0
    %923 = vperm.xlu0 %922, %v350
    %v924 = vpop.permute.xlu0 %923
    %925 = vset.pattern.permute.xlu0 0
    %926 = vperm.xlu0 %925, %v351
    %v927 = vpop.permute.xlu0 %926
    %928 = vset.pattern.permute.xlu0 0
    %929 = vperm.xlu0 %928, %v352
    %v930 = vpop.permute.xlu0 %929
    %vm931 = vcmp.eq.s32.totalorder %v741, %v354
    %vm932 = vcmp.eq.s32.totalorder %v744, %v354
    %vm933 = vcmp.eq.s32.totalorder %v747, %v354
    %vm934 = vcmp.eq.s32.totalorder %v750, %v354
    %vm935 = vcmp.eq.s32.totalorder %v753, %v354
    %vm936 = vcmp.eq.s32.totalorder %v756, %v354
    %vm937 = vcmp.eq.s32.totalorder %v759, %v354
    %vm938 = vcmp.eq.s32.totalorder %v762, %v354
    %vm939 = vcmp.eq.s32.totalorder %v765, %v354
    %vm940 = vcmp.eq.s32.totalorder %v768, %v354
    %vm941 = vcmp.eq.s32.totalorder %v771, %v354
    %vm942 = vcmp.eq.s32.totalorder %v774, %v354
    %vm943 = vcmp.eq.s32.totalorder %v777, %v354
    %vm944 = vcmp.eq.s32.totalorder %v780, %v354
    %vm945 = vcmp.eq.s32.totalorder %v783, %v354
    %vm946 = vcmp.eq.s32.totalorder %v786, %v354
    %vm947 = vcmp.eq.s32.totalorder %v789, %v354
    %vm948 = vcmp.eq.s32.totalorder %v792, %v354
    %vm949 = vcmp.eq.s32.totalorder %v795, %v354
    %vm950 = vcmp.eq.s32.totalorder %v798, %v354
    %vm951 = vcmp.eq.s32.totalorder %v801, %v354
    %vm952 = vcmp.eq.s32.totalorder %v804, %v354
    %vm953 = vcmp.eq.s32.totalorder %v807, %v354
    %vm954 = vcmp.eq.s32.totalorder %v810, %v354
    %vm955 = vcmp.eq.s32.totalorder %v813, %v354
    %vm956 = vcmp.eq.s32.totalorder %v816, %v354
    %vm957 = vcmp.eq.s32.totalorder %v819, %v354
    %vm958 = vcmp.eq.s32.totalorder %v822, %v354
    %vm959 = vcmp.eq.s32.totalorder %v825, %v354
    %vm960 = vcmp.eq.s32.totalorder %v828, %v354
    %vm961 = vcmp.eq.s32.totalorder %v831, %v354
    %vm962 = vcmp.eq.s32.totalorder %v834, %v354
    %vm963 = vcmp.eq.s32.totalorder %v837, %v354
    %vm964 = vcmp.eq.s32.totalorder %v840, %v354
    %vm965 = vcmp.eq.s32.totalorder %v843, %v354
    %vm966 = vcmp.eq.s32.totalorder %v846, %v354
    %vm967 = vcmp.eq.s32.totalorder %v849, %v354
    %vm968 = vcmp.eq.s32.totalorder %v852, %v354
    %vm969 = vcmp.eq.s32.totalorder %v855, %v354
    %vm970 = vcmp.eq.s32.totalorder %v858, %v354
    %vm971 = vcmp.eq.s32.totalorder %v861, %v354
    %vm972 = vcmp.eq.s32.totalorder %v864, %v354
    %vm973 = vcmp.eq.s32.totalorder %v867, %v354
    %vm974 = vcmp.eq.s32.totalorder %v870, %v354
    %vm975 = vcmp.eq.s32.totalorder %v873, %v354
    %vm976 = vcmp.eq.s32.totalorder %v876, %v354
    %vm977 = vcmp.eq.s32.totalorder %v879, %v354
    %vm978 = vcmp.eq.s32.totalorder %v882, %v354
    %vm979 = vcmp.eq.s32.totalorder %v885, %v354
    %vm980 = vcmp.eq.s32.totalorder %v888, %v354
    %vm981 = vcmp.eq.s32.totalorder %v891, %v354
    %vm982 = vcmp.eq.s32.totalorder %v894, %v354
    %vm983 = vcmp.eq.s32.totalorder %v897, %v354
    %vm984 = vcmp.eq.s32.totalorder %v900, %v354
    %vm985 = vcmp.eq.s32.totalorder %v903, %v354
    %vm986 = vcmp.eq.s32.totalorder %v906, %v354
    %vm987 = vcmp.eq.s32.totalorder %v909, %v354
    %vm988 = vcmp.eq.s32.totalorder %v912, %v354
    %vm989 = vcmp.eq.s32.totalorder %v915, %v354
    %vm990 = vcmp.eq.s32.totalorder %v918, %v354
    %vm991 = vcmp.eq.s32.totalorder %v921, %v354
    %vm992 = vcmp.eq.s32.totalorder %v924, %v354
    %vm993 = vcmp.eq.s32.totalorder %v927, %v354
    %vm994 = vcmp.eq.s32.totalorder %v930, %v354
    %v995 = vsel %vm931, 1, 0
    %v996 = vsel %vm932, 1, 0
    %v997 = vsel %vm933, 1, 0
    %v998 = vsel %vm934, 1, 0
    %v999 = vsel %vm935, 1, 0
    %v1000 = vsel %vm936, 1, 0
    %v1001 = vsel %vm937, 1, 0
    %v1002 = vsel %vm938, 1, 0
    %v1003 = vsel %vm939, 1, 0
    %v1004 = vsel %vm940, 1, 0
    %v1005 = vsel %vm941, 1, 0
    %v1006 = vsel %vm942, 1, 0
    %v1007 = vsel %vm943, 1, 0
    %v1008 = vsel %vm944, 1, 0
    %v1009 = vsel %vm945, 1, 0
    %v1010 = vsel %vm946, 1, 0
    %v1011 = vsel %vm947, 1, 0
    %v1012 = vsel %vm948, 1, 0
    %v1013 = vsel %vm949, 1, 0
    %v1014 = vsel %vm950, 1, 0
    %v1015 = vsel %vm951, 1, 0
    %v1016 = vsel %vm952, 1, 0
    %v1017 = vsel %vm953, 1, 0
    %v1018 = vsel %vm954, 1, 0
    %v1019 = vsel %vm955, 1, 0
    %v1020 = vsel %vm956, 1, 0
    %v1021 = vsel %vm957, 1, 0
    %v1022 = vsel %vm958, 1, 0
    %v1023 = vsel %vm959, 1, 0
    %v1024 = vsel %vm960, 1, 0
    %v1025 = vsel %vm961, 1, 0
    %v1026 = vsel %vm962, 1, 0
    %v1027 = vsel %vm963, 1, 0
    %v1028 = vsel %vm964, 1, 0
    %v1029 = vsel %vm965, 1, 0
    %v1030 = vsel %vm966, 1, 0
    %v1031 = vsel %vm967, 1, 0
    %v1032 = vsel %vm968, 1, 0
    %v1033 = vsel %vm969, 1, 0
    %v1034 = vsel %vm970, 1, 0
    %v1035 = vsel %vm971, 1, 0
    %v1036 = vsel %vm972, 1, 0
    %v1037 = vsel %vm973, 1, 0
    %v1038 = vsel %vm974, 1, 0
    %v1039 = vsel %vm975, 1, 0
    %v1040 = vsel %vm976, 1, 0
    %v1041 = vsel %vm977, 1, 0
    %v1042 = vsel %vm978, 1, 0
    %v1043 = vsel %vm979, 1, 0
    %v1044 = vsel %vm980, 1, 0
    %v1045 = vsel %vm981, 1, 0
    %v1046 = vsel %vm982, 1, 0
    %v1047 = vsel %vm983, 1, 0
    %v1048 = vsel %vm984, 1, 0
    %v1049 = vsel %vm985, 1, 0
    %v1050 = vsel %vm986, 1, 0
    %v1051 = vsel %vm987, 1, 0
    %v1052 = vsel %vm988, 1, 0
    %v1053 = vsel %vm989, 1, 0
    %v1054 = vsel %vm990, 1, 0
    %v1055 = vsel %vm991, 1, 0
    %v1056 = vsel %vm992, 1, 0
    %v1057 = vsel %vm993, 1, 0
    %v1058 = vsel %vm994, 1, 0
    %v1059 = vcvt.s32.f32 %v995
    %v1060 = vcvt.s32.f32 %v996
    %v1061 = vcvt.s32.f32 %v997
    %v1062 = vcvt.s32.f32 %v998
    %v1063 = vcvt.s32.f32 %v999
    %v1064 = vcvt.s32.f32 %v1000
    %v1065 = vcvt.s32.f32 %v1001
    %v1066 = vcvt.s32.f32 %v1002
    %v1067 = vcvt.s32.f32 %v1003
    %v1068 = vcvt.s32.f32 %v1004
    %v1069 = vcvt.s32.f32 %v1005
    %v1070 = vcvt.s32.f32 %v1006
    %v1071 = vcvt.s32.f32 %v1007
    %v1072 = vcvt.s32.f32 %v1008
    %v1073 = vcvt.s32.f32 %v1009
    %v1074 = vcvt.s32.f32 %v1010
    %v1075 = vcvt.s32.f32 %v1011
    %v1076 = vcvt.s32.f32 %v1012
    %v1077 = vcvt.s32.f32 %v1013
    %v1078 = vcvt.s32.f32 %v1014
    %v1079 = vcvt.s32.f32 %v1015
    %v1080 = vcvt.s32.f32 %v1016
    %v1081 = vcvt.s32.f32 %v1017
    %v1082 = vcvt.s32.f32 %v1018
    %v1083 = vcvt.s32.f32 %v1019
    %v1084 = vcvt.s32.f32 %v1020
    %v1085 = vcvt.s32.f32 %v1021
    %v1086 = vcvt.s32.f32 %v1022
    %v1087 = vcvt.s32.f32 %v1023
    %v1088 = vcvt.s32.f32 %v1024
    %v1089 = vcvt.s32.f32 %v1025
    %v1090 = vcvt.s32.f32 %v1026
    %v1091 = vcvt.s32.f32 %v1027
    %v1092 = vcvt.s32.f32 %v1028
    %v1093 = vcvt.s32.f32 %v1029
    %v1094 = vcvt.s32.f32 %v1030
    %v1095 = vcvt.s32.f32 %v1031
    %v1096 = vcvt.s32.f32 %v1032
    %v1097 = vcvt.s32.f32 %v1033
    %v1098 = vcvt.s32.f32 %v1034
    %v1099 = vcvt.s32.f32 %v1035
    %v1100 = vcvt.s32.f32 %v1036
    %v1101 = vcvt.s32.f32 %v1037
    %v1102 = vcvt.s32.f32 %v1038
    %v1103 = vcvt.s32.f32 %v1039
    %v1104 = vcvt.s32.f32 %v1040
    %v1105 = vcvt.s32.f32 %v1041
    %v1106 = vcvt.s32.f32 %v1042
    %v1107 = vcvt.s32.f32 %v1043
    %v1108 = vcvt.s32.f32 %v1044
    %v1109 = vcvt.s32.f32 %v1045
    %v1110 = vcvt.s32.f32 %v1046
    %v1111 = vcvt.s32.f32 %v1047
    %v1112 = vcvt.s32.f32 %v1048
    %v1113 = vcvt.s32.f32 %v1049
    %v1114 = vcvt.s32.f32 %v1050
    %v1115 = vcvt.s32.f32 %v1051
    %v1116 = vcvt.s32.f32 %v1052
    %v1117 = vcvt.s32.f32 %v1053
    %v1118 = vcvt.s32.f32 %v1054
    %v1119 = vcvt.s32.f32 %v1055
    %v1120 = vcvt.s32.f32 %v1056
    %v1121 = vcvt.s32.f32 %v1057
    %v1122 = vcvt.s32.f32 %v1058
    %v1123 = vld [vmem:[#allocation2] sm:$0xff]
    %v1124 = vld [vmem:[#allocation2 + $0x8] sm:$0xff]
    %vm1125 = vcmask 130048
    %v1127 = vsel %vm1125, %v1059, 0
    %v1130 = vsel %vm1125, %v1060, 0
    %v1133 = vsel %vm1125, %v1061, 0
    %v1136 = vsel %vm1125, %v1062, 0
    %v1139 = vsel %vm1125, %v1063, 0
    %v1142 = vsel %vm1125, %v1064, 0
    %v1145 = vsel %vm1125, %v1065, 0
    %v1148 = vsel %vm1125, %v1066, 0
    %v1151 = vsel %vm1125, %v1067, 0
    %v1154 = vsel %vm1125, %v1068, 0
    %v1157 = vsel %vm1125, %v1069, 0
    %v1160 = vsel %vm1125, %v1070, 0
    %v1163 = vsel %vm1125, %v1071, 0
    %v1166 = vsel %vm1125, %v1072, 0
    %v1169 = vsel %vm1125, %v1073, 0
    %v1172 = vsel %vm1125, %v1074, 0
    %v1175 = vsel %vm1125, %v1075, 0
    %v1178 = vsel %vm1125, %v1076, 0
    %v1181 = vsel %vm1125, %v1077, 0
    %v1184 = vsel %vm1125, %v1078, 0
    %v1187 = vsel %vm1125, %v1079, 0
    %v1190 = vsel %vm1125, %v1080, 0
    %v1193 = vsel %vm1125, %v1081, 0
    %v1196 = vsel %vm1125, %v1082, 0
    %v1199 = vsel %vm1125, %v1083, 0
    %v1202 = vsel %vm1125, %v1084, 0
    %v1205 = vsel %vm1125, %v1085, 0
    %v1208 = vsel %vm1125, %v1086, 0
    %v1211 = vsel %vm1125, %v1087, 0
    %v1214 = vsel %vm1125, %v1088, 0
    %v1217 = vsel %vm1125, %v1089, 0
    %v1220 = vsel %vm1125, %v1090, 0
    %v1223 = vsel %vm1125, %v1091, 0
    %v1226 = vsel %vm1125, %v1092, 0
    %v1229 = vsel %vm1125, %v1093, 0
    %v1232 = vsel %vm1125, %v1094, 0
    %v1235 = vsel %vm1125, %v1095, 0
    %v1238 = vsel %vm1125, %v1096, 0
    %v1241 = vsel %vm1125, %v1097, 0
    %v1244 = vsel %vm1125, %v1098, 0
    %v1247 = vsel %vm1125, %v1099, 0
    %v1250 = vsel %vm1125, %v1100, 0
    %v1253 = vsel %vm1125, %v1101, 0
    %v1256 = vsel %vm1125, %v1102, 0
    %v1259 = vsel %vm1125, %v1103, 0
    %v1262 = vsel %vm1125, %v1104, 0
    %v1265 = vsel %vm1125, %v1105, 0
    %v1268 = vsel %vm1125, %v1106, 0
    %v1271 = vsel %vm1125, %v1107, 0
    %v1274 = vsel %vm1125, %v1108, 0
    %v1277 = vsel %vm1125, %v1109, 0
    %v1280 = vsel %vm1125, %v1110, 0
    %v1283 = vsel %vm1125, %v1111, 0
    %v1286 = vsel %vm1125, %v1112, 0
    %v1289 = vsel %vm1125, %v1113, 0
    %v1292 = vsel %vm1125, %v1114, 0
    %v1295 = vsel %vm1125, %v1115, 0
    %v1298 = vsel %vm1125, %v1116, 0
    %v1301 = vsel %vm1125, %v1117, 0
    %v1304 = vsel %vm1125, %v1118, 0
    %v1307 = vsel %vm1125, %v1119, 0
    %v1310 = vsel %vm1125, %v1120, 0
    %v1313 = vsel %vm1125, %v1121, 0
    %v1316 = vsel %vm1125, %v1122, 0
    %1318 = vmatprep.subr.mxu0 0.0
    %1319 = vmatpush1.msra.mxu0 %v1123
    %1320 = vmatprep.subr.mxu0 0.0
    %1321 = vmatpush1.msra.mxu0 %v1124
    %1322 = vmatprep.subr.mxu0 0.0
    %1323 = vmatpush1.msra.mxu0 0.0
    %1324 = vmatprep.subr.mxu0 0.0
    %1325 = vmatpush1.msra.mxu0 0.0
    %1326 = vmatprep.subr.mxu0 0.0
    %1327 = vmatpush1.msra.mxu0 0.0
    %1328 = vmatprep.subr.mxu0 0.0
    %1329 = vmatpush1.msra.mxu0 0.0
    %1330 = vmatprep.subr.mxu0 0.0
    %1331 = vmatpush1.msra.mxu0 0.0
    %1332 = vmatprep.subr.mxu0 0.0
    %1333 = vmatpush1.msra.mxu0 0.0
    %1334 = vmatprep.subr.mxu0 0.0
    %1335 = vmatpush1.msra.mxu0 0.0
    %1336 = vmatprep.subr.mxu0 0.0
    %1337 = vmatpush1.msra.mxu0 0.0
    %1338 = vmatprep.subr.mxu0 0.0
    %1339 = vmatpush1.msra.mxu0 0.0
    %1340 = vmatprep.subr.mxu0 0.0
    %1341 = vmatpush1.msra.mxu0 0.0
    %1342 = vmatprep.subr.mxu0 0.0
    %1343 = vmatpush1.msra.mxu0 0.0
    %1344 = vmatprep.subr.mxu0 0.0
    %1345 = vmatpush1.msra.mxu0 0.0
    %1346 = vmatprep.subr.mxu0 0.0
    %1347 = vmatpush1.msra.mxu0 0.0
    %1348 = vmatprep.subr.mxu0 0.0
    %1349 = vmatpush1.msra.mxu0 0.0
    %1350 = vmatprep.subr.mxu0 0.0
    %1351 = vmatpush1.msra.mxu0 0.0
    %1352 = vmatprep.subr.mxu0 0.0
    %1353 = vmatpush1.msra.mxu0 0.0
    %1354 = vmatprep.subr.mxu0 0.0
    %1355 = vmatpush1.msra.mxu0 0.0
    %1356 = vmatprep.subr.mxu0 0.0
    %1357 = vmatpush1.msra.mxu0 0.0
    %1358 = vmatprep.subr.mxu0 0.0
    %1359 = vmatpush1.msra.mxu0 0.0
    %1360 = vmatprep.subr.mxu0 0.0
    %1361 = vmatpush1.msra.mxu0 0.0
    %1362 = vmatprep.subr.mxu0 0.0
    %1363 = vmatpush1.msra.mxu0 0.0
    %1364 = vmatprep.subr.mxu0 0.0
    %1365 = vmatpush1.msra.mxu0 0.0
    %1366 = vmatprep.subr.mxu0 0.0
    %1367 = vmatpush1.msra.mxu0 0.0
    %1368 = vmatprep.subr.mxu0 0.0
    %1369 = vmatpush1.msra.mxu0 0.0
    %1370 = vmatprep.subr.mxu0 0.0
    %1371 = vmatpush1.msra.mxu0 0.0
    %1372 = vmatprep.subr.mxu0 0.0
    %1373 = vmatpush1.msra.mxu0 0.0
    %1374 = vmatprep.subr.mxu0 0.0
    %1375 = vmatpush1.msra.mxu0 0.0
    %1376 = vmatprep.subr.mxu0 0.0
    %1377 = vmatpush1.msra.mxu0 0.0
    %1378 = vmatprep.subr.mxu0 0.0
    %1379 = vmatpush1.msra.mxu0 0.0
    %1380 = vmatprep.subr.mxu0 0.0
    %1381 = vmatpush1.msra.mxu0 0.0
    %1382 = vmatprep.mubr.f32.mxu0 0.0
    %1383 = vmatmul.mubr.f32.gmra.mrb[0].mxu0 %v1127
    %v1384 = vpop.f32.mrb[0].mxu0
    %v1385 = vadd.f32 0.0, %v1384
    %v1386 = vpop.f32.mrb[0].mxu0
    %1387 = vmatprep.mubr.f32.mxu0 0.0
    %1388 = vmatmul.mubr.f32.gmra.mrb[0].mxu0 %v1130
    %v1389 = vpop.f32.mrb[0].mxu0
    %v1390 = vadd.f32 0.0, %v1389
    %v1391 = vpop.f32.mrb[0].mxu0
    %1392 = vmatprep.mubr.f32.mxu0 0.0
    %1393 = vmatmul.mubr.f32.gmra.mrb[0].mxu0 %v1133
    %v1394 = vpop.f32.mrb[0].mxu0
    %v1395 = vadd.f32 0.0, %v1394
    %v1396 = vpop.f32.mrb[0].mxu0
    %1397 = vmatprep.mubr.f32.mxu0 0.0
    %1398 = vmatmul.mubr.f32.gmra.mrb[0].mxu0 %v1136
    %v1399 = vpop.f32.mrb[0].mxu0
    %v1400 = vadd.f32 0.0, %v1399
    %v1401 = vpop.f32.mrb[0].mxu0
    %1402 = vmatprep.mubr.f32.mxu0 0.0
    %1403 = vmatmul.mubr.f32.gmra.mrb[0].mxu0 %v1139
    %v1404 = vpop.f32.mrb[0].mxu0
    %v1405 = vadd.f32 0.0, %v1404
    %v1406 = vpop.f32.mrb[0].mxu0
    %1407 = vmatprep.mubr.f32.mxu0 0.0
    %1408 = vmatmul.mubr.f32.gmra.mrb[0].mxu0 %v1142
    %v1409 = vpop.f32.mrb[0].mxu0
    %v1410 = vadd.f32 0.0, %v1409
    %v1411 = vpop.f32.mrb[0].mxu0
    %1412 = vmatprep.mubr.f32.mxu0 0.0
    %1413 = vmatmul.mubr.f32.gmra.mrb[0].mxu0 %v1145
    %v1414 = vpop.f32.mrb[0].mxu0
    %v1415 = vadd.f32 0.0, %v1414
    %v1416 = vpop.f32.mrb[0].mxu0
    %1417 = vmatprep.mubr.f32.mxu0 0.0
    %1418 = vmatmul.mubr.f32.gmra.mrb[0].mxu0 %v1148
    %v1419 = vpop.f32.mrb[0].mxu0
    %v1420 = vadd.f32 0.0, %v1419
    %v1421 = vpop.f32.mrb[0].mxu0
    %1422 = vmatprep.mubr.f32.mxu0 0.0
    %1423 = vmatmul.mubr.f32.gmra.mrb[0].mxu0 %v1151
    %v1424 = vpop.f32.mrb[0].mxu0
    %v1425 = vadd.f32 0.0, %v1424
    %v1426 = vpop.f32.mrb[0].mxu0
    %1427 = vmatprep.mubr.f32.mxu0 0.0
    %1428 = vmatmul.mubr.f32.gmra.mrb[0].mxu0 %v1154
    %v1429 = vpop.f32.mrb[0].mxu0
    %v1430 = vadd.f32 0.0, %v1429
    %v1431 = vpop.f32.mrb[0].mxu0
    %1432 = vmatprep.mubr.f32.mxu0 0.0
    %1433 = vmatmul.mubr.f32.gmra.mrb[0].mxu0 %v1157
    %v1434 = vpop.f32.mrb[0].mxu0
    %v1435 = vadd.f32 0.0, %v1434
    %v1436 = vpop.f32.mrb[0].mxu0
    %1437 = vmatprep.mubr.f32.mxu0 0.0
    %1438 = vmatmul.mubr.f32.gmra.mrb[0].mxu0 %v1160
    %v1439 = vpop.f32.mrb[0].mxu0
    %v1440 = vadd.f32 0.0, %v1439
    %v1441 = vpop.f32.mrb[0].mxu0
    %1442 = vmatprep.mubr.f32.mxu0 0.0
    %1443 = vmatmul.mubr.f32.gmra.mrb[0].mxu0 %v1163
    %v1444 = vpop.f32.mrb[0].mxu0
    %v1445 = vadd.f32 0.0, %v1444
    %v1446 = vpop.f32.mrb[0].mxu0
    %1447 = vmatprep.mubr.f32.mxu0 0.0
    %1448 = vmatmul.mubr.f32.gmra.mrb[0].mxu0 %v1166
    %v1449 = vpop.f32.mrb[0].mxu0
    %v1450 = vadd.f32 0.0, %v1449
    %v1451 = vpop.f32.mrb[0].mxu0
    %1452 = vmatprep.mubr.f32.mxu0 0.0
    %1453 = vmatmul.mubr.f32.gmra.mrb[0].mxu0 %v1169
    %v1454 = vpop.f32.mrb[0].mxu0
    %v1455 = vadd.f32 0.0, %v1454
    %v1456 = vpop.f32.mrb[0].mxu0
    %1457 = vmatprep.mubr.f32.mxu0 0.0
    %1458 = vmatmul.mubr.f32.gmra.mrb[0].mxu0 %v1172
    %v1459 = vpop.f32.mrb[0].mxu0
    %v1460 = vadd.f32 0.0, %v1459
    %v1461 = vpop.f32.mrb[0].mxu0
    %1462 = vmatprep.mubr.f32.mxu0 0.0
    %1463 = vmatmul.mubr.f32.gmra.mrb[0].mxu0 %v1175
    %v1464 = vpop.f32.mrb[0].mxu0
    %v1465 = vadd.f32 0.0, %v1464
    %v1466 = vpop.f32.mrb[0].mxu0
    %1467 = vmatprep.mubr.f32.mxu0 0.0
    %1468 = vmatmul.mubr.f32.gmra.mrb[0].mxu0 %v1178
    %v1469 = vpop.f32.mrb[0].mxu0
    %v1470 = vadd.f32 0.0, %v1469
    %v1471 = vpop.f32.mrb[0].mxu0
    %1472 = vmatprep.mubr.f32.mxu0 0.0
    %1473 = vmatmul.mubr.f32.gmra.mrb[0].mxu0 %v1181
    %v1474 = vpop.f32.mrb[0].mxu0
    %v1475 = vadd.f32 0.0, %v1474
    %v1476 = vpop.f32.mrb[0].mxu0
    %1477 = vmatprep.mubr.f32.mxu0 0.0
    %1478 = vmatmul.mubr.f32.gmra.mrb[0].mxu0 %v1184
    %v1479 = vpop.f32.mrb[0].mxu0
    %v1480 = vadd.f32 0.0, %v1479
    %v1481 = vpop.f32.mrb[0].mxu0
    %1482 = vmatprep.mubr.f32.mxu0 0.0
    %1483 = vmatmul.mubr.f32.gmra.mrb[0].mxu0 %v1187
    %v1484 = vpop.f32.mrb[0].mxu0
    %v1485 = vadd.f32 0.0, %v1484
    %v1486 = vpop.f32.mrb[0].mxu0
    %1487 = vmatprep.mubr.f32.mxu0 0.0
    %1488 = vmatmul.mubr.f32.gmra.mrb[0].mxu0 %v1190
    %v1489 = vpop.f32.mrb[0].mxu0
    %v1490 = vadd.f32 0.0, %v1489
    %v1491 = vpop.f32.mrb[0].mxu0
    %1492 = vmatprep.mubr.f32.mxu0 0.0
    %1493 = vmatmul.mubr.f32.gmra.mrb[0].mxu0 %v1193
    %v1494 = vpop.f32.mrb[0].mxu0
    %v1495 = vadd.f32 0.0, %v1494
    %v1496 = vpop.f32.mrb[0].mxu0
    %1497 = vmatprep.mubr.f32.mxu0 0.0
    %1498 = vmatmul.mubr.f32.gmra.mrb[0].mxu0 %v1196
    %v1499 = vpop.f32.mrb[0].mxu0
    %v1500 = vadd.f32 0.0, %v1499
    %v1501 = vpop.f32.mrb[0].mxu0
    %1502 = vmatprep.mubr.f32.mxu0 0.0
    %1503 = vmatmul.mubr.f32.gmra.mrb[0].mxu0 %v1199
    %v1504 = vpop.f32.mrb[0].mxu0
    %v1505 = vadd.f32 0.0, %v1504
    %v1506 = vpop.f32.mrb[0].mxu0
    %1507 = vmatprep.mubr.f32.mxu0 0.0
    %1508 = vmatmul.mubr.f32.gmra.mrb[0].mxu0 %v1202
    %v1509 = vpop.f32.mrb[0].mxu0
    %v1510 = vadd.f32 0.0, %v1509
    %v1511 = vpop.f32.mrb[0].mxu0
    %1512 = vmatprep.mubr.f32.mxu0 0.0
    %1513 = vmatmul.mubr.f32.gmra.mrb[0].mxu0 %v1205
    %v1514 = vpop.f32.mrb[0].mxu0
    %v1515 = vadd.f32 0.0, %v1514
    %v1516 = vpop.f32.mrb[0].mxu0
    %1517 = vmatprep.mubr.f32.mxu0 0.0
    %1518 = vmatmul.mubr.f32.gmra.mrb[0].mxu0 %v1208
    %v1519 = vpop.f32.mrb[0].mxu0
    %v1520 = vadd.f32 0.0, %v1519
    %v1521 = vpop.f32.mrb[0].mxu0
    %1522 = vmatprep.mubr.f32.mxu0 0.0
    %1523 = vmatmul.mubr.f32.gmra.mrb[0].mxu0 %v1211
    %v1524 = vpop.f32.mrb[0].mxu0
    %v1525 = vadd.f32 0.0, %v1524
    %v1526 = vpop.f32.mrb[0].mxu0
    %1527 = vmatprep.mubr.f32.mxu0 0.0
    %1528 = vmatmul.mubr.f32.gmra.mrb[0].mxu0 %v1214
    %v1529 = vpop.f32.mrb[0].mxu0
    %v1530 = vadd.f32 0.0, %v1529
    %v1531 = vpop.f32.mrb[0].mxu0
    %1532 = vmatprep.mubr.f32.mxu0 0.0
    %1533 = vmatmul.mubr.f32.gmra.mrb[0].mxu0 %v1217
    %v1534 = vpop.f32.mrb[0].mxu0
    %v1535 = vadd.f32 0.0, %v1534
    %v1536 = vpop.f32.mrb[0].mxu0
    %1537 = vmatprep.mubr.f32.mxu0 0.0
    %1538 = vmatmul.mubr.f32.gmra.mrb[0].mxu0 %v1220
    %v1539 = vpop.f32.mrb[0].mxu0
    %v1540 = vadd.f32 0.0, %v1539
    %v1541 = vpop.f32.mrb[0].mxu0
    %1542 = vmatprep.mubr.f32.mxu0 0.0
    %1543 = vmatmul.mubr.f32.gmra.mrb[0].mxu0 %v1223
    %v1544 = vpop.f32.mrb[0].mxu0
    %v1545 = vadd.f32 0.0, %v1544
    %v1546 = vpop.f32.mrb[0].mxu0
    %1547 = vmatprep.mubr.f32.mxu0 0.0
    %1548 = vmatmul.mubr.f32.gmra.mrb[0].mxu0 %v1226
    %v1549 = vpop.f32.mrb[0].mxu0
    %v1550 = vadd.f32 0.0, %v1549
    %v1551 = vpop.f32.mrb[0].mxu0
    %1552 = vmatprep.mubr.f32.mxu0 0.0
    %1553 = vmatmul.mubr.f32.gmra.mrb[0].mxu0 %v1229
    %v1554 = vpop.f32.mrb[0].mxu0
    %v1555 = vadd.f32 0.0, %v1554
    %v1556 = vpop.f32.mrb[0].mxu0
    %1557 = vmatprep.mubr.f32.mxu0 0.0
    %1558 = vmatmul.mubr.f32.gmra.mrb[0].mxu0 %v1232
    %v1559 = vpop.f32.mrb[0].mxu0
    %v1560 = vadd.f32 0.0, %v1559
    %v1561 = vpop.f32.mrb[0].mxu0
    %1562 = vmatprep.mubr.f32.mxu0 0.0
    %1563 = vmatmul.mubr.f32.gmra.mrb[0].mxu0 %v1235
    %v1564 = vpop.f32.mrb[0].mxu0
    %v1565 = vadd.f32 0.0, %v1564
    %v1566 = vpop.f32.mrb[0].mxu0
    %1567 = vmatprep.mubr.f32.mxu0 0.0
    %1568 = vmatmul.mubr.f32.gmra.mrb[0].mxu0 %v1238
    %v1569 = vpop.f32.mrb[0].mxu0
    %v1570 = vadd.f32 0.0, %v1569
    %v1571 = vpop.f32.mrb[0].mxu0
    %1572 = vmatprep.mubr.f32.mxu0 0.0
    %1573 = vmatmul.mubr.f32.gmra.mrb[0].mxu0 %v1241
    %v1574 = vpop.f32.mrb[0].mxu0
    %v1575 = vadd.f32 0.0, %v1574
    %v1576 = vpop.f32.mrb[0].mxu0
    %1577 = vmatprep.mubr.f32.mxu0 0.0
    %1578 = vmatmul.mubr.f32.gmra.mrb[0].mxu0 %v1244
    %v1579 = vpop.f32.mrb[0].mxu0
    %v1580 = vadd.f32 0.0, %v1579
    %v1581 = vpop.f32.mrb[0].mxu0
    %1582 = vmatprep.mubr.f32.mxu0 0.0
    %1583 = vmatmul.mubr.f32.gmra.mrb[0].mxu0 %v1247
    %v1584 = vpop.f32.mrb[0].mxu0
    %v1585 = vadd.f32 0.0, %v1584
    %v1586 = vpop.f32.mrb[0].mxu0
    %1587 = vmatprep.mubr.f32.mxu0 0.0
    %1588 = vmatmul.mubr.f32.gmra.mrb[0].mxu0 %v1250
    %v1589 = vpop.f32.mrb[0].mxu0
    %v1590 = vadd.f32 0.0, %v1589
    %v1591 = vpop.f32.mrb[0].mxu0
    %1592 = vmatprep.mubr.f32.mxu0 0.0
    %1593 = vmatmul.mubr.f32.gmra.mrb[0].mxu0 %v1253
    %v1594 = vpop.f32.mrb[0].mxu0
    %v1595 = vadd.f32 0.0, %v1594
    %v1596 = vpop.f32.mrb[0].mxu0
    %1597 = vmatprep.mubr.f32.mxu0 0.0
    %1598 = vmatmul.mubr.f32.gmra.mrb[0].mxu0 %v1256
    %v1599 = vpop.f32.mrb[0].mxu0
    %v1600 = vadd.f32 0.0, %v1599
    %v1601 = vpop.f32.mrb[0].mxu0
    %1602 = vmatprep.mubr.f32.mxu0 0.0
    %1603 = vmatmul.mubr.f32.gmra.mrb[0].mxu0 %v1259
    %v1604 = vpop.f32.mrb[0].mxu0
    %v1605 = vadd.f32 0.0, %v1604
    %v1606 = vpop.f32.mrb[0].mxu0
    %1607 = vmatprep.mubr.f32.mxu0 0.0
    %1608 = vmatmul.mubr.f32.gmra.mrb[0].mxu0 %v1262
    %v1609 = vpop.f32.mrb[0].mxu0
    %v1610 = vadd.f32 0.0, %v1609
    %v1611 = vpop.f32.mrb[0].mxu0
    %1612 = vmatprep.mubr.f32.mxu0 0.0
    %1613 = vmatmul.mubr.f32.gmra.mrb[0].mxu0 %v1265
    %v1614 = vpop.f32.mrb[0].mxu0
    %v1615 = vadd.f32 0.0, %v1614
    %v1616 = vpop.f32.mrb[0].mxu0
    %1617 = vmatprep.mubr.f32.mxu0 0.0
    %1618 = vmatmul.mubr.f32.gmra.mrb[0].mxu0 %v1268
    %v1619 = vpop.f32.mrb[0].mxu0
    %v1620 = vadd.f32 0.0, %v1619
    %v1621 = vpop.f32.mrb[0].mxu0
    %1622 = vmatprep.mubr.f32.mxu0 0.0
    %1623 = vmatmul.mubr.f32.gmra.mrb[0].mxu0 %v1271
    %v1624 = vpop.f32.mrb[0].mxu0
    %v1625 = vadd.f32 0.0, %v1624
    %v1626 = vpop.f32.mrb[0].mxu0
    %1627 = vmatprep.mubr.f32.mxu0 0.0
    %1628 = vmatmul.mubr.f32.gmra.mrb[0].mxu0 %v1274
    %v1629 = vpop.f32.mrb[0].mxu0
    %v1630 = vadd.f32 0.0, %v1629
    %v1631 = vpop.f32.mrb[0].mxu0
    %1632 = vmatprep.mubr.f32.mxu0 0.0
    %1633 = vmatmul.mubr.f32.gmra.mrb[0].mxu0 %v1277
    %v1634 = vpop.f32.mrb[0].mxu0
    %v1635 = vadd.f32 0.0, %v1634
    %v1636 = vpop.f32.mrb[0].mxu0
    %1637 = vmatprep.mubr.f32.mxu0 0.0
    %1638 = vmatmul.mubr.f32.gmra.mrb[0].mxu0 %v1280
    %v1639 = vpop.f32.mrb[0].mxu0
    %v1640 = vadd.f32 0.0, %v1639
    %v1641 = vpop.f32.mrb[0].mxu0
    %1642 = vmatprep.mubr.f32.mxu0 0.0
    %1643 = vmatmul.mubr.f32.gmra.mrb[0].mxu0 %v1283
    %v1644 = vpop.f32.mrb[0].mxu0
    %v1645 = vadd.f32 0.0, %v1644
    %v1646 = vpop.f32.mrb[0].mxu0
    %1647 = vmatprep.mubr.f32.mxu0 0.0
    %1648 = vmatmul.mubr.f32.gmra.mrb[0].mxu0 %v1286
    %v1649 = vpop.f32.mrb[0].mxu0
    %v1650 = vadd.f32 0.0, %v1649
    %v1651 = vpop.f32.mrb[0].mxu0
    %1652 = vmatprep.mubr.f32.mxu0 0.0
    %1653 = vmatmul.mubr.f32.gmra.mrb[0].mxu0 %v1289
    %v1654 = vpop.f32.mrb[0].mxu0
    %v1655 = vadd.f32 0.0, %v1654
    %v1656 = vpop.f32.mrb[0].mxu0
    %1657 = vmatprep.mubr.f32.mxu0 0.0
    %1658 = vmatmul.mubr.f32.gmra.mrb[0].mxu0 %v1292
    %v1659 = vpop.f32.mrb[0].mxu0
    %v1660 = vadd.f32 0.0, %v1659
    %v1661 = vpop.f32.mrb[0].mxu0
    %1662 = vmatprep.mubr.f32.mxu0 0.0
    %1663 = vmatmul.mubr.f32.gmra.mrb[0].mxu0 %v1295
    %v1664 = vpop.f32.mrb[0].mxu0
    %v1665 = vadd.f32 0.0, %v1664
    %v1666 = vpop.f32.mrb[0].mxu0
    %1667 = vmatprep.mubr.f32.mxu0 0.0
    %1668 = vmatmul.mubr.f32.gmra.mrb[0].mxu0 %v1298
    %v1669 = vpop.f32.mrb[0].mxu0
    %v1670 = vadd.f32 0.0, %v1669
    %v1671 = vpop.f32.mrb[0].mxu0
    %1672 = vmatprep.mubr.f32.mxu0 0.0
    %1673 = vmatmul.mubr.f32.gmra.mrb[0].mxu0 %v1301
    %v1674 = vpop.f32.mrb[0].mxu0
    %v1675 = vadd.f32 0.0, %v1674
    %v1676 = vpop.f32.mrb[0].mxu0
    %1677 = vmatprep.mubr.f32.mxu0 0.0
    %1678 = vmatmul.mubr.f32.gmra.mrb[0].mxu0 %v1304
    %v1679 = vpop.f32.mrb[0].mxu0
    %v1680 = vadd.f32 0.0, %v1679
    %v1681 = vpop.f32.mrb[0].mxu0
    %1682 = vmatprep.mubr.f32.mxu0 0.0
    %1683 = vmatmul.mubr.f32.gmra.mrb[0].mxu0 %v1307
    %v1684 = vpop.f32.mrb[0].mxu0
    %v1685 = vadd.f32 0.0, %v1684
    %v1686 = vpop.f32.mrb[0].mxu0
    %1687 = vmatprep.mubr.f32.mxu0 0.0
    %1688 = vmatmul.mubr.f32.gmra.mrb[0].mxu0 %v1310
    %v1689 = vpop.f32.mrb[0].mxu0
    %v1690 = vadd.f32 0.0, %v1689
    %v1691 = vpop.f32.mrb[0].mxu0
    %1692 = vmatprep.mubr.f32.mxu0 0.0
    %1693 = vmatmul.mubr.f32.gmra.mrb[0].mxu0 %v1313
    %v1694 = vpop.f32.mrb[0].mxu0
    %v1695 = vadd.f32 0.0, %v1694
    %v1696 = vpop.f32.mrb[0].mxu0
    %1697 = vmatprep.mubr.f32.mxu0 0.0
    %1698 = vmatmul.mubr.f32.gmra.mrb[0].mxu0 %v1316
    %v1699 = vpop.f32.mrb[0].mxu0
    %v1700 = vadd.f32 0.0, %v1699
    %v1701 = vpop.f32.mrb[0].mxu0
    %1702 = vdwg.mxu0
    %v1703 = vld [vmem:[#allocation3] sm:$0x1]
    %v1705 = vlaneseq
    %v1706 = vshrl.u32 %v1705, 7
    %v1707 = vsub.s32 0, %v1706
    %v1708 = vrot.slane %v1703, %v1707
    %v1710 = vmul.f32 %v675, %v1708
    %v1711 = vmul.f32 %v676, %v1708
    %v1712 = vmul.f32 %v677, %v1708
    %v1713 = vmul.f32 %v678, %v1708
    %v1714 = vmul.f32 %v679, %v1708
    %v1715 = vmul.f32 %v680, %v1708
    %v1716 = vmul.f32 %v681, %v1708
    %v1717 = vmul.f32 %v682, %v1708
    %v1718 = vmul.f32 %v683, %v1708
    %v1719 = vmul.f32 %v684, %v1708
    %v1720 = vmul.f32 %v685, %v1708
    %v1721 = vmul.f32 %v686, %v1708
    %v1722 = vmul.f32 %v687, %v1708
    %v1723 = vmul.f32 %v688, %v1708
    %v1724 = vmul.f32 %v689, %v1708
    %v1725 = vmul.f32 %v690, %v1708
    %v1726 = vmul.f32 %v691, %v1708
    %v1727 = vmul.f32 %v692, %v1708
    %v1728 = vmul.f32 %v693, %v1708
    %v1729 = vmul.f32 %v694, %v1708
    %v1730 = vmul.f32 %v695, %v1708
    %v1731 = vmul.f32 %v696, %v1708
    %v1732 = vmul.f32 %v697, %v1708
    %v1733 = vmul.f32 %v698, %v1708
    %v1734 = vmul.f32 %v699, %v1708
    %v1735 = vmul.f32 %v700, %v1708
    %v1736 = vmul.f32 %v701, %v1708
    %v1737 = vmul.f32 %v702, %v1708
    %v1738 = vmul.f32 %v703, %v1708
    %v1739 = vmul.f32 %v704, %v1708
    %v1740 = vmul.f32 %v705, %v1708
    %v1741 = vmul.f32 %v706, %v1708
    %v1742 = vmul.f32 %v707, %v1708
    %v1743 = vmul.f32 %v708, %v1708
    %v1744 = vmul.f32 %v709, %v1708
    %v1745 = vmul.f32 %v710, %v1708
    %v1746 = vmul.f32 %v711, %v1708
    %v1747 = vmul.f32 %v712, %v1708
    %v1748 = vmul.f32 %v713, %v1708
    %v1749 = vmul.f32 %v714, %v1708
    %v1750 = vmul.f32 %v715, %v1708
    %v1751 = vmul.f32 %v716, %v1708
    %v1752 = vmul.f32 %v717, %v1708
    %v1753 = vmul.f32 %v718, %v1708
    %v1754 = vmul.f32 %v719, %v1708
    %v1755 = vmul.f32 %v720, %v1708
    %v1756 = vmul.f32 %v721, %v1708
    %v1757 = vmul.f32 %v722, %v1708
    %v1758 = vmul.f32 %v723, %v1708
    %v1759 = vmul.f32 %v724, %v1708
    %v1760 = vmul.f32 %v725, %v1708
    %v1761 = vmul.f32 %v726, %v1708
    %v1762 = vmul.f32 %v727, %v1708
    %v1763 = vmul.f32 %v728, %v1708
    %v1764 = vmul.f32 %v729, %v1708
    %v1765 = vmul.f32 %v730, %v1708
    %v1766 = vmul.f32 %v731, %v1708
    %v1767 = vmul.f32 %v732, %v1708
    %v1768 = vmul.f32 %v733, %v1708
    %v1769 = vmul.f32 %v734, %v1708
    %v1770 = vmul.f32 %v735, %v1708
    %v1771 = vmul.f32 %v736, %v1708
    %v1772 = vmul.f32 %v737, %v1708
    %v1773 = vmul.f32 %v738, %v1708
    %v1774 = vsel %vm1125, %v1710, 0.0
    %1775 = vadd.xlane.f32.xlu0 %v1774
    %v1776 = vpop.xlane.xlu0 %1775
    %v1777 = vsel %vm1125, %v1711, 0.0
    %1778 = vadd.xlane.f32.xlu0 %v1777
    %v1779 = vpop.xlane.xlu0 %1778
    %v1780 = vsel %vm1125, %v1712, 0.0
    %1781 = vadd.xlane.f32.xlu0 %v1780
    %v1782 = vpop.xlane.xlu0 %1781
    %v1783 = vsel %vm1125, %v1713, 0.0
    %1784 = vadd.xlane.f32.xlu0 %v1783
    %v1785 = vpop.xlane.xlu0 %1784
    %v1786 = vsel %vm1125, %v1714, 0.0
    %1787 = vadd.xlane.f32.xlu0 %v1786
    %v1788 = vpop.xlane.xlu0 %1787
    %v1789 = vsel %vm1125, %v1715, 0.0
    %1790 = vadd.xlane.f32.xlu0 %v1789
    %v1791 = vpop.xlane.xlu0 %1790
    %v1792 = vsel %vm1125, %v1716, 0.0
    %1793 = vadd.xlane.f32.xlu0 %v1792
    %v1794 = vpop.xlane.xlu0 %1793
    %v1795 = vsel %vm1125, %v1717, 0.0
    %1796 = vadd.xlane.f32.xlu0 %v1795
    %v1797 = vpop.xlane.xlu0 %1796
    %v1798 = vsel %vm1125, %v1718, 0.0
    %1799 = vadd.xlane.f32.xlu0 %v1798
    %v1800 = vpop.xlane.xlu0 %1799
    %v1801 = vsel %vm1125, %v1719, 0.0
    %1802 = vadd.xlane.f32.xlu0 %v1801
    %v1803 = vpop.xlane.xlu0 %1802
    %v1804 = vsel %vm1125, %v1720, 0.0
    %1805 = vadd.xlane.f32.xlu0 %v1804
    %v1806 = vpop.xlane.xlu0 %1805
    %v1807 = vsel %vm1125, %v1721, 0.0
    %1808 = vadd.xlane.f32.xlu0 %v1807
    %v1809 = vpop.xlane.xlu0 %1808
    %v1810 = vsel %vm1125, %v1722, 0.0
    %1811 = vadd.xlane.f32.xlu0 %v1810
    %v1812 = vpop.xlane.xlu0 %1811
    %v1813 = vsel %vm1125, %v1723, 0.0
    %1814 = vadd.xlane.f32.xlu0 %v1813
    %v1815 = vpop.xlane.xlu0 %1814
    %v1816 = vsel %vm1125, %v1724, 0.0
    %1817 = vadd.xlane.f32.xlu0 %v1816
    %v1818 = vpop.xlane.xlu0 %1817
    %v1819 = vsel %vm1125, %v1725, 0.0
    %1820 = vadd.xlane.f32.xlu0 %v1819
    %v1821 = vpop.xlane.xlu0 %1820
    %v1822 = vsel %vm1125, %v1726, 0.0
    %1823 = vadd.xlane.f32.xlu0 %v1822
    %v1824 = vpop.xlane.xlu0 %1823
    %v1825 = vsel %vm1125, %v1727, 0.0
    %1826 = vadd.xlane.f32.xlu0 %v1825
    %v1827 = vpop.xlane.xlu0 %1826
    %v1828 = vsel %vm1125, %v1728, 0.0
    %1829 = vadd.xlane.f32.xlu0 %v1828
    %v1830 = vpop.xlane.xlu0 %1829
    %v1831 = vsel %vm1125, %v1729, 0.0
    %1832 = vadd.xlane.f32.xlu0 %v1831
    %v1833 = vpop.xlane.xlu0 %1832
    %v1834 = vsel %vm1125, %v1730, 0.0
    %1835 = vadd.xlane.f32.xlu0 %v1834
    %v1836 = vpop.xlane.xlu0 %1835
    %v1837 = vsel %vm1125, %v1731, 0.0
    %1838 = vadd.xlane.f32.xlu0 %v1837
    %v1839 = vpop.xlane.xlu0 %1838
    %v1840 = vsel %vm1125, %v1732, 0.0
    %1841 = vadd.xlane.f32.xlu0 %v1840
    %v1842 = vpop.xlane.xlu0 %1841
    %v1843 = vsel %vm1125, %v1733, 0.0
    %1844 = vadd.xlane.f32.xlu0 %v1843
    %v1845 = vpop.xlane.xlu0 %1844
    %v1846 = vsel %vm1125, %v1734, 0.0
    %1847 = vadd.xlane.f32.xlu0 %v1846
    %v1848 = vpop.xlane.xlu0 %1847
    %v1849 = vsel %vm1125, %v1735, 0.0
    %1850 = vadd.xlane.f32.xlu0 %v1849
    %v1851 = vpop.xlane.xlu0 %1850
    %v1852 = vsel %vm1125, %v1736, 0.0
    %1853 = vadd.xlane.f32.xlu0 %v1852
    %v1854 = vpop.xlane.xlu0 %1853
    %v1855 = vsel %vm1125, %v1737, 0.0
    %1856 = vadd.xlane.f32.xlu0 %v1855
    %v1857 = vpop.xlane.xlu0 %1856
    %v1858 = vsel %vm1125, %v1738, 0.0
    %1859 = vadd.xlane.f32.xlu0 %v1858
    %v1860 = vpop.xlane.xlu0 %1859
    %v1861 = vsel %vm1125, %v1739, 0.0
    %1862 = vadd.xlane.f32.xlu0 %v1861
    %v1863 = vpop.xlane.xlu0 %1862
    %v1864 = vsel %vm1125, %v1740, 0.0
    %1865 = vadd.xlane.f32.xlu0 %v1864
    %v1866 = vpop.xlane.xlu0 %1865
    %v1867 = vsel %vm1125, %v1741, 0.0
    %1868 = vadd.xlane.f32.xlu0 %v1867
    %v1869 = vpop.xlane.xlu0 %1868
    %v1870 = vsel %vm1125, %v1742, 0.0
    %1871 = vadd.xlane.f32.xlu0 %v1870
    %v1872 = vpop.xlane.xlu0 %1871
    %v1873 = vsel %vm1125, %v1743, 0.0
    %1874 = vadd.xlane.f32.xlu0 %v1873
    %v1875 = vpop.xlane.xlu0 %1874
    %v1876 = vsel %vm1125, %v1744, 0.0
    %1877 = vadd.xlane.f32.xlu0 %v1876
    %v1878 = vpop.xlane.xlu0 %1877
    %v1879 = vsel %vm1125, %v1745, 0.0
    %1880 = vadd.xlane.f32.xlu0 %v1879
    %v1881 = vpop.xlane.xlu0 %1880
    %v1882 = vsel %vm1125, %v1746, 0.0
    %1883 = vadd.xlane.f32.xlu0 %v1882
    %v1884 = vpop.xlane.xlu0 %1883
    %v1885 = vsel %vm1125, %v1747, 0.0
    %1886 = vadd.xlane.f32.xlu0 %v1885
    %v1887 = vpop.xlane.xlu0 %1886
    %v1888 = vsel %vm1125, %v1748, 0.0
    %1889 = vadd.xlane.f32.xlu0 %v1888
    %v1890 = vpop.xlane.xlu0 %1889
    %v1891 = vsel %vm1125, %v1749, 0.0
    %1892 = vadd.xlane.f32.xlu0 %v1891
    %v1893 = vpop.xlane.xlu0 %1892
    %v1894 = vsel %vm1125, %v1750, 0.0
    %1895 = vadd.xlane.f32.xlu0 %v1894
    %v1896 = vpop.xlane.xlu0 %1895
    %v1897 = vsel %vm1125, %v1751, 0.0
    %1898 = vadd.xlane.f32.xlu0 %v1897
    %v1899 = vpop.xlane.xlu0 %1898
    %v1900 = vsel %vm1125, %v1752, 0.0
    %1901 = vadd.xlane.f32.xlu0 %v1900
    %v1902 = vpop.xlane.xlu0 %1901
    %v1903 = vsel %vm1125, %v1753, 0.0
    %1904 = vadd.xlane.f32.xlu0 %v1903
    %v1905 = vpop.xlane.xlu0 %1904
    %v1906 = vsel %vm1125, %v1754, 0.0
    %1907 = vadd.xlane.f32.xlu0 %v1906
    %v1908 = vpop.xlane.xlu0 %1907
    %v1909 = vsel %vm1125, %v1755, 0.0
    %1910 = vadd.xlane.f32.xlu0 %v1909
    %v1911 = vpop.xlane.xlu0 %1910
    %v1912 = vsel %vm1125, %v1756, 0.0
    %1913 = vadd.xlane.f32.xlu0 %v1912
    %v1914 = vpop.xlane.xlu0 %1913
    %v1915 = vsel %vm1125, %v1757, 0.0
    %1916 = vadd.xlane.f32.xlu0 %v1915
    %v1917 = vpop.xlane.xlu0 %1916
    %v1918 = vsel %vm1125, %v1758, 0.0
    %1919 = vadd.xlane.f32.xlu0 %v1918
    %v1920 = vpop.xlane.xlu0 %1919
    %v1921 = vsel %vm1125, %v1759, 0.0
    %1922 = vadd.xlane.f32.xlu0 %v1921
    %v1923 = vpop.xlane.xlu0 %1922
    %v1924 = vsel %vm1125, %v1760, 0.0
    %1925 = vadd.xlane.f32.xlu0 %v1924
    %v1926 = vpop.xlane.xlu0 %1925
    %v1927 = vsel %vm1125, %v1761, 0.0
    %1928 = vadd.xlane.f32.xlu0 %v1927
    %v1929 = vpop.xlane.xlu0 %1928
    %v1930 = vsel %vm1125, %v1762, 0.0
    %1931 = vadd.xlane.f32.xlu0 %v1930
    %v1932 = vpop.xlane.xlu0 %1931
    %v1933 = vsel %vm1125, %v1763, 0.0
    %1934 = vadd.xlane.f32.xlu0 %v1933
    %v1935 = vpop.xlane.xlu0 %1934
    %v1936 = vsel %vm1125, %v1764, 0.0
    %1937 = vadd.xlane.f32.xlu0 %v1936
    %v1938 = vpop.xlane.xlu0 %1937
    %v1939 = vsel %vm1125, %v1765, 0.0
    %1940 = vadd.xlane.f32.xlu0 %v1939
    %v1941 = vpop.xlane.xlu0 %1940
    %v1942 = vsel %vm1125, %v1766, 0.0
    %1943 = vadd.xlane.f32.xlu0 %v1942
    %v1944 = vpop.xlane.xlu0 %1943
    %v1945 = vsel %vm1125, %v1767, 0.0
    %1946 = vadd.xlane.f32.xlu0 %v1945
    %v1947 = vpop.xlane.xlu0 %1946
    %v1948 = vsel %vm1125, %v1768, 0.0
    %1949 = vadd.xlane.f32.xlu0 %v1948
    %v1950 = vpop.xlane.xlu0 %1949
    %v1951 = vsel %vm1125, %v1769, 0.0
    %1952 = vadd.xlane.f32.xlu0 %v1951
    %v1953 = vpop.xlane.xlu0 %1952
    %v1954 = vsel %vm1125, %v1770, 0.0
    %1955 = vadd.xlane.f32.xlu0 %v1954
    %v1956 = vpop.xlane.xlu0 %1955
    %v1957 = vsel %vm1125, %v1771, 0.0
    %1958 = vadd.xlane.f32.xlu0 %v1957
    %v1959 = vpop.xlane.xlu0 %1958
    %v1960 = vsel %vm1125, %v1772, 0.0
    %1961 = vadd.xlane.f32.xlu0 %v1960
    %v1962 = vpop.xlane.xlu0 %1961
    %v1963 = vsel %vm1125, %v1773, 0.0
    %1964 = vadd.xlane.f32.xlu0 %v1963
    %v1965 = vpop.xlane.xlu0 %1964
    %v1966 = vadd.f32 %v1776, %v1385
    %v1967 = vadd.f32 %v1779, %v1390
    %v1968 = vadd.f32 %v1782, %v1395
    %v1969 = vadd.f32 %v1785, %v1400
    %v1970 = vadd.f32 %v1788, %v1405
    %v1971 = vadd.f32 %v1791, %v1410
    %v1972 = vadd.f32 %v1794, %v1415
    %v1973 = vadd.f32 %v1797, %v1420
    %v1974 = vadd.f32 %v1800, %v1425
    %v1975 = vadd.f32 %v1803, %v1430
    %v1976 = vadd.f32 %v1806, %v1435
    %v1977 = vadd.f32 %v1809, %v1440
    %v1978 = vadd.f32 %v1812, %v1445
    %v1979 = vadd.f32 %v1815, %v1450
    %v1980 = vadd.f32 %v1818, %v1455
    %v1981 = vadd.f32 %v1821, %v1460
    %v1982 = vadd.f32 %v1824, %v1465
    %v1983 = vadd.f32 %v1827, %v1470
    %v1984 = vadd.f32 %v1830, %v1475
    %v1985 = vadd.f32 %v1833, %v1480
    %v1986 = vadd.f32 %v1836, %v1485
    %v1987 = vadd.f32 %v1839, %v1490
    %v1988 = vadd.f32 %v1842, %v1495
    %v1989 = vadd.f32 %v1845, %v1500
    %v1990 = vadd.f32 %v1848, %v1505
    %v1991 = vadd.f32 %v1851, %v1510
    %v1992 = vadd.f32 %v1854, %v1515
    %v1993 = vadd.f32 %v1857, %v1520
    %v1994 = vadd.f32 %v1860, %v1525
    %v1995 = vadd.f32 %v1863, %v1530
    %v1996 = vadd.f32 %v1866, %v1535
    %v1997 = vadd.f32 %v1869, %v1540
    %v1998 = vadd.f32 %v1872, %v1545
    %v1999 = vadd.f32 %v1875, %v1550
    %v2000 = vadd.f32 %v1878, %v1555
    %v2001 = vadd.f32 %v1881, %v1560
    %v2002 = vadd.f32 %v1884, %v1565
    %v2003 = vadd.f32 %v1887, %v1570
    %v2004 = vadd.f32 %v1890, %v1575
    %v2005 = vadd.f32 %v1893, %v1580
    %v2006 = vadd.f32 %v1896, %v1585
    %v2007 = vadd.f32 %v1899, %v1590
    %v2008 = vadd.f32 %v1902, %v1595
    %v2009 = vadd.f32 %v1905, %v1600
    %v2010 = vadd.f32 %v1908, %v1605
    %v2011 = vadd.f32 %v1911, %v1610
    %v2012 = vadd.f32 %v1914, %v1615
    %v2013 = vadd.f32 %v1917, %v1620
    %v2014 = vadd.f32 %v1920, %v1625
    %v2015 = vadd.f32 %v1923, %v1630
    %v2016 = vadd.f32 %v1926, %v1635
    %v2017 = vadd.f32 %v1929, %v1640
    %v2018 = vadd.f32 %v1932, %v1645
    %v2019 = vadd.f32 %v1935, %v1650
    %v2020 = vadd.f32 %v1938, %v1655
    %v2021 = vadd.f32 %v1941, %v1660
    %v2022 = vadd.f32 %v1944, %v1665
    %v2023 = vadd.f32 %v1947, %v1670
    %v2024 = vadd.f32 %v1950, %v1675
    %v2025 = vadd.f32 %v1953, %v1680
    %v2026 = vadd.f32 %v1956, %v1685
    %v2027 = vadd.f32 %v1959, %v1690
    %v2028 = vadd.f32 %v1962, %v1695
    %v2029 = vadd.f32 %v1965, %v1700
    %vm2030 = vcmp.gt.f32.partialorder %v1966, 0.0
    %vm2031 = vcmp.gt.f32.partialorder %v1967, 0.0
    %vm2032 = vcmp.gt.f32.partialorder %v1968, 0.0
    %vm2033 = vcmp.gt.f32.partialorder %v1969, 0.0
    %vm2034 = vcmp.gt.f32.partialorder %v1970, 0.0
    %vm2035 = vcmp.gt.f32.partialorder %v1971, 0.0
    %vm2036 = vcmp.gt.f32.partialorder %v1972, 0.0
    %vm2037 = vcmp.gt.f32.partialorder %v1973, 0.0
    %vm2038 = vcmp.gt.f32.partialorder %v1974, 0.0
    %vm2039 = vcmp.gt.f32.partialorder %v1975, 0.0
    %vm2040 = vcmp.gt.f32.partialorder %v1976, 0.0
    %vm2041 = vcmp.gt.f32.partialorder %v1977, 0.0
    %vm2042 = vcmp.gt.f32.partialorder %v1978, 0.0
    %vm2043 = vcmp.gt.f32.partialorder %v1979, 0.0
    %vm2044 = vcmp.gt.f32.partialorder %v1980, 0.0
    %vm2045 = vcmp.gt.f32.partialorder %v1981, 0.0
    %vm2046 = vcmp.gt.f32.partialorder %v1982, 0.0
    %vm2047 = vcmp.gt.f32.partialorder %v1983, 0.0
    %vm2048 = vcmp.gt.f32.partialorder %v1984, 0.0
    %vm2049 = vcmp.gt.f32.partialorder %v1985, 0.0
    %vm2050 = vcmp.gt.f32.partialorder %v1986, 0.0
    %vm2051 = vcmp.gt.f32.partialorder %v1987, 0.0
    %vm2052 = vcmp.gt.f32.partialorder %v1988, 0.0
    %vm2053 = vcmp.gt.f32.partialorder %v1989, 0.0
    %vm2054 = vcmp.gt.f32.partialorder %v1990, 0.0
    %vm2055 = vcmp.gt.f32.partialorder %v1991, 0.0
    %vm2056 = vcmp.gt.f32.partialorder %v1992, 0.0
    %vm2057 = vcmp.gt.f32.partialorder %v1993, 0.0
    %vm2058 = vcmp.gt.f32.partialorder %v1994, 0.0
    %vm2059 = vcmp.gt.f32.partialorder %v1995, 0.0
    %vm2060 = vcmp.gt.f32.partialorder %v1996, 0.0
    %vm2061 = vcmp.gt.f32.partialorder %v1997, 0.0
    %vm2062 = vcmp.gt.f32.partialorder %v1998, 0.0
    %vm2063 = vcmp.gt.f32.partialorder %v1999, 0.0
    %vm2064 = vcmp.gt.f32.partialorder %v2000, 0.0
    %vm2065 = vcmp.gt.f32.partialorder %v2001, 0.0
    %vm2066 = vcmp.gt.f32.partialorder %v2002, 0.0
    %vm2067 = vcmp.gt.f32.partialorder %v2003, 0.0
    %vm2068 = vcmp.gt.f32.partialorder %v2004, 0.0
    %vm2069 = vcmp.gt.f32.partialorder %v2005, 0.0
    %vm2070 = vcmp.gt.f32.partialorder %v2006, 0.0
    %vm2071 = vcmp.gt.f32.partialorder %v2007, 0.0
    %vm2072 = vcmp.gt.f32.partialorder %v2008, 0.0
    %vm2073 = vcmp.gt.f32.partialorder %v2009, 0.0
    %vm2074 = vcmp.gt.f32.partialorder %v2010, 0.0
    %vm2075 = vcmp.gt.f32.partialorder %v2011, 0.0
    %vm2076 = vcmp.gt.f32.partialorder %v2012, 0.0
    %vm2077 = vcmp.gt.f32.partialorder %v2013, 0.0
    %vm2078 = vcmp.gt.f32.partialorder %v2014, 0.0
    %vm2079 = vcmp.gt.f32.partialorder %v2015, 0.0
    %vm2080 = vcmp.gt.f32.partialorder %v2016, 0.0
    %vm2081 = vcmp.gt.f32.partialorder %v2017, 0.0
    %vm2082 = vcmp.gt.f32.partialorder %v2018, 0.0
    %vm2083 = vcmp.gt.f32.partialorder %v2019, 0.0
    %vm2084 = vcmp.gt.f32.partialorder %v2020, 0.0
    %vm2085 = vcmp.gt.f32.partialorder %v2021, 0.0
    %vm2086 = vcmp.gt.f32.partialorder %v2022, 0.0
    %vm2087 = vcmp.gt.f32.partialorder %v2023, 0.0
    %vm2088 = vcmp.gt.f32.partialorder %v2024, 0.0
    %vm2089 = vcmp.gt.f32.partialorder %v2025, 0.0
    %vm2090 = vcmp.gt.f32.partialorder %v2026, 0.0
    %vm2091 = vcmp.gt.f32.partialorder %v2027, 0.0
    %vm2092 = vcmp.gt.f32.partialorder %v2028, 0.0
    %vm2093 = vcmp.gt.f32.partialorder %v2029, 0.0
    %v2094 = vmul.f32 %v1966, 0.2
    %v2095 = vmul.f32 %v1967, 0.2
    %v2096 = vmul.f32 %v1968, 0.2
    %v2097 = vmul.f32 %v1969, 0.2
    %v2098 = vmul.f32 %v1970, 0.2
    %v2099 = vmul.f32 %v1971, 0.2
    %v2100 = vmul.f32 %v1972, 0.2
    %v2101 = vmul.f32 %v1973, 0.2
    %v2102 = vmul.f32 %v1974, 0.2
    %v2103 = vmul.f32 %v1975, 0.2
    %v2104 = vmul.f32 %v1976, 0.2
    %v2105 = vmul.f32 %v1977, 0.2
    %v2106 = vmul.f32 %v1978, 0.2
    %v2107 = vmul.f32 %v1979, 0.2
    %v2108 = vmul.f32 %v1980, 0.2
    %v2109 = vmul.f32 %v1981, 0.2
    %v2110 = vmul.f32 %v1982, 0.2
    %v2111 = vmul.f32 %v1983, 0.2
    %v2112 = vmul.f32 %v1984, 0.2
    %v2113 = vmul.f32 %v1985, 0.2
    %v2114 = vmul.f32 %v1986, 0.2
    %v2115 = vmul.f32 %v1987, 0.2
    %v2116 = vmul.f32 %v1988, 0.2
    %v2117 = vmul.f32 %v1989, 0.2
    %v2118 = vmul.f32 %v1990, 0.2
    %v2119 = vmul.f32 %v1991, 0.2
    %v2120 = vmul.f32 %v1992, 0.2
    %v2121 = vmul.f32 %v1993, 0.2
    %v2122 = vmul.f32 %v1994, 0.2
    %v2123 = vmul.f32 %v1995, 0.2
    %v2124 = vmul.f32 %v1996, 0.2
    %v2125 = vmul.f32 %v1997, 0.2
    %v2126 = vmul.f32 %v1998, 0.2
    %v2127 = vmul.f32 %v1999, 0.2
    %v2128 = vmul.f32 %v2000, 0.2
    %v2129 = vmul.f32 %v2001, 0.2
    %v2130 = vmul.f32 %v2002, 0.2
    %v2131 = vmul.f32 %v2003, 0.2
    %v2132 = vmul.f32 %v2004, 0.2
    %v2133 = vmul.f32 %v2005, 0.2
    %v2134 = vmul.f32 %v2006, 0.2
    %v2135 = vmul.f32 %v2007, 0.2
    %v2136 = vmul.f32 %v2008, 0.2
    %v2137 = vmul.f32 %v2009, 0.2
    %v2138 = vmul.f32 %v2010, 0.2
    %v2139 = vmul.f32 %v2011, 0.2
    %v2140 = vmul.f32 %v2012, 0.2
    %v2141 = vmul.f32 %v2013, 0.2
    %v2142 = vmul.f32 %v2014, 0.2
    %v2143 = vmul.f32 %v2015, 0.2
    %v2144 = vmul.f32 %v2016, 0.2
    %v2145 = vmul.f32 %v2017, 0.2
    %v2146 = vmul.f32 %v2018, 0.2
    %v2147 = vmul.f32 %v2019, 0.2
    %v2148 = vmul.f32 %v2020, 0.2
    %v2149 = vmul.f32 %v2021, 0.2
    %v2150 = vmul.f32 %v2022, 0.2
    %v2151 = vmul.f32 %v2023, 0.2
    %v2152 = vmul.f32 %v2024, 0.2
    %v2153 = vmul.f32 %v2025, 0.2
    %v2154 = vmul.f32 %v2026, 0.2
    %v2155 = vmul.f32 %v2027, 0.2
    %v2156 = vmul.f32 %v2028, 0.2
    %v2157 = vmul.f32 %v2029, 0.2
    %v2158 = vsel %vm2030, %v1966, %v2094
    %v2159 = vsel %vm2031, %v1967, %v2095
    %v2160 = vsel %vm2032, %v1968, %v2096
    %v2161 = vsel %vm2033, %v1969, %v2097
    %v2162 = vsel %vm2034, %v1970, %v2098
    %v2163 = vsel %vm2035, %v1971, %v2099
    %v2164 = vsel %vm2036, %v1972, %v2100
    %v2165 = vsel %vm2037, %v1973, %v2101
    %v2166 = vsel %vm2038, %v1974, %v2102
    %v2167 = vsel %vm2039, %v1975, %v2103
    %v2168 = vsel %vm2040, %v1976, %v2104
    %v2169 = vsel %vm2041, %v1977, %v2105
    %v2170 = vsel %vm2042, %v1978, %v2106
    %v2171 = vsel %vm2043, %v1979, %v2107
    %v2172 = vsel %vm2044, %v1980, %v2108
    %v2173 = vsel %vm2045, %v1981, %v2109
    %v2174 = vsel %vm2046, %v1982, %v2110
    %v2175 = vsel %vm2047, %v1983, %v2111
    %v2176 = vsel %vm2048, %v1984, %v2112
    %v2177 = vsel %vm2049, %v1985, %v2113
    %v2178 = vsel %vm2050, %v1986, %v2114
    %v2179 = vsel %vm2051, %v1987, %v2115
    %v2180 = vsel %vm2052, %v1988, %v2116
    %v2181 = vsel %vm2053, %v1989, %v2117
    %v2182 = vsel %vm2054, %v1990, %v2118
    %v2183 = vsel %vm2055, %v1991, %v2119
    %v2184 = vsel %vm2056, %v1992, %v2120
    %v2185 = vsel %vm2057, %v1993, %v2121
    %v2186 = vsel %vm2058, %v1994, %v2122
    %v2187 = vsel %vm2059, %v1995, %v2123
    %v2188 = vsel %vm2060, %v1996, %v2124
    %v2189 = vsel %vm2061, %v1997, %v2125
    %v2190 = vsel %vm2062, %v1998, %v2126
    %v2191 = vsel %vm2063, %v1999, %v2127
    %v2192 = vsel %vm2064, %v2000, %v2128
    %v2193 = vsel %vm2065, %v2001, %v2129
    %v2194 = vsel %vm2066, %v2002, %v2130
    %v2195 = vsel %vm2067, %v2003, %v2131
    %v2196 = vsel %vm2068, %v2004, %v2132
    %v2197 = vsel %vm2069, %v2005, %v2133
    %v2198 = vsel %vm2070, %v2006, %v2134
    %v2199 = vsel %vm2071, %v2007, %v2135
    %v2200 = vsel %vm2072, %v2008, %v2136
    %v2201 = vsel %vm2073, %v2009, %v2137
    %v2202 = vsel %vm2074, %v2010, %v2138
    %v2203 = vsel %vm2075, %v2011, %v2139
    %v2204 = vsel %vm2076, %v2012, %v2140
    %v2205 = vsel %vm2077, %v2013, %v2141
    %v2206 = vsel %vm2078, %v2014, %v2142
    %v2207 = vsel %vm2079, %v2015, %v2143
    %v2208 = vsel %vm2080, %v2016, %v2144
    %v2209 = vsel %vm2081, %v2017, %v2145
    %v2210 = vsel %vm2082, %v2018, %v2146
    %v2211 = vsel %vm2083, %v2019, %v2147
    %v2212 = vsel %vm2084, %v2020, %v2148
    %v2213 = vsel %vm2085, %v2021, %v2149
    %v2214 = vsel %vm2086, %v2022, %v2150
    %v2215 = vsel %vm2087, %v2023, %v2151
    %v2216 = vsel %vm2088, %v2024, %v2152
    %v2217 = vsel %vm2089, %v2025, %v2153
    %v2218 = vsel %vm2090, %v2026, %v2154
    %v2219 = vsel %vm2091, %v2027, %v2155
    %v2220 = vsel %vm2092, %v2028, %v2156
    %v2221 = vsel %vm2093, %v2029, %v2157
    %v2222 = vld [vmem:[#allocation4] sm:$0x1]
    %v2224 = vlaneseq
    %v2225 = vshrl.u32 %v2224, 7
    %v2226 = vsub.s32 0, %v2225
    %v2227 = vrot.slane %v2222, %v2226
    %v2229 = vadd.f32 %v1776, %v2227
    %v2230 = vadd.f32 %v1779, %v2227
    %v2231 = vadd.f32 %v1782, %v2227
    %v2232 = vadd.f32 %v1785, %v2227
    %v2233 = vadd.f32 %v1788, %v2227
    %v2234 = vadd.f32 %v1791, %v2227
    %v2235 = vadd.f32 %v1794, %v2227
    %v2236 = vadd.f32 %v1797, %v2227
    %v2237 = vadd.f32 %v1800, %v2227
    %v2238 = vadd.f32 %v1803, %v2227
    %v2239 = vadd.f32 %v1806, %v2227
    %v2240 = vadd.f32 %v1809, %v2227
    %v2241 = vadd.f32 %v1812, %v2227
    %v2242 = vadd.f32 %v1815, %v2227
    %v2243 = vadd.f32 %v1818, %v2227
    %v2244 = vadd.f32 %v1821, %v2227
    %v2245 = vadd.f32 %v1824, %v2227
    %v2246 = vadd.f32 %v1827, %v2227
    %v2247 = vadd.f32 %v1830, %v2227
    %v2248 = vadd.f32 %v1833, %v2227
    %v2249 = vadd.f32 %v1836, %v2227
    %v2250 = vadd.f32 %v1839, %v2227
    %v2251 = vadd.f32 %v1842, %v2227
    %v2252 = vadd.f32 %v1845, %v2227
    %v2253 = vadd.f32 %v1848, %v2227
    %v2254 = vadd.f32 %v1851, %v2227
    %v2255 = vadd.f32 %v1854, %v2227
    %v2256 = vadd.f32 %v1857, %v2227
    %v2257 = vadd.f32 %v1860, %v2227
    %v2258 = vadd.f32 %v1863, %v2227
    %v2259 = vadd.f32 %v1866, %v2227
    %v2260 = vadd.f32 %v1869, %v2227
    %v2261 = vadd.f32 %v1872, %v2227
    %v2262 = vadd.f32 %v1875, %v2227
    %v2263 = vadd.f32 %v1878, %v2227
    %v2264 = vadd.f32 %v1881, %v2227
    %v2265 = vadd.f32 %v1884, %v2227
    %v2266 = vadd.f32 %v1887, %v2227
    %v2267 = vadd.f32 %v1890, %v2227
    %v2268 = vadd.f32 %v1893, %v2227
    %v2269 = vadd.f32 %v1896, %v2227
    %v2270 = vadd.f32 %v1899, %v2227
    %v2271 = vadd.f32 %v1902, %v2227
    %v2272 = vadd.f32 %v1905, %v2227
    %v2273 = vadd.f32 %v1908, %v2227
    %v2274 = vadd.f32 %v1911, %v2227
    %v2275 = vadd.f32 %v1914, %v2227
    %v2276 = vadd.f32 %v1917, %v2227
    %v2277 = vadd.f32 %v1920, %v2227
    %v2278 = vadd.f32 %v1923, %v2227
    %v2279 = vadd.f32 %v1926, %v2227
    %v2280 = vadd.f32 %v1929, %v2227
    %v2281 = vadd.f32 %v1932, %v2227
    %v2282 = vadd.f32 %v1935, %v2227
    %v2283 = vadd.f32 %v1938, %v2227
    %v2284 = vadd.f32 %v1941, %v2227
    %v2285 = vadd.f32 %v1944, %v2227
    %v2286 = vadd.f32 %v1947, %v2227
    %v2287 = vadd.f32 %v1950, %v2227
    %v2288 = vadd.f32 %v1953, %v2227
    %v2289 = vadd.f32 %v1956, %v2227
    %v2290 = vadd.f32 %v1959, %v2227
    %v2291 = vadd.f32 %v1962, %v2227
    %v2292 = vadd.f32 %v1965, %v2227
    %vm2293 = vcmp.gt.f32.partialorder %v2229, 0.0
    %vm2294 = vcmp.gt.f32.partialorder %v2230, 0.0
    %vm2295 = vcmp.gt.f32.partialorder %v2231, 0.0
    %vm2296 = vcmp.gt.f32.partialorder %v2232, 0.0
    %vm2297 = vcmp.gt.f32.partialorder %v2233, 0.0
    %vm2298 = vcmp.gt.f32.partialorder %v2234, 0.0
    %vm2299 = vcmp.gt.f32.partialorder %v2235, 0.0
    %vm2300 = vcmp.gt.f32.partialorder %v2236, 0.0
    %vm2301 = vcmp.gt.f32.partialorder %v2237, 0.0
    %vm2302 = vcmp.gt.f32.partialorder %v2238, 0.0
    %vm2303 = vcmp.gt.f32.partialorder %v2239, 0.0
    %vm2304 = vcmp.gt.f32.partialorder %v2240, 0.0
    %vm2305 = vcmp.gt.f32.partialorder %v2241, 0.0
    %vm2306 = vcmp.gt.f32.partialorder %v2242, 0.0
    %vm2307 = vcmp.gt.f32.partialorder %v2243, 0.0
    %vm2308 = vcmp.gt.f32.partialorder %v2244, 0.0
    %vm2309 = vcmp.gt.f32.partialorder %v2245, 0.0
    %vm2310 = vcmp.gt.f32.partialorder %v2246, 0.0
    %vm2311 = vcmp.gt.f32.partialorder %v2247, 0.0
    %vm2312 = vcmp.gt.f32.partialorder %v2248, 0.0
    %vm2313 = vcmp.gt.f32.partialorder %v2249, 0.0
    %vm2314 = vcmp.gt.f32.partialorder %v2250, 0.0
    %vm2315 = vcmp.gt.f32.partialorder %v2251, 0.0
    %vm2316 = vcmp.gt.f32.partialorder %v2252, 0.0
    %vm2317 = vcmp.gt.f32.partialorder %v2253, 0.0
    %vm2318 = vcmp.gt.f32.partialorder %v2254, 0.0
    %vm2319 = vcmp.gt.f32.partialorder %v2255, 0.0
    %vm2320 = vcmp.gt.f32.partialorder %v2256, 0.0
    %vm2321 = vcmp.gt.f32.partialorder %v2257, 0.0
    %vm2322 = vcmp.gt.f32.partialorder %v2258, 0.0
    %vm2323 = vcmp.gt.f32.partialorder %v2259, 0.0
    %vm2324 = vcmp.gt.f32.partialorder %v2260, 0.0
    %vm2325 = vcmp.gt.f32.partialorder %v2261, 0.0
    %vm2326 = vcmp.gt.f32.partialorder %v2262, 0.0
    %vm2327 = vcmp.gt.f32.partialorder %v2263, 0.0
    %vm2328 = vcmp.gt.f32.partialorder %v2264, 0.0
    %vm2329 = vcmp.gt.f32.partialorder %v2265, 0.0
    %vm2330 = vcmp.gt.f32.partialorder %v2266, 0.0
    %vm2331 = vcmp.gt.f32.partialorder %v2267, 0.0
    %vm2332 = vcmp.gt.f32.partialorder %v2268, 0.0
    %vm2333 = vcmp.gt.f32.partialorder %v2269, 0.0
    %vm2334 = vcmp.gt.f32.partialorder %v2270, 0.0
    %vm2335 = vcmp.gt.f32.partialorder %v2271, 0.0
    %vm2336 = vcmp.gt.f32.partialorder %v2272, 0.0
    %vm2337 = vcmp.gt.f32.partialorder %v2273, 0.0
    %vm2338 = vcmp.gt.f32.partialorder %v2274, 0.0
    %vm2339 = vcmp.gt.f32.partialorder %v2275, 0.0
    %vm2340 = vcmp.gt.f32.partialorder %v2276, 0.0
    %vm2341 = vcmp.gt.f32.partialorder %v2277, 0.0
    %vm2342 = vcmp.gt.f32.partialorder %v2278, 0.0
    %vm2343 = vcmp.gt.f32.partialorder %v2279, 0.0
    %vm2344 = vcmp.gt.f32.partialorder %v2280, 0.0
    %vm2345 = vcmp.gt.f32.partialorder %v2281, 0.0
    %vm2346 = vcmp.gt.f32.partialorder %v2282, 0.0
    %vm2347 = vcmp.gt.f32.partialorder %v2283, 0.0
    %vm2348 = vcmp.gt.f32.partialorder %v2284, 0.0
    %vm2349 = vcmp.gt.f32.partialorder %v2285, 0.0
    %vm2350 = vcmp.gt.f32.partialorder %v2286, 0.0
    %vm2351 = vcmp.gt.f32.partialorder %v2287, 0.0
    %vm2352 = vcmp.gt.f32.partialorder %v2288, 0.0
    %vm2353 = vcmp.gt.f32.partialorder %v2289, 0.0
    %vm2354 = vcmp.gt.f32.partialorder %v2290, 0.0
    %vm2355 = vcmp.gt.f32.partialorder %v2291, 0.0
    %vm2356 = vcmp.gt.f32.partialorder %v2292, 0.0
    %v2357 = vmul.f32 %v2229, 0.2
    %v2358 = vmul.f32 %v2230, 0.2
    %v2359 = vmul.f32 %v2231, 0.2
    %v2360 = vmul.f32 %v2232, 0.2
    %v2361 = vmul.f32 %v2233, 0.2
    %v2362 = vmul.f32 %v2234, 0.2
    %v2363 = vmul.f32 %v2235, 0.2
    %v2364 = vmul.f32 %v2236, 0.2
    %v2365 = vmul.f32 %v2237, 0.2
    %v2366 = vmul.f32 %v2238, 0.2
    %v2367 = vmul.f32 %v2239, 0.2
    %v2368 = vmul.f32 %v2240, 0.2
    %v2369 = vmul.f32 %v2241, 0.2
    %v2370 = vmul.f32 %v2242, 0.2
    %v2371 = vmul.f32 %v2243, 0.2
    %v2372 = vmul.f32 %v2244, 0.2
    %v2373 = vmul.f32 %v2245, 0.2
    %v2374 = vmul.f32 %v2246, 0.2
    %v2375 = vmul.f32 %v2247, 0.2
    %v2376 = vmul.f32 %v2248, 0.2
    %v2377 = vmul.f32 %v2249, 0.2
    %v2378 = vmul.f32 %v2250, 0.2
    %v2379 = vmul.f32 %v2251, 0.2
    %v2380 = vmul.f32 %v2252, 0.2
    %v2381 = vmul.f32 %v2253, 0.2
    %v2382 = vmul.f32 %v2254, 0.2
    %v2383 = vmul.f32 %v2255, 0.2
    %v2384 = vmul.f32 %v2256, 0.2
    %v2385 = vmul.f32 %v2257, 0.2
    %v2386 = vmul.f32 %v2258, 0.2
    %v2387 = vmul.f32 %v2259, 0.2
    %v2388 = vmul.f32 %v2260, 0.2
    %v2389 = vmul.f32 %v2261, 0.2
    %v2390 = vmul.f32 %v2262, 0.2
    %v2391 = vmul.f32 %v2263, 0.2
    %v2392 = vmul.f32 %v2264, 0.2
    %v2393 = vmul.f32 %v2265, 0.2
    %v2394 = vmul.f32 %v2266, 0.2
    %v2395 = vmul.f32 %v2267, 0.2
    %v2396 = vmul.f32 %v2268, 0.2
    %v2397 = vmul.f32 %v2269, 0.2
    %v2398 = vmul.f32 %v2270, 0.2
    %v2399 = vmul.f32 %v2271, 0.2
    %v2400 = vmul.f32 %v2272, 0.2
    %v2401 = vmul.f32 %v2273, 0.2
    %v2402 = vmul.f32 %v2274, 0.2
    %v2403 = vmul.f32 %v2275, 0.2
    %v2404 = vmul.f32 %v2276, 0.2
    %v2405 = vmul.f32 %v2277, 0.2
    %v2406 = vmul.f32 %v2278, 0.2
    %v2407 = vmul.f32 %v2279, 0.2
    %v2408 = vmul.f32 %v2280, 0.2
    %v2409 = vmul.f32 %v2281, 0.2
    %v2410 = vmul.f32 %v2282, 0.2
    %v2411 = vmul.f32 %v2283, 0.2
    %v2412 = vmul.f32 %v2284, 0.2
    %v2413 = vmul.f32 %v2285, 0.2
    %v2414 = vmul.f32 %v2286, 0.2
    %v2415 = vmul.f32 %v2287, 0.2
    %v2416 = vmul.f32 %v2288, 0.2
    %v2417 = vmul.f32 %v2289, 0.2
    %v2418 = vmul.f32 %v2290, 0.2
    %v2419 = vmul.f32 %v2291, 0.2
    %v2420 = vmul.f32 %v2292, 0.2
    %v2421 = vsel %vm2293, %v2229, %v2357
    %v2422 = vsel %vm2294, %v2230, %v2358
    %v2423 = vsel %vm2295, %v2231, %v2359
    %v2424 = vsel %vm2296, %v2232, %v2360
    %v2425 = vsel %vm2297, %v2233, %v2361
    %v2426 = vsel %vm2298, %v2234, %v2362
    %v2427 = vsel %vm2299, %v2235, %v2363
    %v2428 = vsel %vm2300, %v2236, %v2364
    %v2429 = vsel %vm2301, %v2237, %v2365
    %v2430 = vsel %vm2302, %v2238, %v2366
    %v2431 = vsel %vm2303, %v2239, %v2367
    %v2432 = vsel %vm2304, %v2240, %v2368
    %v2433 = vsel %vm2305, %v2241, %v2369
    %v2434 = vsel %vm2306, %v2242, %v2370
    %v2435 = vsel %vm2307, %v2243, %v2371
    %v2436 = vsel %vm2308, %v2244, %v2372
    %v2437 = vsel %vm2309, %v2245, %v2373
    %v2438 = vsel %vm2310, %v2246, %v2374
    %v2439 = vsel %vm2311, %v2247, %v2375
    %v2440 = vsel %vm2312, %v2248, %v2376
    %v2441 = vsel %vm2313, %v2249, %v2377
    %v2442 = vsel %vm2314, %v2250, %v2378
    %v2443 = vsel %vm2315, %v2251, %v2379
    %v2444 = vsel %vm2316, %v2252, %v2380
    %v2445 = vsel %vm2317, %v2253, %v2381
    %v2446 = vsel %vm2318, %v2254, %v2382
    %v2447 = vsel %vm2319, %v2255, %v2383
    %v2448 = vsel %vm2320, %v2256, %v2384
    %v2449 = vsel %vm2321, %v2257, %v2385
    %v2450 = vsel %vm2322, %v2258, %v2386
    %v2451 = vsel %vm2323, %v2259, %v2387
    %v2452 = vsel %vm2324, %v2260, %v2388
    %v2453 = vsel %vm2325, %v2261, %v2389
    %v2454 = vsel %vm2326, %v2262, %v2390
    %v2455 = vsel %vm2327, %v2263, %v2391
    %v2456 = vsel %vm2328, %v2264, %v2392
    %v2457 = vsel %vm2329, %v2265, %v2393
    %v2458 = vsel %vm2330, %v2266, %v2394
    %v2459 = vsel %vm2331, %v2267, %v2395
    %v2460 = vsel %vm2332, %v2268, %v2396
    %v2461 = vsel %vm2333, %v2269, %v2397
    %v2462 = vsel %vm2334, %v2270, %v2398
    %v2463 = vsel %vm2335, %v2271, %v2399
    %v2464 = vsel %vm2336, %v2272, %v2400
    %v2465 = vsel %vm2337, %v2273, %v2401
    %v2466 = vsel %vm2338, %v2274, %v2402
    %v2467 = vsel %vm2339, %v2275, %v2403
    %v2468 = vsel %vm2340, %v2276, %v2404
    %v2469 = vsel %vm2341, %v2277, %v2405
    %v2470 = vsel %vm2342, %v2278, %v2406
    %v2471 = vsel %vm2343, %v2279, %v2407
    %v2472 = vsel %vm2344, %v2280, %v2408
    %v2473 = vsel %vm2345, %v2281, %v2409
    %v2474 = vsel %vm2346, %v2282, %v2410
    %v2475 = vsel %vm2347, %v2283, %v2411
    %v2476 = vsel %vm2348, %v2284, %v2412
    %v2477 = vsel %vm2349, %v2285, %v2413
    %v2478 = vsel %vm2350, %v2286, %v2414
    %v2479 = vsel %vm2351, %v2287, %v2415
    %v2480 = vsel %vm2352, %v2288, %v2416
    %v2481 = vsel %vm2353, %v2289, %v2417
    %v2482 = vsel %vm2354, %v2290, %v2418
    %v2483 = vsel %vm2355, %v2291, %v2419
    %v2484 = vsel %vm2356, %v2292, %v2420
    %2549 = vrot.lane.b32.xlu0 %v2421, 17
    %v2550 = vpop.permute.xlu0 %2549
    %2551 = vrot.lane.b32.xlu0 %v2422, 17
    %v2552 = vpop.permute.xlu0 %2551
    %2553 = vrot.lane.b32.xlu0 %v2423, 17
    %v2554 = vpop.permute.xlu0 %2553
    %2555 = vrot.lane.b32.xlu0 %v2424, 17
    %v2556 = vpop.permute.xlu0 %2555
    %2557 = vrot.lane.b32.xlu0 %v2425, 17
    %v2558 = vpop.permute.xlu0 %2557
    %2559 = vrot.lane.b32.xlu0 %v2426, 17
    %v2560 = vpop.permute.xlu0 %2559
    %2561 = vrot.lane.b32.xlu0 %v2427, 17
    %v2562 = vpop.permute.xlu0 %2561
    %2563 = vrot.lane.b32.xlu0 %v2428, 17
    %v2564 = vpop.permute.xlu0 %2563
    %2565 = vrot.lane.b32.xlu0 %v2429, 17
    %v2566 = vpop.permute.xlu0 %2565
    %2567 = vrot.lane.b32.xlu0 %v2430, 17
    %v2568 = vpop.permute.xlu0 %2567
    %2569 = vrot.lane.b32.xlu0 %v2431, 17
    %v2570 = vpop.permute.xlu0 %2569
    %2571 = vrot.lane.b32.xlu0 %v2432, 17
    %v2572 = vpop.permute.xlu0 %2571
    %2573 = vrot.lane.b32.xlu0 %v2433, 17
    %v2574 = vpop.permute.xlu0 %2573
    %2575 = vrot.lane.b32.xlu0 %v2434, 17
    %v2576 = vpop.permute.xlu0 %2575
    %2577 = vrot.lane.b32.xlu0 %v2435, 17
    %v2578 = vpop.permute.xlu0 %2577
    %2579 = vrot.lane.b32.xlu0 %v2436, 17
    %v2580 = vpop.permute.xlu0 %2579
    %2581 = vrot.lane.b32.xlu0 %v2437, 17
    %v2582 = vpop.permute.xlu0 %2581
    %2583 = vrot.lane.b32.xlu0 %v2438, 17
    %v2584 = vpop.permute.xlu0 %2583
    %2585 = vrot.lane.b32.xlu0 %v2439, 17
    %v2586 = vpop.permute.xlu0 %2585
    %2587 = vrot.lane.b32.xlu0 %v2440, 17
    %v2588 = vpop.permute.xlu0 %2587
    %2589 = vrot.lane.b32.xlu0 %v2441, 17
    %v2590 = vpop.permute.xlu0 %2589
    %2591 = vrot.lane.b32.xlu0 %v2442, 17
    %v2592 = vpop.permute.xlu0 %2591
    %2593 = vrot.lane.b32.xlu0 %v2443, 17
    %v2594 = vpop.permute.xlu0 %2593
    %2595 = vrot.lane.b32.xlu0 %v2444, 17
    %v2596 = vpop.permute.xlu0 %2595
    %2597 = vrot.lane.b32.xlu0 %v2445, 17
    %v2598 = vpop.permute.xlu0 %2597
    %2599 = vrot.lane.b32.xlu0 %v2446, 17
    %v2600 = vpop.permute.xlu0 %2599
    %2601 = vrot.lane.b32.xlu0 %v2447, 17
    %v2602 = vpop.permute.xlu0 %2601
    %2603 = vrot.lane.b32.xlu0 %v2448, 17
    %v2604 = vpop.permute.xlu0 %2603
    %2605 = vrot.lane.b32.xlu0 %v2449, 17
    %v2606 = vpop.permute.xlu0 %2605
    %2607 = vrot.lane.b32.xlu0 %v2450, 17
    %v2608 = vpop.permute.xlu0 %2607
    %2609 = vrot.lane.b32.xlu0 %v2451, 17
    %v2610 = vpop.permute.xlu0 %2609
    %2611 = vrot.lane.b32.xlu0 %v2452, 17
    %v2612 = vpop.permute.xlu0 %2611
    %2613 = vrot.lane.b32.xlu0 %v2453, 17
    %v2614 = vpop.permute.xlu0 %2613
    %2615 = vrot.lane.b32.xlu0 %v2454, 17
    %v2616 = vpop.permute.xlu0 %2615
    %2617 = vrot.lane.b32.xlu0 %v2455, 17
    %v2618 = vpop.permute.xlu0 %2617
    %2619 = vrot.lane.b32.xlu0 %v2456, 17
    %v2620 = vpop.permute.xlu0 %2619
    %2621 = vrot.lane.b32.xlu0 %v2457, 17
    %v2622 = vpop.permute.xlu0 %2621
    %2623 = vrot.lane.b32.xlu0 %v2458, 17
    %v2624 = vpop.permute.xlu0 %2623
    %2625 = vrot.lane.b32.xlu0 %v2459, 17
    %v2626 = vpop.permute.xlu0 %2625
    %2627 = vrot.lane.b32.xlu0 %v2460, 17
    %v2628 = vpop.permute.xlu0 %2627
    %2629 = vrot.lane.b32.xlu0 %v2461, 17
    %v2630 = vpop.permute.xlu0 %2629
    %2631 = vrot.lane.b32.xlu0 %v2462, 17
    %v2632 = vpop.permute.xlu0 %2631
    %2633 = vrot.lane.b32.xlu0 %v2463, 17
    %v2634 = vpop.permute.xlu0 %2633
    %2635 = vrot.lane.b32.xlu0 %v2464, 17
    %v2636 = vpop.permute.xlu0 %2635
    %2637 = vrot.lane.b32.xlu0 %v2465, 17
    %v2638 = vpop.permute.xlu0 %2637
    %2639 = vrot.lane.b32.xlu0 %v2466, 17
    %v2640 = vpop.permute.xlu0 %2639
    %2641 = vrot.lane.b32.xlu0 %v2467, 17
    %v2642 = vpop.permute.xlu0 %2641
    %2643 = vrot.lane.b32.xlu0 %v2468, 17
    %v2644 = vpop.permute.xlu0 %2643
    %2645 = vrot.lane.b32.xlu0 %v2469, 17
    %v2646 = vpop.permute.xlu0 %2645
    %2647 = vrot.lane.b32.xlu0 %v2470, 17
    %v2648 = vpop.permute.xlu0 %2647
    %2649 = vrot.lane.b32.xlu0 %v2471, 17
    %v2650 = vpop.permute.xlu0 %2649
    %2651 = vrot.lane.b32.xlu0 %v2472, 17
    %v2652 = vpop.permute.xlu0 %2651
    %2653 = vrot.lane.b32.xlu0 %v2473, 17
    %v2654 = vpop.permute.xlu0 %2653
    %2655 = vrot.lane.b32.xlu0 %v2474, 17
    %v2656 = vpop.permute.xlu0 %2655
    %2657 = vrot.lane.b32.xlu0 %v2475, 17
    %v2658 = vpop.permute.xlu0 %2657
    %2659 = vrot.lane.b32.xlu0 %v2476, 17
    %v2660 = vpop.permute.xlu0 %2659
    %2661 = vrot.lane.b32.xlu0 %v2477, 17
    %v2662 = vpop.permute.xlu0 %2661
    %2663 = vrot.lane.b32.xlu0 %v2478, 17
    %v2664 = vpop.permute.xlu0 %2663
    %2665 = vrot.lane.b32.xlu0 %v2479, 17
    %v2666 = vpop.permute.xlu0 %2665
    %2667 = vrot.lane.b32.xlu0 %v2480, 17
    %v2668 = vpop.permute.xlu0 %2667
    %2669 = vrot.lane.b32.xlu0 %v2481, 17
    %v2670 = vpop.permute.xlu0 %2669
    %2671 = vrot.lane.b32.xlu0 %v2482, 17
    %v2672 = vpop.permute.xlu0 %2671
    %2673 = vrot.lane.b32.xlu0 %v2483, 17
    %v2674 = vpop.permute.xlu0 %2673
    %2675 = vrot.lane.b32.xlu0 %v2484, 17
    %v2676 = vpop.permute.xlu0 %2675
    %v2741 = vsub.f32 %v2158, %v2550
    %v2742 = vsub.f32 %v2159, %v2552
    %v2743 = vsub.f32 %v2160, %v2554
    %v2744 = vsub.f32 %v2161, %v2556
    %v2745 = vsub.f32 %v2162, %v2558
    %v2746 = vsub.f32 %v2163, %v2560
    %v2747 = vsub.f32 %v2164, %v2562
    %v2748 = vsub.f32 %v2165, %v2564
    %v2749 = vsub.f32 %v2166, %v2566
    %v2750 = vsub.f32 %v2167, %v2568
    %v2751 = vsub.f32 %v2168, %v2570
    %v2752 = vsub.f32 %v2169, %v2572
    %v2753 = vsub.f32 %v2170, %v2574
    %v2754 = vsub.f32 %v2171, %v2576
    %v2755 = vsub.f32 %v2172, %v2578
    %v2756 = vsub.f32 %v2173, %v2580
    %v2757 = vsub.f32 %v2174, %v2582
    %v2758 = vsub.f32 %v2175, %v2584
    %v2759 = vsub.f32 %v2176, %v2586
    %v2760 = vsub.f32 %v2177, %v2588
    %v2761 = vsub.f32 %v2178, %v2590
    %v2762 = vsub.f32 %v2179, %v2592
    %v2763 = vsub.f32 %v2180, %v2594
    %v2764 = vsub.f32 %v2181, %v2596
    %v2765 = vsub.f32 %v2182, %v2598
    %v2766 = vsub.f32 %v2183, %v2600
    %v2767 = vsub.f32 %v2184, %v2602
    %v2768 = vsub.f32 %v2185, %v2604
    %v2769 = vsub.f32 %v2186, %v2606
    %v2770 = vsub.f32 %v2187, %v2608
    %v2771 = vsub.f32 %v2188, %v2610
    %v2772 = vsub.f32 %v2189, %v2612
    %v2773 = vsub.f32 %v2190, %v2614
    %v2774 = vsub.f32 %v2191, %v2616
    %v2775 = vsub.f32 %v2192, %v2618
    %v2776 = vsub.f32 %v2193, %v2620
    %v2777 = vsub.f32 %v2194, %v2622
    %v2778 = vsub.f32 %v2195, %v2624
    %v2779 = vsub.f32 %v2196, %v2626
    %v2780 = vsub.f32 %v2197, %v2628
    %v2781 = vsub.f32 %v2198, %v2630
    %v2782 = vsub.f32 %v2199, %v2632
    %v2783 = vsub.f32 %v2200, %v2634
    %v2784 = vsub.f32 %v2201, %v2636
    %v2785 = vsub.f32 %v2202, %v2638
    %v2786 = vsub.f32 %v2203, %v2640
    %v2787 = vsub.f32 %v2204, %v2642
    %v2788 = vsub.f32 %v2205, %v2644
    %v2789 = vsub.f32 %v2206, %v2646
    %v2790 = vsub.f32 %v2207, %v2648
    %v2791 = vsub.f32 %v2208, %v2650
    %v2792 = vsub.f32 %v2209, %v2652
    %v2793 = vsub.f32 %v2210, %v2654
    %v2794 = vsub.f32 %v2211, %v2656
    %v2795 = vsub.f32 %v2212, %v2658
    %v2796 = vsub.f32 %v2213, %v2660
    %v2797 = vsub.f32 %v2214, %v2662
    %v2798 = vsub.f32 %v2215, %v2664
    %v2799 = vsub.f32 %v2216, %v2666
    %v2800 = vsub.f32 %v2217, %v2668
    %v2801 = vsub.f32 %v2218, %v2670
    %v2802 = vsub.f32 %v2219, %v2672
    %v2803 = vsub.f32 %v2220, %v2674
    %v2804 = vsub.f32 %v2221, %v2676
    %v2805 = vmin.f32 %v2741, 0.0
    %v2806 = vmin.f32 %v2742, 0.0
    %v2807 = vmin.f32 %v2743, 0.0
    %v2808 = vmin.f32 %v2744, 0.0
    %v2809 = vmin.f32 %v2745, 0.0
    %v2810 = vmin.f32 %v2746, 0.0
    %v2811 = vmin.f32 %v2747, 0.0
    %v2812 = vmin.f32 %v2748, 0.0
    %v2813 = vmin.f32 %v2749, 0.0
    %v2814 = vmin.f32 %v2750, 0.0
    %v2815 = vmin.f32 %v2751, 0.0
    %v2816 = vmin.f32 %v2752, 0.0
    %v2817 = vmin.f32 %v2753, 0.0
    %v2818 = vmin.f32 %v2754, 0.0
    %v2819 = vmin.f32 %v2755, 0.0
    %v2820 = vmin.f32 %v2756, 0.0
    %v2821 = vmin.f32 %v2757, 0.0
    %v2822 = vmin.f32 %v2758, 0.0
    %v2823 = vmin.f32 %v2759, 0.0
    %v2824 = vmin.f32 %v2760, 0.0
    %v2825 = vmin.f32 %v2761, 0.0
    %v2826 = vmin.f32 %v2762, 0.0
    %v2827 = vmin.f32 %v2763, 0.0
    %v2828 = vmin.f32 %v2764, 0.0
    %v2829 = vmin.f32 %v2765, 0.0
    %v2830 = vmin.f32 %v2766, 0.0
    %v2831 = vmin.f32 %v2767, 0.0
    %v2832 = vmin.f32 %v2768, 0.0
    %v2833 = vmin.f32 %v2769, 0.0
    %v2834 = vmin.f32 %v2770, 0.0
    %v2835 = vmin.f32 %v2771, 0.0
    %v2836 = vmin.f32 %v2772, 0.0
    %v2837 = vmin.f32 %v2773, 0.0
    %v2838 = vmin.f32 %v2774, 0.0
    %v2839 = vmin.f32 %v2775, 0.0
    %v2840 = vmin.f32 %v2776, 0.0
    %v2841 = vmin.f32 %v2777, 0.0
    %v2842 = vmin.f32 %v2778, 0.0
    %v2843 = vmin.f32 %v2779, 0.0
    %v2844 = vmin.f32 %v2780, 0.0
    %v2845 = vmin.f32 %v2781, 0.0
    %v2846 = vmin.f32 %v2782, 0.0
    %v2847 = vmin.f32 %v2783, 0.0
    %v2848 = vmin.f32 %v2784, 0.0
    %v2849 = vmin.f32 %v2785, 0.0
    %v2850 = vmin.f32 %v2786, 0.0
    %v2851 = vmin.f32 %v2787, 0.0
    %v2852 = vmin.f32 %v2788, 0.0
    %v2853 = vmin.f32 %v2789, 0.0
    %v2854 = vmin.f32 %v2790, 0.0
    %v2855 = vmin.f32 %v2791, 0.0
    %v2856 = vmin.f32 %v2792, 0.0
    %v2857 = vmin.f32 %v2793, 0.0
    %v2858 = vmin.f32 %v2794, 0.0
    %v2859 = vmin.f32 %v2795, 0.0
    %v2860 = vmin.f32 %v2796, 0.0
    %v2861 = vmin.f32 %v2797, 0.0
    %v2862 = vmin.f32 %v2798, 0.0
    %v2863 = vmin.f32 %v2799, 0.0
    %v2864 = vmin.f32 %v2800, 0.0
    %v2865 = vmin.f32 %v2801, 0.0
    %v2866 = vmin.f32 %v2802, 0.0
    %v2867 = vmin.f32 %v2803, 0.0
    %v2868 = vmin.f32 %v2804, 0.0
    %v2869 = vmul.f32 %v2805, 1.442695
    %v2870 = vpow.pop %v2869
    %v2871 = vmul.f32 %v2806, 1.442695
    %v2872 = vpow.pop %v2871
    %v2873 = vmul.f32 %v2807, 1.442695
    %v2874 = vpow.pop %v2873
    %v2875 = vmul.f32 %v2808, 1.442695
    %v2876 = vpow.pop %v2875
    %v2877 = vmul.f32 %v2809, 1.442695
    %v2878 = vpow.pop %v2877
    %v2879 = vmul.f32 %v2810, 1.442695
    %v2880 = vpow.pop %v2879
    %v2881 = vmul.f32 %v2811, 1.442695
    %v2882 = vpow.pop %v2881
    %v2883 = vmul.f32 %v2812, 1.442695
    %v2884 = vpow.pop %v2883
    %v2885 = vmul.f32 %v2813, 1.442695
    %v2886 = vpow.pop %v2885
    %v2887 = vmul.f32 %v2814, 1.442695
    %v2888 = vpow.pop %v2887
    %v2889 = vmul.f32 %v2815, 1.442695
    %v2890 = vpow.pop %v2889
    %v2891 = vmul.f32 %v2816, 1.442695
    %v2892 = vpow.pop %v2891
    %v2893 = vmul.f32 %v2817, 1.442695
    %v2894 = vpow.pop %v2893
    %v2895 = vmul.f32 %v2818, 1.442695
    %v2896 = vpow.pop %v2895
    %v2897 = vmul.f32 %v2819, 1.442695
    %v2898 = vpow.pop %v2897
    %v2899 = vmul.f32 %v2820, 1.442695
    %v2900 = vpow.pop %v2899
    %v2901 = vmul.f32 %v2821, 1.442695
    %v2902 = vpow.pop %v2901
    %v2903 = vmul.f32 %v2822, 1.442695
    %v2904 = vpow.pop %v2903
    %v2905 = vmul.f32 %v2823, 1.442695
    %v2906 = vpow.pop %v2905
    %v2907 = vmul.f32 %v2824, 1.442695
    %v2908 = vpow.pop %v2907
    %v2909 = vmul.f32 %v2825, 1.442695
    %v2910 = vpow.pop %v2909
    %v2911 = vmul.f32 %v2826, 1.442695
    %v2912 = vpow.pop %v2911
    %v2913 = vmul.f32 %v2827, 1.442695
    %v2914 = vpow.pop %v2913
    %v2915 = vmul.f32 %v2828, 1.442695
    %v2916 = vpow.pop %v2915
    %v2917 = vmul.f32 %v2829, 1.442695
    %v2918 = vpow.pop %v2917
    %v2919 = vmul.f32 %v2830, 1.442695
    %v2920 = vpow.pop %v2919
    %v2921 = vmul.f32 %v2831, 1.442695
    %v2922 = vpow.pop %v2921
    %v2923 = vmul.f32 %v2832, 1.442695
    %v2924 = vpow.pop %v2923
    %v2925 = vmul.f32 %v2833, 1.442695
    %v2926 = vpow.pop %v2925
    %v2927 = vmul.f32 %v2834, 1.442695
    %v2928 = vpow.pop %v2927
    %v2929 = vmul.f32 %v2835, 1.442695
    %v2930 = vpow.pop %v2929
    %v2931 = vmul.f32 %v2836, 1.442695
    %v2932 = vpow.pop %v2931
    %v2933 = vmul.f32 %v2837, 1.442695
    %v2934 = vpow.pop %v2933
    %v2935 = vmul.f32 %v2838, 1.442695
    %v2936 = vpow.pop %v2935
    %v2937 = vmul.f32 %v2839, 1.442695
    %v2938 = vpow.pop %v2937
    %v2939 = vmul.f32 %v2840, 1.442695
    %v2940 = vpow.pop %v2939
    %v2941 = vmul.f32 %v2841, 1.442695
    %v2942 = vpow.pop %v2941
    %v2943 = vmul.f32 %v2842, 1.442695
    %v2944 = vpow.pop %v2943
    %v2945 = vmul.f32 %v2843, 1.442695
    %v2946 = vpow.pop %v2945
    %v2947 = vmul.f32 %v2844, 1.442695
    %v2948 = vpow.pop %v2947
    %v2949 = vmul.f32 %v2845, 1.442695
    %v2950 = vpow.pop %v2949
    %v2951 = vmul.f32 %v2846, 1.442695
    %v2952 = vpow.pop %v2951
    %v2953 = vmul.f32 %v2847, 1.442695
    %v2954 = vpow.pop %v2953
    %v2955 = vmul.f32 %v2848, 1.442695
    %v2956 = vpow.pop %v2955
    %v2957 = vmul.f32 %v2849, 1.442695
    %v2958 = vpow.pop %v2957
    %v2959 = vmul.f32 %v2850, 1.442695
    %v2960 = vpow.pop %v2959
    %v2961 = vmul.f32 %v2851, 1.442695
    %v2962 = vpow.pop %v2961
    %v2963 = vmul.f32 %v2852, 1.442695
    %v2964 = vpow.pop %v2963
    %v2965 = vmul.f32 %v2853, 1.442695
    %v2966 = vpow.pop %v2965
    %v2967 = vmul.f32 %v2854, 1.442695
    %v2968 = vpow.pop %v2967
    %v2969 = vmul.f32 %v2855, 1.442695
    %v2970 = vpow.pop %v2969
    %v2971 = vmul.f32 %v2856, 1.442695
    %v2972 = vpow.pop %v2971
    %v2973 = vmul.f32 %v2857, 1.442695
    %v2974 = vpow.pop %v2973
    %v2975 = vmul.f32 %v2858, 1.442695
    %v2976 = vpow.pop %v2975
    %v2977 = vmul.f32 %v2859, 1.442695
    %v2978 = vpow.pop %v2977
    %v2979 = vmul.f32 %v2860, 1.442695
    %v2980 = vpow.pop %v2979
    %v2981 = vmul.f32 %v2861, 1.442695
    %v2982 = vpow.pop %v2981
    %v2983 = vmul.f32 %v2862, 1.442695
    %v2984 = vpow.pop %v2983
    %v2985 = vmul.f32 %v2863, 1.442695
    %v2986 = vpow.pop %v2985
    %v2987 = vmul.f32 %v2864, 1.442695
    %v2988 = vpow.pop %v2987
    %v2989 = vmul.f32 %v2865, 1.442695
    %v2990 = vpow.pop %v2989
    %v2991 = vmul.f32 %v2866, 1.442695
    %v2992 = vpow.pop %v2991
    %v2993 = vmul.f32 %v2867, 1.442695
    %v2994 = vpow.pop %v2993
    %v2995 = vmul.f32 %v2868, 1.442695
    %v2996 = vpow.pop %v2995
    %2998 = vset.pattern.permute.xlu0 17
    %2999 = vperm.xlu0 %2998, %v2870
    %v3000 = vpop.permute.xlu0 %2999
    %3003 = vset.pattern.permute.xlu0 17
    %3004 = vperm.xlu0 %3003, %v2872
    %v3005 = vpop.permute.xlu0 %3004
    %3008 = vset.pattern.permute.xlu0 17
    %3009 = vperm.xlu0 %3008, %v2874
    %v3010 = vpop.permute.xlu0 %3009
    %3013 = vset.pattern.permute.xlu0 17
    %3014 = vperm.xlu0 %3013, %v2876
    %v3015 = vpop.permute.xlu0 %3014
    %3018 = vset.pattern.permute.xlu0 17
    %3019 = vperm.xlu0 %3018, %v2878
    %v3020 = vpop.permute.xlu0 %3019
    %3023 = vset.pattern.permute.xlu0 17
    %3024 = vperm.xlu0 %3023, %v2880
    %v3025 = vpop.permute.xlu0 %3024
    %3028 = vset.pattern.permute.xlu0 17
    %3029 = vperm.xlu0 %3028, %v2882
    %v3030 = vpop.permute.xlu0 %3029
    %3033 = vset.pattern.permute.xlu0 17
    %3034 = vperm.xlu0 %3033, %v2884
    %v3035 = vpop.permute.xlu0 %3034
    %3038 = vset.pattern.permute.xlu0 17
    %3039 = vperm.xlu0 %3038, %v2886
    %v3040 = vpop.permute.xlu0 %3039
    %3043 = vset.pattern.permute.xlu0 17
    %3044 = vperm.xlu0 %3043, %v2888
    %v3045 = vpop.permute.xlu0 %3044
    %3048 = vset.pattern.permute.xlu0 17
    %3049 = vperm.xlu0 %3048, %v2890
    %v3050 = vpop.permute.xlu0 %3049
    %3053 = vset.pattern.permute.xlu0 17
    %3054 = vperm.xlu0 %3053, %v2892
    %v3055 = vpop.permute.xlu0 %3054
    %3058 = vset.pattern.permute.xlu0 17
    %3059 = vperm.xlu0 %3058, %v2894
    %v3060 = vpop.permute.xlu0 %3059
    %3063 = vset.pattern.permute.xlu0 17
    %3064 = vperm.xlu0 %3063, %v2896
    %v3065 = vpop.permute.xlu0 %3064
    %3068 = vset.pattern.permute.xlu0 17
    %3069 = vperm.xlu0 %3068, %v2898
    %v3070 = vpop.permute.xlu0 %3069
    %3073 = vset.pattern.permute.xlu0 17
    %3074 = vperm.xlu0 %3073, %v2900
    %v3075 = vpop.permute.xlu0 %3074
    %3078 = vset.pattern.permute.xlu0 17
    %3079 = vperm.xlu0 %3078, %v2902
    %v3080 = vpop.permute.xlu0 %3079
    %3083 = vset.pattern.permute.xlu0 17
    %3084 = vperm.xlu0 %3083, %v2904
    %v3085 = vpop.permute.xlu0 %3084
    %3088 = vset.pattern.permute.xlu0 17
    %3089 = vperm.xlu0 %3088, %v2906
    %v3090 = vpop.permute.xlu0 %3089
    %3093 = vset.pattern.permute.xlu0 17
    %3094 = vperm.xlu0 %3093, %v2908
    %v3095 = vpop.permute.xlu0 %3094
    %3098 = vset.pattern.permute.xlu0 17
    %3099 = vperm.xlu0 %3098, %v2910
    %v3100 = vpop.permute.xlu0 %3099
    %3103 = vset.pattern.permute.xlu0 17
    %3104 = vperm.xlu0 %3103, %v2912
    %v3105 = vpop.permute.xlu0 %3104
    %3108 = vset.pattern.permute.xlu0 17
    %3109 = vperm.xlu0 %3108, %v2914
    %v3110 = vpop.permute.xlu0 %3109
    %3113 = vset.pattern.permute.xlu0 17
    %3114 = vperm.xlu0 %3113, %v2916
    %v3115 = vpop.permute.xlu0 %3114
    %3118 = vset.pattern.permute.xlu0 17
    %3119 = vperm.xlu0 %3118, %v2918
    %v3120 = vpop.permute.xlu0 %3119
    %3123 = vset.pattern.permute.xlu0 17
    %3124 = vperm.xlu0 %3123, %v2920
    %v3125 = vpop.permute.xlu0 %3124
    %3128 = vset.pattern.permute.xlu0 17
    %3129 = vperm.xlu0 %3128, %v2922
    %v3130 = vpop.permute.xlu0 %3129
    %3133 = vset.pattern.permute.xlu0 17
    %3134 = vperm.xlu0 %3133, %v2924
    %v3135 = vpop.permute.xlu0 %3134
    %3138 = vset.pattern.permute.xlu0 17
    %3139 = vperm.xlu0 %3138, %v2926
    %v3140 = vpop.permute.xlu0 %3139
    %3143 = vset.pattern.permute.xlu0 17
    %3144 = vperm.xlu0 %3143, %v2928
    %v3145 = vpop.permute.xlu0 %3144
    %3148 = vset.pattern.permute.xlu0 17
    %3149 = vperm.xlu0 %3148, %v2930
    %v3150 = vpop.permute.xlu0 %3149
    %3153 = vset.pattern.permute.xlu0 17
    %3154 = vperm.xlu0 %3153, %v2932
    %v3155 = vpop.permute.xlu0 %3154
    %3158 = vset.pattern.permute.xlu0 17
    %3159 = vperm.xlu0 %3158, %v2934
    %v3160 = vpop.permute.xlu0 %3159
    %3163 = vset.pattern.permute.xlu0 17
    %3164 = vperm.xlu0 %3163, %v2936
    %v3165 = vpop.permute.xlu0 %3164
    %3168 = vset.pattern.permute.xlu0 17
    %3169 = vperm.xlu0 %3168, %v2938
    %v3170 = vpop.permute.xlu0 %3169
    %3173 = vset.pattern.permute.xlu0 17
    %3174 = vperm.xlu0 %3173, %v2940
    %v3175 = vpop.permute.xlu0 %3174
    %3178 = vset.pattern.permute.xlu0 17
    %3179 = vperm.xlu0 %3178, %v2942
    %v3180 = vpop.permute.xlu0 %3179
    %3183 = vset.pattern.permute.xlu0 17
    %3184 = vperm.xlu0 %3183, %v2944
    %v3185 = vpop.permute.xlu0 %3184
    %3188 = vset.pattern.permute.xlu0 17
    %3189 = vperm.xlu0 %3188, %v2946
    %v3190 = vpop.permute.xlu0 %3189
    %3193 = vset.pattern.permute.xlu0 17
    %3194 = vperm.xlu0 %3193, %v2948
    %v3195 = vpop.permute.xlu0 %3194
    %3198 = vset.pattern.permute.xlu0 17
    %3199 = vperm.xlu0 %3198, %v2950
    %v3200 = vpop.permute.xlu0 %3199
    %3203 = vset.pattern.permute.xlu0 17
    %3204 = vperm.xlu0 %3203, %v2952
    %v3205 = vpop.permute.xlu0 %3204
    %3208 = vset.pattern.permute.xlu0 17
    %3209 = vperm.xlu0 %3208, %v2954
    %v3210 = vpop.permute.xlu0 %3209
    %3213 = vset.pattern.permute.xlu0 17
    %3214 = vperm.xlu0 %3213, %v2956
    %v3215 = vpop.permute.xlu0 %3214
    %3218 = vset.pattern.permute.xlu0 17
    %3219 = vperm.xlu0 %3218, %v2958
    %v3220 = vpop.permute.xlu0 %3219
    %3223 = vset.pattern.permute.xlu0 17
    %3224 = vperm.xlu0 %3223, %v2960
    %v3225 = vpop.permute.xlu0 %3224
    %3228 = vset.pattern.permute.xlu0 17
    %3229 = vperm.xlu0 %3228, %v2962
    %v3230 = vpop.permute.xlu0 %3229
    %3233 = vset.pattern.permute.xlu0 17
    %3234 = vperm.xlu0 %3233, %v2964
    %v3235 = vpop.permute.xlu0 %3234
    %3238 = vset.pattern.permute.xlu0 17
    %3239 = vperm.xlu0 %3238, %v2966
    %v3240 = vpop.permute.xlu0 %3239
    %3243 = vset.pattern.permute.xlu0 17
    %3244 = vperm.xlu0 %3243, %v2968
    %v3245 = vpop.permute.xlu0 %3244
    %3248 = vset.pattern.permute.xlu0 17
    %3249 = vperm.xlu0 %3248, %v2970
    %v3250 = vpop.permute.xlu0 %3249
    %3253 = vset.pattern.permute.xlu0 17
    %3254 = vperm.xlu0 %3253, %v2972
    %v3255 = vpop.permute.xlu0 %3254
    %3258 = vset.pattern.permute.xlu0 17
    %3259 = vperm.xlu0 %3258, %v2974
    %v3260 = vpop.permute.xlu0 %3259
    %3263 = vset.pattern.permute.xlu0 17
    %3264 = vperm.xlu0 %3263, %v2976
    %v3265 = vpop.permute.xlu0 %3264
    %3268 = vset.pattern.permute.xlu0 17
    %3269 = vperm.xlu0 %3268, %v2978
    %v3270 = vpop.permute.xlu0 %3269
    %3273 = vset.pattern.permute.xlu0 17
    %3274 = vperm.xlu0 %3273, %v2980
    %v3275 = vpop.permute.xlu0 %3274
    %3278 = vset.pattern.permute.xlu0 17
    %3279 = vperm.xlu0 %3278, %v2982
    %v3280 = vpop.permute.xlu0 %3279
    %3283 = vset.pattern.permute.xlu0 17
    %3284 = vperm.xlu0 %3283, %v2984
    %v3285 = vpop.permute.xlu0 %3284
    %3288 = vset.pattern.permute.xlu0 17
    %3289 = vperm.xlu0 %3288, %v2986
    %v3290 = vpop.permute.xlu0 %3289
    %3293 = vset.pattern.permute.xlu0 17
    %3294 = vperm.xlu0 %3293, %v2988
    %v3295 = vpop.permute.xlu0 %3294
    %3298 = vset.pattern.permute.xlu0 17
    %3299 = vperm.xlu0 %3298, %v2990
    %v3300 = vpop.permute.xlu0 %3299
    %3303 = vset.pattern.permute.xlu0 17
    %3304 = vperm.xlu0 %3303, %v2992
    %v3305 = vpop.permute.xlu0 %3304
    %3308 = vset.pattern.permute.xlu0 17
    %3309 = vperm.xlu0 %3308, %v2994
    %v3310 = vpop.permute.xlu0 %3309
    %3313 = vset.pattern.permute.xlu0 17
    %3314 = vperm.xlu0 %3313, %v2996
    %v3315 = vpop.permute.xlu0 %3314
    %v3317 = vmul.f32 %v3000, %v1385
    %v3318 = vmul.f32 %v3005, %v1390
    %v3319 = vmul.f32 %v3010, %v1395
    %v3320 = vmul.f32 %v3015, %v1400
    %v3321 = vmul.f32 %v3020, %v1405
    %v3322 = vmul.f32 %v3025, %v1410
    %v3323 = vmul.f32 %v3030, %v1415
    %v3324 = vmul.f32 %v3035, %v1420
    %v3325 = vmul.f32 %v3040, %v1425
    %v3326 = vmul.f32 %v3045, %v1430
    %v3327 = vmul.f32 %v3050, %v1435
    %v3328 = vmul.f32 %v3055, %v1440
    %v3329 = vmul.f32 %v3060, %v1445
    %v3330 = vmul.f32 %v3065, %v1450
    %v3331 = vmul.f32 %v3070, %v1455
    %v3332 = vmul.f32 %v3075, %v1460
    %v3333 = vmul.f32 %v3080, %v1465
    %v3334 = vmul.f32 %v3085, %v1470
    %v3335 = vmul.f32 %v3090, %v1475
    %v3336 = vmul.f32 %v3095, %v1480
    %v3337 = vmul.f32 %v3100, %v1485
    %v3338 = vmul.f32 %v3105, %v1490
    %v3339 = vmul.f32 %v3110, %v1495
    %v3340 = vmul.f32 %v3115, %v1500
    %v3341 = vmul.f32 %v3120, %v1505
    %v3342 = vmul.f32 %v3125, %v1510
    %v3343 = vmul.f32 %v3130, %v1515
    %v3344 = vmul.f32 %v3135, %v1520
    %v3345 = vmul.f32 %v3140, %v1525
    %v3346 = vmul.f32 %v3145, %v1530
    %v3347 = vmul.f32 %v3150, %v1535
    %v3348 = vmul.f32 %v3155, %v1540
    %v3349 = vmul.f32 %v3160, %v1545
    %v3350 = vmul.f32 %v3165, %v1550
    %v3351 = vmul.f32 %v3170, %v1555
    %v3352 = vmul.f32 %v3175, %v1560
    %v3353 = vmul.f32 %v3180, %v1565
    %v3354 = vmul.f32 %v3185, %v1570
    %v3355 = vmul.f32 %v3190, %v1575
    %v3356 = vmul.f32 %v3195, %v1580
    %v3357 = vmul.f32 %v3200, %v1585
    %v3358 = vmul.f32 %v3205, %v1590
    %v3359 = vmul.f32 %v3210, %v1595
    %v3360 = vmul.f32 %v3215, %v1600
    %v3361 = vmul.f32 %v3220, %v1605
    %v3362 = vmul.f32 %v3225, %v1610
    %v3363 = vmul.f32 %v3230, %v1615
    %v3364 = vmul.f32 %v3235, %v1620
    %v3365 = vmul.f32 %v3240, %v1625
    %v3366 = vmul.f32 %v3245, %v1630
    %v3367 = vmul.f32 %v3250, %v1635
    %v3368 = vmul.f32 %v3255, %v1640
    %v3369 = vmul.f32 %v3260, %v1645
    %v3370 = vmul.f32 %v3265, %v1650
    %v3371 = vmul.f32 %v3270, %v1655
    %v3372 = vmul.f32 %v3275, %v1660
    %v3373 = vmul.f32 %v3280, %v1665
    %v3374 = vmul.f32 %v3285, %v1670
    %v3375 = vmul.f32 %v3290, %v1675
    %v3376 = vmul.f32 %v3295, %v1680
    %v3377 = vmul.f32 %v3300, %v1685
    %v3378 = vmul.f32 %v3305, %v1690
    %v3379 = vmul.f32 %v3310, %v1695
    %v3380 = vmul.f32 %v3315, %v1700
    %v3381 = vld [vmem:[#allocation5] sm:$0xff]
    %v3382 = vld [vmem:[#allocation5 + $0x8] sm:$0xff]
    %3383 = vxpose.xlu0.b32.start [1/16] %v675, 128
    %3384 = vxpose.xlu0.b32.cont [2/16] %v676, 128
    %3385 = vxpose.xlu0.b32.cont [3/16] %v677, 128
    %3386 = vxpose.xlu0.b32.cont [4/16] %v678, 128
    %3387 = vxpose.xlu0.b32.cont [5/16] %v679, 128
    %3388 = vxpose.xlu0.b32.cont [6/16] %v680, 128
    %3389 = vxpose.xlu0.b32.cont [7/16] %v681, 128
    %3390 = vxpose.xlu0.b32.cont [8/16] %v682, 128
    %3391 = vxpose.xlu0.b32.cont [9/16] %v683, 128
    %3392 = vxpose.xlu0.b32.cont [10/16] %v684, 128
    %3393 = vxpose.xlu0.b32.cont [11/16] %v685, 128
    %3394 = vxpose.xlu0.b32.cont [12/16] %v686, 128
    %3395 = vxpose.xlu0.b32.cont [13/16] %v687, 128
    %3396 = vxpose.xlu0.b32.cont [14/16] %v688, 128
    %3397 = vxpose.xlu0.b32.cont [15/16] %v689, 128
    %3398 = vxpose.xlu0.b32.end [16/16] %v690, 128
    %v3399 = vpop.trf.xlu0
    %v3400 = vpop.trf.xlu0
    %v3401 = vpop.trf.xlu0
    %v3402 = vpop.trf.xlu0
    %v3403 = vpop.trf.xlu0
    %v3404 = vpop.trf.xlu0
    %v3405 = vpop.trf.xlu0
    %v3406 = vpop.trf.xlu0
    %v3407 = vpop.trf.xlu0
    %v3408 = vpop.trf.xlu0
    %v3409 = vpop.trf.xlu0
    %v3410 = vpop.trf.xlu0
    %v3411 = vpop.trf.xlu0
    %v3412 = vpop.trf.xlu0
    %v3413 = vpop.trf.xlu0
    %v3414 = vpop.trf.xlu0
    %3415 = vxpose.xlu0.b32.start [1/16] %v691, 128
    %3416 = vxpose.xlu0.b32.cont [2/16] %v692, 128
    %3417 = vxpose.xlu0.b32.cont [3/16] %v693, 128
    %3418 = vxpose.xlu0.b32.cont [4/16] %v694, 128
    %3419 = vxpose.xlu0.b32.cont [5/16] %v695, 128
    %3420 = vxpose.xlu0.b32.cont [6/16] %v696, 128
    %3421 = vxpose.xlu0.b32.cont [7/16] %v697, 128
    %3422 = vxpose.xlu0.b32.cont [8/16] %v698, 128
    %3423 = vxpose.xlu0.b32.cont [9/16] %v699, 128
    %3424 = vxpose.xlu0.b32.cont [10/16] %v700, 128
    %3425 = vxpose.xlu0.b32.cont [11/16] %v701, 128
    %3426 = vxpose.xlu0.b32.cont [12/16] %v702, 128
    %3427 = vxpose.xlu0.b32.cont [13/16] %v703, 128
    %3428 = vxpose.xlu0.b32.cont [14/16] %v704, 128
    %3429 = vxpose.xlu0.b32.cont [15/16] %v705, 128
    %3430 = vxpose.xlu0.b32.end [16/16] %v706, 128
    %v3431 = vpop.trf.xlu0
    %v3432 = vpop.trf.xlu0
    %v3433 = vpop.trf.xlu0
    %v3434 = vpop.trf.xlu0
    %v3435 = vpop.trf.xlu0
    %v3436 = vpop.trf.xlu0
    %v3437 = vpop.trf.xlu0
    %v3438 = vpop.trf.xlu0
    %v3439 = vpop.trf.xlu0
    %v3440 = vpop.trf.xlu0
    %v3441 = vpop.trf.xlu0
    %v3442 = vpop.trf.xlu0
    %v3443 = vpop.trf.xlu0
    %v3444 = vpop.trf.xlu0
    %v3445 = vpop.trf.xlu0
    %v3446 = vpop.trf.xlu0
    %3447 = vxpose.xlu0.b32.start [1/16] %v707, 128
    %3448 = vxpose.xlu0.b32.cont [2/16] %v708, 128
    %3449 = vxpose.xlu0.b32.cont [3/16] %v709, 128
    %3450 = vxpose.xlu0.b32.cont [4/16] %v710, 128
    %3451 = vxpose.xlu0.b32.cont [5/16] %v711, 128
    %3452 = vxpose.xlu0.b32.cont [6/16] %v712, 128
    %3453 = vxpose.xlu0.b32.cont [7/16] %v713, 128
    %3454 = vxpose.xlu0.b32.cont [8/16] %v714, 128
    %3455 = vxpose.xlu0.b32.cont [9/16] %v715, 128
    %3456 = vxpose.xlu0.b32.cont [10/16] %v716, 128
    %3457 = vxpose.xlu0.b32.cont [11/16] %v717, 128
    %3458 = vxpose.xlu0.b32.cont [12/16] %v718, 128
    %3459 = vxpose.xlu0.b32.cont [13/16] %v719, 128
    %3460 = vxpose.xlu0.b32.cont [14/16] %v720, 128
    %3461 = vxpose.xlu0.b32.cont [15/16] %v721, 128
    %3462 = vxpose.xlu0.b32.end [16/16] %v722, 128
    %v3463 = vpop.trf.xlu0
    %v3464 = vpop.trf.xlu0
    %v3465 = vpop.trf.xlu0
    %v3466 = vpop.trf.xlu0
    %v3467 = vpop.trf.xlu0
    %v3468 = vpop.trf.xlu0
    %v3469 = vpop.trf.xlu0
    %v3470 = vpop.trf.xlu0
    %v3471 = vpop.trf.xlu0
    %v3472 = vpop.trf.xlu0
    %v3473 = vpop.trf.xlu0
    %v3474 = vpop.trf.xlu0
    %v3475 = vpop.trf.xlu0
    %v3476 = vpop.trf.xlu0
    %v3477 = vpop.trf.xlu0
    %v3478 = vpop.trf.xlu0
    %3479 = vxpose.xlu0.b32.start [1/16] %v723, 128
    %3480 = vxpose.xlu0.b32.cont [2/16] %v724, 128
    %3481 = vxpose.xlu0.b32.cont [3/16] %v725, 128
    %3482 = vxpose.xlu0.b32.cont [4/16] %v726, 128
    %3483 = vxpose.xlu0.b32.cont [5/16] %v727, 128
    %3484 = vxpose.xlu0.b32.cont [6/16] %v728, 128
    %3485 = vxpose.xlu0.b32.cont [7/16] %v729, 128
    %3486 = vxpose.xlu0.b32.cont [8/16] %v730, 128
    %3487 = vxpose.xlu0.b32.cont [9/16] %v731, 128
    %3488 = vxpose.xlu0.b32.cont [10/16] %v732, 128
    %3489 = vxpose.xlu0.b32.cont [11/16] %v733, 128
    %3490 = vxpose.xlu0.b32.cont [12/16] %v734, 128
    %3491 = vxpose.xlu0.b32.cont [13/16] %v735, 128
    %3492 = vxpose.xlu0.b32.cont [14/16] %v736, 128
    %3493 = vxpose.xlu0.b32.cont [15/16] %v737, 128
    %3494 = vxpose.xlu0.b32.end [16/16] %v738, 128
    %v3495 = vpop.trf.xlu0
    %v3496 = vpop.trf.xlu0
    %v3497 = vpop.trf.xlu0
    %v3498 = vpop.trf.xlu0
    %v3499 = vpop.trf.xlu0
    %v3500 = vpop.trf.xlu0
    %v3501 = vpop.trf.xlu0
    %v3502 = vpop.trf.xlu0
    %v3503 = vpop.trf.xlu0
    %v3504 = vpop.trf.xlu0
    %v3505 = vpop.trf.xlu0
    %v3506 = vpop.trf.xlu0
    %v3507 = vpop.trf.xlu0
    %v3508 = vpop.trf.xlu0
    %v3509 = vpop.trf.xlu0
    %v3510 = vpop.trf.xlu0
    %3511 = vmatprep.subr.mxu0 0.0
    %3512 = vmatpush1.msra.mxu0 %v3317
    %3513 = vmatprep.subr.mxu0 0.0
    %3514 = vmatpush1.msra.mxu0 %v3318
    %3515 = vmatprep.subr.mxu0 0.0
    %3516 = vmatpush1.msra.mxu0 %v3319
    %3517 = vmatprep.subr.mxu0 0.0
    %3518 = vmatpush1.msra.mxu0 %v3320
    %3519 = vmatprep.subr.mxu0 0.0
    %3520 = vmatpush1.msra.mxu0 %v3321
    %3521 = vmatprep.subr.mxu0 0.0
    %3522 = vmatpush1.msra.mxu0 %v3322
    %3523 = vmatprep.subr.mxu0 0.0
    %3524 = vmatpush1.msra.mxu0 %v3323
    %3525 = vmatprep.subr.mxu0 0.0
    %3526 = vmatpush1.msra.mxu0 %v3324
    %3527 = vmatprep.subr.mxu0 0.0
    %3528 = vmatpush1.msra.mxu0 %v3325
    %3529 = vmatprep.subr.mxu0 0.0
    %3530 = vmatpush1.msra.mxu0 %v3326
    %3531 = vmatprep.subr.mxu0 0.0
    %3532 = vmatpush1.msra.mxu0 %v3327
    %3533 = vmatprep.subr.mxu0 0.0
    %3534 = vmatpush1.msra.mxu0 %v3328
    %3535 = vmatprep.subr.mxu0 0.0
    %3536 = vmatpush1.msra.mxu0 %v3329
    %3537 = vmatprep.subr.mxu0 0.0
    %3538 = vmatpush1.msra.mxu0 %v3330
    %3539 = vmatprep.subr.mxu0 0.0
    %3540 = vmatpush1.msra.mxu0 %v3331
    %3541 = vmatprep.subr.mxu0 0.0
    %3542 = vmatpush1.msra.mxu0 %v3332
    %3543 = vmatprep.subr.mxu0 0.0
    %3544 = vmatpush1.msra.mxu0 %v3333
    %3545 = vmatprep.subr.mxu0 0.0
    %3546 = vmatpush1.msra.mxu0 %v3334
    %3547 = vmatprep.subr.mxu0 0.0
    %3548 = vmatpush1.msra.mxu0 %v3335
    %3549 = vmatprep.subr.mxu0 0.0
    %3550 = vmatpush1.msra.mxu0 %v3336
    %3551 = vmatprep.subr.mxu0 0.0
    %3552 = vmatpush1.msra.mxu0 %v3337
    %3553 = vmatprep.subr.mxu0 0.0
    %3554 = vmatpush1.msra.mxu0 %v3338
    %3555 = vmatprep.subr.mxu0 0.0
    %3556 = vmatpush1.msra.mxu0 %v3339
    %3557 = vmatprep.subr.mxu0 0.0
    %3558 = vmatpush1.msra.mxu0 %v3340
    %3559 = vmatprep.subr.mxu0 0.0
    %3560 = vmatpush1.msra.mxu0 %v3341
    %3561 = vmatprep.subr.mxu0 0.0
    %3562 = vmatpush1.msra.mxu0 %v3342
    %3563 = vmatprep.subr.mxu0 0.0
    %3564 = vmatpush1.msra.mxu0 %v3343
    %3565 = vmatprep.subr.mxu0 0.0
    %3566 = vmatpush1.msra.mxu0 %v3344
    %3567 = vmatprep.subr.mxu0 0.0
    %3568 = vmatpush1.msra.mxu0 %v3345
    %3569 = vmatprep.subr.mxu0 0.0
    %3570 = vmatpush1.msra.mxu0 %v3346
    %3571 = vmatprep.subr.mxu0 0.0
    %3572 = vmatpush1.msra.mxu0 %v3347
    %3573 = vmatprep.subr.mxu0 0.0
    %3574 = vmatpush1.msra.mxu0 %v3348
    %3575 = vmatprep.mubr.f32.mxu0 %v3431
    %3576 = vmatmul.mubr.f32.gmra.mrb[0].mxu0 %v3399
    %v3577 = vpop.f32.mrb[0].mxu0
    %v3578 = vadd.f32 0.0, %v3577
    %v3579 = vpop.f32.mrb[0].mxu0
    %3580 = vmatprep.mubr.f32.mxu0 %v3432
    %3581 = vmatmul.mubr.f32.gmra.mrb[0].mxu0 %v3400
    %v3582 = vpop.f32.mrb[0].mxu0
    %v3583 = vadd.f32 0.0, %v3582
    %v3584 = vpop.f32.mrb[0].mxu0
    %3585 = vdwg.mxu0
    %3586 = vmatprep.subr.mxu0 0.0
    %3587 = vmatpush1.msra.mxu0 %v3349
    %3588 = vmatprep.subr.mxu0 0.0
    %3589 = vmatpush1.msra.mxu0 %v3350
    %3590 = vmatprep.subr.mxu0 0.0
    %3591 = vmatpush1.msra.mxu0 %v3351
    %3592 = vmatprep.subr.mxu0 0.0
    %3593 = vmatpush1.msra.mxu0 %v3352
    %3594 = vmatprep.subr.mxu0 0.0
    %3595 = vmatpush1.msra.mxu0 %v3353
    %3596 = vmatprep.subr.mxu0 0.0
    %3597 = vmatpush1.msra.mxu0 %v3354
    %3598 = vmatprep.subr.mxu0 0.0
    %3599 = vmatpush1.msra.mxu0 %v3355
    %3600 = vmatprep.subr.mxu0 0.0
    %3601 = vmatpush1.msra.mxu0 %v3356
    %3602 = vmatprep.subr.mxu0 0.0
    %3603 = vmatpush1.msra.mxu0 %v3357
    %3604 = vmatprep.subr.mxu0 0.0
    %3605 = vmatpush1.msra.mxu0 %v3358
    %3606 = vmatprep.subr.mxu0 0.0
    %3607 = vmatpush1.msra.mxu0 %v3359
    %3608 = vmatprep.subr.mxu0 0.0
    %3609 = vmatpush1.msra.mxu0 %v3360
    %3610 = vmatprep.subr.mxu0 0.0
    %3611 = vmatpush1.msra.mxu0 %v3361
    %3612 = vmatprep.subr.mxu0 0.0
    %3613 = vmatpush1.msra.mxu0 %v3362
    %3614 = vmatprep.subr.mxu0 0.0
    %3615 = vmatpush1.msra.mxu0 %v3363
    %3616 = vmatprep.subr.mxu0 0.0
    %3617 = vmatpush1.msra.mxu0 %v3364
    %3618 = vmatprep.subr.mxu0 0.0
    %3619 = vmatpush1.msra.mxu0 %v3365
    %3620 = vmatprep.subr.mxu0 0.0
    %3621 = vmatpush1.msra.mxu0 %v3366
    %3622 = vmatprep.subr.mxu0 0.0
    %3623 = vmatpush1.msra.mxu0 %v3367
    %3624 = vmatprep.subr.mxu0 0.0
    %3625 = vmatpush1.msra.mxu0 %v3368
    %3626 = vmatprep.subr.mxu0 0.0
    %3627 = vmatpush1.msra.mxu0 %v3369
    %3628 = vmatprep.subr.mxu0 0.0
    %3629 = vmatpush1.msra.mxu0 %v3370
    %3630 = vmatprep.subr.mxu0 0.0
    %3631 = vmatpush1.msra.mxu0 %v3371
    %3632 = vmatprep.subr.mxu0 0.0
    %3633 = vmatpush1.msra.mxu0 %v3372
    %3634 = vmatprep.subr.mxu0 0.0
    %3635 = vmatpush1.msra.mxu0 %v3373
    %3636 = vmatprep.subr.mxu0 0.0
    %3637 = vmatpush1.msra.mxu0 %v3374
    %3638 = vmatprep.subr.mxu0 0.0
    %3639 = vmatpush1.msra.mxu0 %v3375
    %3640 = vmatprep.subr.mxu0 0.0
    %3641 = vmatpush1.msra.mxu0 %v3376
    %3642 = vmatprep.subr.mxu0 0.0
    %3643 = vmatpush1.msra.mxu0 %v3377
    %3644 = vmatprep.subr.mxu0 0.0
    %3645 = vmatpush1.msra.mxu0 %v3378
    %3646 = vmatprep.subr.mxu0 0.0
    %3647 = vmatpush1.msra.mxu0 %v3379
    %3648 = vmatprep.subr.mxu0 0.0
    %3649 = vmatpush1.msra.mxu0 %v3380
    %3650 = vmatprep.mubr.f32.mxu0 %v3495
    %3651 = vmatmul.mubr.f32.gmra.mrb[0].mxu0 %v3463
    %v3652 = vpop.f32.mrb[0].mxu0
    %v3653 = vadd.f32 %v3578, %v3652
    %v3654 = vpop.f32.mrb[0].mxu0
    %3655 = vmatprep.mubr.f32.mxu0 %v3496
    %3656 = vmatmul.mubr.f32.gmra.mrb[0].mxu0 %v3464
    %v3657 = vpop.f32.mrb[0].mxu0
    %v3658 = vadd.f32 %v3583, %v3657
    %v3659 = vpop.f32.mrb[0].mxu0
    %3660 = vdwg.mxu0
    %v3661 = vadd.f32 %v3381, %v3653
    %v3662 = vadd.f32 %v3382, %v3658
    %3663 = vst [vmem:[#allocation5] sm:$0xff] %v3661
    %3664 = vst [vmem:[#allocation5 + $0x8] sm:$0xff] %v3662
    // Predicated region
    $region34: #{gat_layer_pallas.1} parent=1 // pred_check
      %p3665 = pneg %p27
    $region35: #{gat_layer_pallas.1} parent=1 // pred_check_branch
      %3667 = sbr.rel (%p3665) target = $region37
    $region36: #{gat_layer_pallas.1} parent=1 // pred_region
      %v3668 = vld [vmem:[#allocation5] sm:$0xff]
      %v3669 = vld [vmem:[#allocation5 + $0x8] sm:$0xff]
      %vm3670 = vcmp.gt.f32.partialorder %v3668, 0.0
      %vm3671 = vcmp.gt.f32.partialorder %v3669, 0.0
      %v3672 = vsel %vm3670, %v3668, 1.0
      %v3673 = vsel %vm3671, %v3669, 1.0
      %3675 = vset.pattern.permute.xlu0 16
      %3676 = vperm.xlu0 %3675, %v3672
      %v3677 = vpop.permute.xlu0 %3676
      %3680 = vset.pattern.permute.xlu0 16
      %3681 = vperm.xlu0 %3680, %v3673
      %v3682 = vpop.permute.xlu0 %3681
      %v3684 = vrcp.pop %v3677
      %v3685 = vmul.f32 %v3668, %v3684
      %v3686 = vrcp.pop %v3682
      %v3687 = vmul.f32 %v3669, %v3686
      %v3688 = vld [vmem:[%s4] sm:$0x1]
      %v3690 = vlaneseq
      %v3691 = vshrl.u32 %v3690, 7
      %v3692 = vsub.s32 0, %v3691
      %v3693 = vrot.slane %v3688, %v3692
      %v3695 = vadd.f32 %v3685, %v3693
      %v3696 = vadd.f32 %v3687, %v3693
      %3697 = vst [vmem:[#allocation6] sm:$0xff] %v3695
      %3698 = vst [vmem:[#allocation6 + $0x8] sm:$0xff] %v3696
    $region37: #{gat_layer_pallas.1} parent=1 // pred_fallthru
      _
    // Predicated region
    $region38: #{gat_layer_pallas.1} parent=1 // pred_check
      _
    $region39: #{gat_layer_pallas.1} parent=1 // pred_check_branch
      %3700 = sbr.rel (0) target = $region41
    $region40: #{gat_layer_pallas.1} parent=1 // pred_region
      %s3702 = ssub.s32 256, 256
      %3703 = vsyncadd [#allocation7], %s3702
      %s3704 = sshll.u32 [#allocation6], 4
      %s3705 = int_to_ptr.vmem [resolvable:$true] %s3704
      %3710 = dma.vmem_to_hbm [thread:$0]  %s3705, 256, %s7, [#allocation7], 128, 128, 8
    $region41: #{gat_layer_pallas.1} parent=1 // pred_fallthru
      _
    // Predicated region
    $region42: #{gat_layer_pallas.1} parent=1 // pred_check
      _
    $region43: #{gat_layer_pallas.1} parent=1 // pred_check_branch
      %3712 = sbr.rel (0) target = $region45
    $region44: #{gat_layer_pallas.1} parent=1 // pred_region
      %3713 = dma.done [#allocation7], 256
    $region45: #{gat_layer_pallas.1} parent=1 // pred_fallthru
      _
    %3714 = vsyncpa [#allocation7], 1

</llo_original>
